<compile_context>
chip_gen: v5e
topology: v5e:2x2
jax: 0.10.0
libtpu: 0.0.40
codegen_flags: <defaults>
</compile_context>

<pallas_src>
import math

import jax
import jax.numpy as jnp
from jax import lax
from jax.experimental import pallas as pl
from jax.experimental.pallas import tpu as pltpu

# ---------------- model dims (small, synthetic) ----------------
B, T, D = 2, 8, 32          # batch, time, size
H, DK = 4, D // 4           # heads, head dim
DFF = 64                    # feed-forward hidden
K = 7                       # depthwise conv kernel size (odd, non-causal)
PAD = (K - 1) // 2
LN_EPS = 1e-5
FF_SCALE = 0.5              # macaron present -> 0.5
INV_SQRT_DK = 1.0 / math.sqrt(DK)
NEG_INF = float(jnp.finfo(jnp.float32).min)


# ---------------- fused Pallas kernel (one batch element per grid step) ----------------
def _conformer_layer_kernel(
        x_ref, mask_ref, mp_ref, pe_ref,
        lng_ref, lnb_ref,
        ffw1_ref, ffb1_ref, ffw2_ref, ffb2_ref,
        wqkvp_ref, bqkvp_ref, pbu_ref, pbv_ref, wo_ref, bo_ref,
        pw1w_ref, pw1b_ref, dww_ref, dwb_ref, pw2w_ref, pw2b_ref,
        o_ref):
    """Whole Conformer encoder layer for one batch element, fully VMEM-resident."""

    def layer_norm(v, idx):
        g = lng_ref[idx:idx + 1, :]                           # (1, D)
        b = lnb_ref[idx:idx + 1, :]
        mean = jnp.mean(v, axis=-1, keepdims=True)
        var = jnp.mean((v - mean) ** 2, axis=-1, keepdims=True)
        return (v - mean) * lax.rsqrt(var + LN_EPS) * g + b

    def ffn(v, idx):
        hh = jnp.dot(v, ffw1_ref[idx],
                     preferred_element_type=jnp.float32) + ffb1_ref[idx:idx + 1, :]
        hh = hh * jax.nn.sigmoid(hh)                          # Swish
        return jnp.dot(hh, ffw2_ref[idx],
                       preferred_element_type=jnp.float32) + ffb2_ref[idx:idx + 1, :]

    x = x_ref[0]                                              # (T, D)
    mask_ok = mask_ref[0] > 0.0                               # (T, T) bool
    mp = mp_ref[0]                                            # (T, 1)
    pe = pe_ref[...]                                          # (T, D)

    # ---- 1. macaron feed-forward (pre-norm, residual, 0.5 scale) ----
    x = x + FF_SCALE * ffn(layer_norm(x, 0), 0)

    # ---- 2. relative-position multi-head self-attention ----
    xn = layer_norm(x, 1)
    stacked = jnp.concatenate([xn, pe], axis=0)               # (2T, D)
    qkvp = jnp.dot(stacked, wqkvp_ref[...],
                   preferred_element_type=jnp.float32) + bqkvp_ref[...]   # (2T, 4D)
    q = qkvp[:T, 0 * D:1 * D]
    k = qkvp[:T, 1 * D:2 * D]
    v = qkvp[:T, 2 * D:3 * D]
    p = qkvp[T:, 3 * D:4 * D]                                 # pos-emb projection (no bias)
    pbu = pbu_ref[...]                                        # (H, DK)
    pbv = pbv_ref[...]
    wo = wo_ref[...]                                          # (D, D)

    att = jnp.zeros((T, D), jnp.float32)
    for h in range(H):                                        # unrolled in-kernel head loop
        sl = slice(h * DK, (h + 1) * DK)
        qh, kh, vh, ph = q[:, sl], k[:, sl], v[:, sl], p[:, sl]
        qu = (qh + pbu[h:h + 1, :]) * INV_SQRT_DK             # fold 1/sqrt(dk) into queries
        qv = (qh + pbv[h:h + 1, :]) * INV_SQRT_DK
        scores = (lax.dot_general(qu, kh, (((1,), (1,)), ((), ())),
                                  preferred_element_type=jnp.float32) +
                  lax.dot_general(qv, ph, (((1,), (1,)), ((), ())),
                                  preferred_element_type=jnp.float32))    # (T, T)
        scores = jnp.where(mask_ok, scores, NEG_INF)
        scores = scores - jnp.max(scores, axis=-1, keepdims=True)
        e = jnp.exp(scores)
        attn = e * pl.reciprocal(jnp.sum(e, axis=-1, keepdims=True), approx=True)
        attn = jnp.where(mask_ok, attn, 0.0)
        ctx = jnp.dot(attn, vh, preferred_element_type=jnp.float32)       # (T, DK)
        # fold head-merge + output projection: ctx_h @ W_o[h*DK:(h+1)*DK, :]
        att = att + jnp.dot(ctx, wo[sl, :], preferred_element_type=jnp.float32)
    x = x + att + bo_ref[...]

    # ---- 3. convolution module ----
    xn = layer_norm(x, 2)
    xm = xn * mp                                              # masked_fill(~mask_pad, 0)
    y = jnp.dot(xm, pw1w_ref[...],
                preferred_element_type=jnp.float32) + pw1b_ref[...]       # (T, 2D)
    y = y[:, :D] * jax.nn.sigmoid(y[:, D:])                   # GLU over channels -> (T, D)
    # depthwise conv along time ('same' padding) as K banded shift-matrix matmuls
    # (no pad/concat, no unaligned sublane slices; boundary zeros come from the band itself)
    row = lax.broadcasted_iota(jnp.int32, (T, T), 0)
    col = lax.broadcasted_iota(jnp.int32, (T, T), 1)
    acc = jnp.zeros((T, D), jnp.float32) + dwb_ref[...]
    for j in range(K):
        off = j - PAD
        band = (col == row + off).astype(jnp.float32)         # (T, T) shift matrix
        acc = acc + jnp.dot(band, y,
                            preferred_element_type=jnp.float32) * dww_ref[j:j + 1, :]
    hcv = layer_norm(acc, 3)                                  # conv-internal LayerNorm
    hcv = hcv * jax.nn.sigmoid(hcv)                           # Swish
    conv_out = (jnp.dot(hcv, pw2w_ref[...],
                        preferred_element_type=jnp.float32) + pw2b_ref[...]) * mp
    x = x + conv_out

    # ---- 4. feed-forward ----
    x = x + FF_SCALE * ffn(layer_norm(x, 4), 1)

    # ---- 5. final norm ----
    o_ref[0] = layer_norm(x, 5)


# ---------------- wrapper: parameter packing + single pallas_call ----------------
def conformer_layer_forward(params, x, mask, pos_emb, mask_pad):
    """x:(B,T,D)  mask:(B,T,T) float  pos_emb:(1,T,D)  mask_pad:(B,1,T) bool."""
    attn = params["attn"]
    conv = params["conv"]
    ffm = params["ff_macaron"]
    ff = params["ff"]

    # -- pack parameters (in production these would be pre-packed once, outside the step) --
    ln_g = jnp.stack([params["ln_ffm_g"], params["ln_mha_g"], params["ln_conv_g"],
                      conv["ln_g"], params["ln_ff_g"], params["ln_final_g"]])      # (6, D)
    ln_b = jnp.stack([params["ln_ffm_b"], params["ln_mha_b"], params["ln_conv_b"],
                      conv["ln_b"], params["ln_ff_b"], params["ln_final_b"]])      # (6, D)
    ff_w1 = jnp.stack([ffm["w1"], ff["w1"]])                                       # (2, D, DFF)
    ff_b1 = jnp.stack([ffm["b1"], ff["b1"]])                                       # (2, DFF)
    ff_w2 = jnp.stack([ffm["w2"], ff["w2"]])                                       # (2, DFF, D)
    ff_b2 = jnp.stack([ffm["b2"], ff["b2"]])                                       # (2, D)
    w_qkvp = jnp.concatenate([attn["wq"], attn["wk"], attn["wv"], attn["wp"]],
                             axis=1)                                               # (D, 4D)=(32,128)
    b_qkvp = jnp.concatenate([attn["bq"], attn["bk"], attn["bv"],
                              jnp.zeros((D,), jnp.float32)]).reshape(1, 4 * D)

    mp = mask_pad.astype(jnp.float32).transpose(0, 2, 1)                           # (B, T, 1)
    pe = pos_emb.reshape(T, D)

    const2 = lambda b: (0, 0)
    const3 = lambda b: (0, 0, 0)

    out = pl.pallas_call(
        _conformer_layer_kernel,
        out_shape=jax.ShapeDtypeStruct((B, T, D), jnp.float32),
        grid=(B,),
        in_specs=[
            pl.BlockSpec((1, T, D), lambda b: (b, 0, 0)),      # x
            pl.BlockSpec((1, T, T), lambda b: (b, 0, 0)),      # attention mask
            pl.BlockSpec((1, T, 1), lambda b: (b, 0, 0)),      # conv padding mask
            pl.BlockSpec((T, D), const2),                      # pos_emb
            pl.BlockSpec((6, D), const2),                      # LN gammas (stacked)
            pl.BlockSpec((6, D), const2),                      # LN betas  (stacked)
            pl.BlockSpec((2, D, DFF), const3),                 # FFN w1 (macaron, final)
            pl.BlockSpec((2, DFF), const2),                    # FFN b1
            pl.BlockSpec((2, DFF, D), const3),                 # FFN w2
            pl.BlockSpec((2, D), const2),                      # FFN b2
            pl.BlockSpec((D, 4 * D), const2),                  # fused Wq|Wk|Wv|Wp
            pl.BlockSpec((1, 4 * D), const2),                  # fused bq|bk|bv|0
            pl.BlockSpec((H, DK), const2),                     # pos_bias_u
            pl.BlockSpec((H, DK), const2),                     # pos_bias_v
            pl.BlockSpec((D, D), const2),                      # Wo
            pl.BlockSpec((1, D), const2),                      # bo
            pl.BlockSpec((D, 2 * D), const2),                  # conv pw1 weight
            pl.BlockSpec((1, 2 * D), const2),                  # conv pw1 bias
            pl.BlockSpec((K, D), const2),                      # depthwise conv weight
            pl.BlockSpec((1, D), const2),                      # depthwise conv bias
            pl.BlockSpec((D, D), const2),                      # conv pw2 weight
            pl.BlockSpec((1, D), const2),                      # conv pw2 bias
        ],
        out_specs=pl.BlockSpec((1, T, D), lambda b: (b, 0, 0)),
        compiler_params=pltpu.CompilerParams(dimension_semantics=("parallel",)),
    )(x, mask, mp, pe, ln_g, ln_b, ff_w1, ff_b1, ff_w2, ff_b2,
      w_qkvp, b_qkvp, attn["pos_bias_u"], attn["pos_bias_v"], attn["wo"],
      attn["bo"].reshape(1, D),
      conv["pw1_w"], conv["pw1_b"].reshape(1, 2 * D), conv["dw_w"],
      conv["dw_b"].reshape(1, D), conv["pw2_w"], conv["pw2_b"].reshape(1, D))

    new_cnn_cache = jnp.array([0.0], dtype=out.dtype)
    return out, mask, new_cnn_cache


# ---------------- deterministic synthetic parameters ----------------
def init_params(key):
    keys = iter(jax.random.split(key, 64))

    def w(shape):
        return jax.random.normal(next(keys), shape, jnp.float32) / math.sqrt(shape[0])

    def b(shape):
        return 0.01 * jax.random.normal(next(keys), shape, jnp.float32)

    def ln(d):
        g = 1.0 + 0.05 * jax.random.normal(next(keys), (d,), jnp.float32)
        bb = 0.05 * jax.random.normal(next(keys), (d,), jnp.float32)
        return g, bb

    params = {}
    for name in ["ffm", "mha", "conv", "ff", "final"]:
        g, bb = ln(D)
        params[f"ln_{name}_g"] = g
        params[f"ln_{name}_b"] = bb
    params["ff_macaron"] = {"w1": w((D, DFF)), "b1": b((DFF,)),
                            "w2": w((DFF, D)), "b2": b((D,))}
    params["ff"] = {"w1": w((D, DFF)), "b1": b((DFF,)),
                    "w2": w((DFF, D)), "b2": b((D,))}
    params["attn"] = {
        "wq": w((D, D)), "bq": b((D,)),
        "wk": w((D, D)), "bk": b((D,)),
        "wv": w((D, D)), "bv": b((D,)),
        "wp": w((D, D)),
        "wo": w((D, D)), "bo": b((D,)),
        "pos_bias_u": 0.1 * jax.random.normal(next(keys), (H, DK), jnp.float32),
        "pos_bias_v": 0.1 * jax.random.normal(next(keys), (H, DK), jnp.float32),
    }
    params["conv"] = {
        "pw1_w": w((D, 2 * D)), "pw1_b": b((2 * D,)),
        "dw_w": 0.2 * jax.random.normal(next(keys), (K, D), jnp.float32),
        "dw_b": b((D,)),
        "ln_g": 1.0 + 0.05 * jax.random.normal(next(keys), (D,), jnp.float32),
        "ln_b": b((D,)),
        "pw2_w": w((D, D)), "pw2_b": b((D,)),
    }
    return params


def sinusoidal_pos_emb(t, d):
    pos = jnp.arange(t, dtype=jnp.float32)[:, None]
    div = jnp.exp(jnp.arange(0, d, 2, dtype=jnp.float32) * (-math.log(10000.0) / d))
    pe = jnp.zeros((t, d), jnp.float32)
    pe = pe.at[:, 0::2].set(jnp.sin(pos * div))
    pe = pe.at[:, 1::2].set(jnp.cos(pos * div))
    return pe[None]


# ---------------- pure-JAX reference (for validation) ----------------
def reference_forward(params, x, mask, pos_emb, mask_pad):
    def ln(x, g, b):
        m = jnp.mean(x, -1, keepdims=True)
        v = jnp.mean((x - m) ** 2, -1, keepdims=True)
        return (x - m) / jnp.sqrt(v + LN_EPS) * g + b

    def ffn(x, p):
        h = x @ p["w1"] + p["b1"]
        h = h * jax.nn.sigmoid(h)
        return h @ p["w2"] + p["b2"]

    def attn(xn, p):
        q = (xn @ p["wq"] + p["bq"]).reshape(B, T, H, DK).transpose(0, 2, 1, 3)
        k = (xn @ p["wk"] + p["bk"]).reshape(B, T, H, DK).transpose(0, 2, 1, 3)
        v = (xn @ p["wv"] + p["bv"]).reshape(B, T, H, DK).transpose(0, 2, 1, 3)
        pe = (pos_emb @ p["wp"]).reshape(1, T, H, DK).transpose(0, 2, 1, 3)
        pe = jnp.broadcast_to(pe, (B, H, T, DK))
        qu = q + p["pos_bias_u"][None, :, None, :]
        qv = q + p["pos_bias_v"][None, :, None, :]
        ac = jnp.einsum("bhqd,bhkd->bhqk", qu, k)
        bd = jnp.einsum("bhqd,bhkd->bhqk", qv, pe)
        scores = (ac + bd) / math.sqrt(DK)
        m = (mask[:, None, :, :] > 0)
        scores = jnp.where(m, scores, jnp.finfo(jnp.float32).min)
        a = jax.nn.softmax(scores, axis=-1)
        a = jnp.where(m, a, 0.0)
        ctx = jnp.einsum("bhqk,bhkd->bhqd", a, v)
        ctx = ctx.transpose(0, 2, 1, 3).reshape(B, T, D)
        return ctx @ p["wo"] + p["bo"]

    def conv(xn, p):
        mp = mask_pad.astype(jnp.float32).transpose(0, 2, 1)
        y = xn * mp
        y = y @ p["pw1_w"] + p["pw1_b"]
        y = y[..., :D] * jax.nn.sigmoid(y[..., D:])
        yp = jnp.pad(y, ((0, 0), (PAD, PAD), (0, 0)))
        acc = jnp.broadcast_to(p["dw_b"], (B, T, D))
        for j in range(K):
            acc = acc + yp[:, j:j + T, :] * p["dw_w"][j]
        h = ln(acc, p["ln_g"], p["ln_b"])
        h = h * jax.nn.sigmoid(h)
        return (h @ p["pw2_w"] + p["pw2_b"]) * mp

    with jax.default_matmul_precision("highest"):
        x = x + FF_SCALE * ffn(ln(x, params["ln_ffm_g"], params["ln_ffm_b"]),
                               params["ff_macaron"])
        x = x + attn(ln(x, params["ln_mha_g"], params["ln_mha_b"]), params["attn"])
        x = x + conv(ln(x, params["ln_conv_g"], params["ln_conv_b"]), params["conv"])
        x = x + FF_SCALE * ffn(ln(x, params["ln_ff_g"], params["ln_ff_b"]), params["ff"])
        x = ln(x, params["ln_final_g"], params["ln_final_b"])
    return x


if __name__ == "__main__":
    key = jax.random.PRNGKey(0)
    pkey, xkey = jax.random.split(key)
    params = init_params(pkey)

    x = jax.random.normal(xkey, (B, T, D), jnp.float32)      # (#batch, time, size)
    mask = jnp.ones((B, T, T), jnp.float32)                  # (#batch, time, time), all valid
    mask_pad = jnp.ones((B, 1, T), dtype=bool)               # (#batch, 1, time)
    pos_emb = sinusoidal_pos_emb(T, D)                       # (1, time, size)

    fwd = jax.jit(conformer_layer_forward)
    out, out_mask, new_cnn_cache = fwd(params, x, mask, pos_emb, mask_pad)
    jax.block_until_ready(out)

    ref = reference_forward(params, x, mask, pos_emb, mask_pad)
    assert out.shape == (B, T, D) and out_mask.shape == mask.shape
    err = float(jnp.max(jnp.abs(out - ref)))
    # tolerance accommodates MXU default precision + EUP approx reciprocal in the softmax
    if not err < 2e-2:
        raise AssertionError(f"kernel/reference mismatch: max abs err = {err}")
    print("KERNEL_OK")
</pallas_src>

<mosaic_0001>
module attributes {stable_mosaic.version = 11 : i64} {
  func.func @_conformer_layer_kernel(%arg0: i32, %arg1: memref<1x8x32xf32, #tpu.memory_space<vmem>>, %arg2: memref<1x8x8xf32, #tpu.memory_space<vmem>>, %arg3: memref<1x8x1xf32, #tpu.memory_space<vmem>>, %arg4: memref<8x32xf32, #tpu.memory_space<vmem>>, %arg5: memref<6x32xf32, #tpu.memory_space<vmem>>, %arg6: memref<6x32xf32, #tpu.memory_space<vmem>>, %arg7: memref<2x32x64xf32, #tpu.memory_space<vmem>>, %arg8: memref<2x64xf32, #tpu.memory_space<vmem>>, %arg9: memref<2x64x32xf32, #tpu.memory_space<vmem>>, %arg10: memref<2x32xf32, #tpu.memory_space<vmem>>, %arg11: memref<32x128xf32, #tpu.memory_space<vmem>>, %arg12: memref<1x128xf32, #tpu.memory_space<vmem>>, %arg13: memref<4x8xf32, #tpu.memory_space<vmem>>, %arg14: memref<4x8xf32, #tpu.memory_space<vmem>>, %arg15: memref<32x32xf32, #tpu.memory_space<vmem>>, %arg16: memref<1x32xf32, #tpu.memory_space<vmem>>, %arg17: memref<32x64xf32, #tpu.memory_space<vmem>>, %arg18: memref<1x64xf32, #tpu.memory_space<vmem>>, %arg19: memref<7x32xf32, #tpu.memory_space<vmem>>, %arg20: memref<1x32xf32, #tpu.memory_space<vmem>>, %arg21: memref<32x32xf32, #tpu.memory_space<vmem>>, %arg22: memref<1x32xf32, #tpu.memory_space<vmem>>, %arg23: memref<1x8x32xf32, #tpu.memory_space<vmem>>) attributes {dimension_semantics = [#tpu.dimension_semantics<parallel>], iteration_bounds = array<i64: 2>, scalar_prefetch = 0 : i64, scratch_operands = 0 : i64, tpu.core_type = #tpu.core_type<tc>, window_params = [{transform_indices = @transform_0, window_bounds = array<i64: 1, 8, 32>}, {transform_indices = @transform_1, window_bounds = array<i64: 1, 8, 8>}, {transform_indices = @transform_2, window_bounds = array<i64: 1, 8, 1>}, {pipeline_mode = #tpu.pipeline_mode<synchronous>, transform_indices = @transform_3, window_bounds = array<i64: 8, 32>}, {pipeline_mode = #tpu.pipeline_mode<synchronous>, transform_indices = @transform_4, window_bounds = array<i64: 6, 32>}, {pipeline_mode = #tpu.pipeline_mode<synchronous>, transform_indices = @transform_5, window_bounds = array<i64: 6, 32>}, {pipeline_mode = #tpu.pipeline_mode<synchronous>, transform_indices = @transform_6, window_bounds = array<i64: 2, 32, 64>}, {pipeline_mode = #tpu.pipeline_mode<synchronous>, transform_indices = @transform_7, window_bounds = array<i64: 2, 64>}, {pipeline_mode = #tpu.pipeline_mode<synchronous>, transform_indices = @transform_8, window_bounds = array<i64: 2, 64, 32>}, {pipeline_mode = #tpu.pipeline_mode<synchronous>, transform_indices = @transform_9, window_bounds = array<i64: 2, 32>}, {pipeline_mode = #tpu.pipeline_mode<synchronous>, transform_indices = @transform_10, window_bounds = array<i64: 32, 128>}, {pipeline_mode = #tpu.pipeline_mode<synchronous>, transform_indices = @transform_11, window_bounds = array<i64: 1, 128>}, {pipeline_mode = #tpu.pipeline_mode<synchronous>, transform_indices = @transform_12, window_bounds = array<i64: 4, 8>}, {pipeline_mode = #tpu.pipeline_mode<synchronous>, transform_indices = @transform_13, window_bounds = array<i64: 4, 8>}, {pipeline_mode = #tpu.pipeline_mode<synchronous>, transform_indices = @transform_14, window_bounds = array<i64: 32, 32>}, {pipeline_mode = #tpu.pipeline_mode<synchronous>, transform_indices = @transform_15, window_bounds = array<i64: 1, 32>}, {pipeline_mode = #tpu.pipeline_mode<synchronous>, transform_indices = @transform_16, window_bounds = array<i64: 32, 64>}, {pipeline_mode = #tpu.pipeline_mode<synchronous>, transform_indices = @transform_17, window_bounds = array<i64: 1, 64>}, {pipeline_mode = #tpu.pipeline_mode<synchronous>, transform_indices = @transform_18, window_bounds = array<i64: 7, 32>}, {pipeline_mode = #tpu.pipeline_mode<synchronous>, transform_indices = @transform_19, window_bounds = array<i64: 1, 32>}, {pipeline_mode = #tpu.pipeline_mode<synchronous>, transform_indices = @transform_20, window_bounds = array<i64: 32, 32>}, {pipeline_mode = #tpu.pipeline_mode<synchronous>, transform_indices = @transform_21, window_bounds = array<i64: 1, 32>}, {transform_indices = @transform_22, window_bounds = array<i64: 1, 8, 32>}]} {
    %c0 = arith.constant 0 : index
    %c0_0 = arith.constant 0 : index
    %c0_1 = arith.constant 0 : index
    %0 = vector.load %arg1[%c0, %c0_0, %c0_1] : memref<1x8x32xf32, #tpu.memory_space<vmem>>, vector<1x8x32xf32>
    %1 = vector.shape_cast %0 : vector<1x8x32xf32> to vector<8x32xf32>
    %c0_2 = arith.constant 0 : index
    %c0_3 = arith.constant 0 : index
    %c0_4 = arith.constant 0 : index
    %2 = vector.load %arg2[%c0_2, %c0_3, %c0_4] : memref<1x8x8xf32, #tpu.memory_space<vmem>>, vector<1x8x8xf32>
    %3 = vector.shape_cast %2 : vector<1x8x8xf32> to vector<8x8xf32>
    %cst = arith.constant 0.000000e+00 : f32
    %4 = vector.broadcast %cst : f32 to vector<8x8xf32>
    %5 = arith.cmpf ogt, %3, %4 : vector<8x8xf32>
    %c0_5 = arith.constant 0 : index
    %c0_6 = arith.constant 0 : index
    %c0_7 = arith.constant 0 : index
    %6 = vector.load %arg3[%c0_5, %c0_6, %c0_7] : memref<1x8x1xf32, #tpu.memory_space<vmem>>, vector<1x8x1xf32>
    %7 = vector.shape_cast %6 : vector<1x8x1xf32> to vector<8x1xf32>
    %c0_8 = arith.constant 0 : index
    %c0_9 = arith.constant 0 : index
    %8 = vector.load %arg4[%c0_8, %c0_9] : memref<8x32xf32, #tpu.memory_space<vmem>>, vector<8x32xf32>
    %c0_10 = arith.constant 0 : index
    %c0_11 = arith.constant 0 : index
    %9 = vector.load %arg5[%c0_10, %c0_11] : memref<6x32xf32, #tpu.memory_space<vmem>>, vector<1x32xf32>
    %c0_12 = arith.constant 0 : index
    %c0_13 = arith.constant 0 : index
    %10 = vector.load %arg6[%c0_12, %c0_13] : memref<6x32xf32, #tpu.memory_space<vmem>>, vector<1x32xf32>
    %cst_14 = arith.constant dense<0.000000e+00> : vector<8xf32>
    %11 = vector.multi_reduction <add>, %1, %cst_14 [1] : vector<8x32xf32> to vector<8xf32>
    %12 = vector.shape_cast %11 : vector<8xf32> to vector<8x1xf32>
    %cst_15 = arith.constant 3.200000e+01 : f32
    %13 = vector.broadcast %cst_15 : f32 to vector<8x1xf32>
    %14 = arith.divf %12, %13 : vector<8x1xf32>
    %15 = vector.broadcast %14 : vector<8x1xf32> to vector<8x32xf32>
    %16 = arith.subf %1, %15 : vector<8x32xf32>
    %17 = arith.mulf %16, %16 : vector<8x32xf32>
    %cst_16 = arith.constant dense<0.000000e+00> : vector<8xf32>
    %18 = vector.multi_reduction <add>, %17, %cst_16 [1] : vector<8x32xf32> to vector<8xf32>
    %19 = vector.shape_cast %18 : vector<8xf32> to vector<8x1xf32>
    %cst_17 = arith.constant 3.200000e+01 : f32
    %20 = vector.broadcast %cst_17 : f32 to vector<8x1xf32>
    %21 = arith.divf %19, %20 : vector<8x1xf32>
    %22 = vector.broadcast %14 : vector<8x1xf32> to vector<8x32xf32>
    %23 = arith.subf %1, %22 : vector<8x32xf32>
    %cst_18 = arith.constant 9.99999974E-6 : f32
    %24 = vector.broadcast %cst_18 : f32 to vector<8x1xf32>
    %25 = arith.addf %21, %24 : vector<8x1xf32>
    %26 = math.rsqrt %25 : vector<8x1xf32>
    %27 = vector.broadcast %26 : vector<8x1xf32> to vector<8x32xf32>
    %28 = arith.mulf %23, %27 : vector<8x32xf32>
    %29 = vector.broadcast %9 : vector<1x32xf32> to vector<8x32xf32>
    %30 = arith.mulf %28, %29 : vector<8x32xf32>
    %31 = vector.broadcast %10 : vector<1x32xf32> to vector<8x32xf32>
    %32 = arith.addf %30, %31 : vector<8x32xf32>
    %c0_19 = arith.constant 0 : index
    %c0_20 = arith.constant 0 : index
    %c0_21 = arith.constant 0 : index
    %33 = vector.load %arg7[%c0_19, %c0_20, %c0_21] : memref<2x32x64xf32, #tpu.memory_space<vmem>>, vector<1x32x64xf32>
    %34 = vector.shape_cast %33 : vector<1x32x64xf32> to vector<32x64xf32>
    %cst_22 = arith.constant dense<0.000000e+00> : vector<8x64xf32>
    %35 = tpu.matmul %32, %34, %cst_22 {dimension_numbers = #tpu.dot_dimension_numbers<[1], [0], [0], [1], [0, 0, 1, 1], [], []>} : vector<8x32xf32>, vector<32x64xf32>, vector<8x64xf32> -> vector<8x64xf32>
    %c0_23 = arith.constant 0 : index
    %c0_24 = arith.constant 0 : index
    %36 = vector.load %arg8[%c0_23, %c0_24] : memref<2x64xf32, #tpu.memory_space<vmem>>, vector<1x64xf32>
    %37 = vector.broadcast %36 : vector<1x64xf32> to vector<8x64xf32>
    %38 = arith.addf %35, %37 : vector<8x64xf32>
    %39 = arith.negf %38 : vector<8x64xf32>
    %40 = math.exp %39 : vector<8x64xf32>
    %cst_25 = arith.constant 1.000000e+00 : f32
    %41 = vector.broadcast %cst_25 : f32 to vector<8x64xf32>
    %42 = arith.addf %41, %40 : vector<8x64xf32>
    %43 = arith.divf %41, %42 : vector<8x64xf32>
    %44 = arith.mulf %38, %43 : vector<8x64xf32>
    %c0_26 = arith.constant 0 : index
    %c0_27 = arith.constant 0 : index
    %c0_28 = arith.constant 0 : index
    %45 = vector.load %arg9[%c0_26, %c0_27, %c0_28] : memref<2x64x32xf32, #tpu.memory_space<vmem>>, vector<1x64x32xf32>
    %46 = vector.shape_cast %45 : vector<1x64x32xf32> to vector<64x32xf32>
    %cst_29 = arith.constant dense<0.000000e+00> : vector<8x32xf32>
    %47 = tpu.matmul %44, %46, %cst_29 {dimension_numbers = #tpu.dot_dimension_numbers<[1], [0], [0], [1], [0, 0, 1, 1], [], []>} : vector<8x64xf32>, vector<64x32xf32>, vector<8x32xf32> -> vector<8x32xf32>
    %c0_30 = arith.constant 0 : index
    %c0_31 = arith.constant 0 : index
    %48 = vector.load %arg10[%c0_30, %c0_31] : memref<2x32xf32, #tpu.memory_space<vmem>>, vector<1x32xf32>
    %49 = vector.broadcast %48 : vector<1x32xf32> to vector<8x32xf32>
    %50 = arith.addf %47, %49 : vector<8x32xf32>
    %cst_32 = arith.constant 5.000000e-01 : f32
    %51 = vector.broadcast %cst_32 : f32 to vector<8x32xf32>
    %52 = arith.mulf %51, %50 : vector<8x32xf32>
    %53 = arith.addf %1, %52 : vector<8x32xf32>
    %c1 = arith.constant 1 : index
    %c0_33 = arith.constant 0 : index
    %54 = vector.load %arg5[%c1, %c0_33] : memref<6x32xf32, #tpu.memory_space<vmem>>, vector<1x32xf32>
    %c1_34 = arith.constant 1 : index
    %c0_35 = arith.constant 0 : index
    %55 = vector.load %arg6[%c1_34, %c0_35] : memref<6x32xf32, #tpu.memory_space<vmem>>, vector<1x32xf32>
    %cst_36 = arith.constant dense<0.000000e+00> : vector<8xf32>
    %56 = vector.multi_reduction <add>, %53, %cst_36 [1] : vector<8x32xf32> to vector<8xf32>
    %57 = vector.shape_cast %56 : vector<8xf32> to vector<8x1xf32>
    %cst_37 = arith.constant 3.200000e+01 : f32
    %58 = vector.broadcast %cst_37 : f32 to vector<8x1xf32>
    %59 = arith.divf %57, %58 : vector<8x1xf32>
    %60 = vector.broadcast %59 : vector<8x1xf32> to vector<8x32xf32>
    %61 = arith.subf %53, %60 : vector<8x32xf32>
    %62 = arith.mulf %61, %61 : vector<8x32xf32>
    %cst_38 = arith.constant dense<0.000000e+00> : vector<8xf32>
    %63 = vector.multi_reduction <add>, %62, %cst_38 [1] : vector<8x32xf32> to vector<8xf32>
    %64 = vector.shape_cast %63 : vector<8xf32> to vector<8x1xf32>
    %cst_39 = arith.constant 3.200000e+01 : f32
    %65 = vector.broadcast %cst_39 : f32 to vector<8x1xf32>
    %66 = arith.divf %64, %65 : vector<8x1xf32>
    %67 = vector.broadcast %59 : vector<8x1xf32> to vector<8x32xf32>
    %68 = arith.subf %53, %67 : vector<8x32xf32>
    %cst_40 = arith.constant 9.99999974E-6 : f32
    %69 = vector.broadcast %cst_40 : f32 to vector<8x1xf32>
    %70 = arith.addf %66, %69 : vector<8x1xf32>
    %71 = math.rsqrt %70 : vector<8x1xf32>
    %72 = vector.broadcast %71 : vector<8x1xf32> to vector<8x32xf32>
    %73 = arith.mulf %68, %72 : vector<8x32xf32>
    %74 = vector.broadcast %54 : vector<1x32xf32> to vector<8x32xf32>
    %75 = arith.mulf %73, %74 : vector<8x32xf32>
    %76 = vector.broadcast %55 : vector<1x32xf32> to vector<8x32xf32>
    %77 = arith.addf %75, %76 : vector<8x32xf32>
    %78 = tpu.concatenate %77, %8 in 0 : vector<8x32xf32>, vector<8x32xf32> -> vector<16x32xf32>
    %c0_41 = arith.constant 0 : index
    %c0_42 = arith.constant 0 : index
    %79 = vector.load %arg11[%c0_41, %c0_42] : memref<32x128xf32, #tpu.memory_space<vmem>>, vector<32x128xf32>
    %cst_43 = arith.constant dense<0.000000e+00> : vector<16x128xf32>
    %80 = tpu.matmul %78, %79, %cst_43 {dimension_numbers = #tpu.dot_dimension_numbers<[1], [0], [0], [1], [0, 0, 1, 1], [], []>} : vector<16x32xf32>, vector<32x128xf32>, vector<16x128xf32> -> vector<16x128xf32>
    %c0_44 = arith.constant 0 : index
    %c0_45 = arith.constant 0 : index
    %81 = vector.load %arg12[%c0_44, %c0_45] : memref<1x128xf32, #tpu.memory_space<vmem>>, vector<1x128xf32>
    %82 = vector.broadcast %81 : vector<1x128xf32> to vector<16x128xf32>
    %83 = arith.addf %80, %82 : vector<16x128xf32>
    %84 = vector.extract_strided_slice %83 {offsets = [0, 0], sizes = [8, 32], strides = [1, 1]} : vector<16x128xf32> to vector<8x32xf32>
    %85 = vector.extract_strided_slice %83 {offsets = [0, 32], sizes = [8, 32], strides = [1, 1]} : vector<16x128xf32> to vector<8x32xf32>
    %86 = vector.extract_strided_slice %83 {offsets = [0, 64], sizes = [8, 32], strides = [1, 1]} : vector<16x128xf32> to vector<8x32xf32>
    %87 = vector.extract_strided_slice %83 {offsets = [8, 96], sizes = [8, 32], strides = [1, 1]} : vector<16x128xf32> to vector<8x32xf32>
    %c0_46 = arith.constant 0 : index
    %c0_47 = arith.constant 0 : index
    %88 = vector.load %arg13[%c0_46, %c0_47] : memref<4x8xf32, #tpu.memory_space<vmem>>, vector<4x8xf32>
    %c0_48 = arith.constant 0 : index
    %c0_49 = arith.constant 0 : index
    %89 = vector.load %arg14[%c0_48, %c0_49] : memref<4x8xf32, #tpu.memory_space<vmem>>, vector<4x8xf32>
    %c0_50 = arith.constant 0 : index
    %c0_51 = arith.constant 0 : index
    %90 = vector.load %arg15[%c0_50, %c0_51] : memref<32x32xf32, #tpu.memory_space<vmem>>, vector<32x32xf32>
    %cst_52 = arith.constant 0.000000e+00 : f32
    %91 = vector.broadcast %cst_52 : f32 to vector<8x32xf32>
    %92 = vector.extract_strided_slice %84 {offsets = [0, 0], sizes = [8, 8], strides = [1, 1]} : vector<8x32xf32> to vector<8x8xf32>
    %93 = vector.extract_strided_slice %85 {offsets = [0, 0], sizes = [8, 8], strides = [1, 1]} : vector<8x32xf32> to vector<8x8xf32>
    %94 = vector.extract_strided_slice %86 {offsets = [0, 0], sizes = [8, 8], strides = [1, 1]} : vector<8x32xf32> to vector<8x8xf32>
    %95 = vector.extract_strided_slice %87 {offsets = [0, 0], sizes = [8, 8], strides = [1, 1]} : vector<8x32xf32> to vector<8x8xf32>
    %96 = vector.extract_strided_slice %88 {offsets = [0, 0], sizes = [1, 8], strides = [1, 1]} : vector<4x8xf32> to vector<1x8xf32>
    %97 = vector.broadcast %96 : vector<1x8xf32> to vector<8x8xf32>
    %98 = arith.addf %92, %97 : vector<8x8xf32>
    %cst_53 = arith.constant 0.353553385 : f32
    %99 = vector.broadcast %cst_53 : f32 to vector<8x8xf32>
    %100 = arith.mulf %98, %99 : vector<8x8xf32>
    %101 = vector.extract_strided_slice %89 {offsets = [0, 0], sizes = [1, 8], strides = [1, 1]} : vector<4x8xf32> to vector<1x8xf32>
    %102 = vector.broadcast %101 : vector<1x8xf32> to vector<8x8xf32>
    %103 = arith.addf %92, %102 : vector<8x8xf32>
    %cst_54 = arith.constant 0.353553385 : f32
    %104 = vector.broadcast %cst_54 : f32 to vector<8x8xf32>
    %105 = arith.mulf %103, %104 : vector<8x8xf32>
    %cst_55 = arith.constant dense<0.000000e+00> : vector<8x8xf32>
    %106 = tpu.matmul %100, %93, %cst_55 {dimension_numbers = #tpu.dot_dimension_numbers<[1], [1], [0], [0], [0, 0, 1, 0], [], []>} : vector<8x8xf32>, vector<8x8xf32>, vector<8x8xf32> -> vector<8x8xf32>
    %cst_56 = arith.constant dense<0.000000e+00> : vector<8x8xf32>
    %107 = tpu.matmul %105, %95, %cst_56 {dimension_numbers = #tpu.dot_dimension_numbers<[1], [1], [0], [0], [0, 0, 1, 0], [], []>} : vector<8x8xf32>, vector<8x8xf32>, vector<8x8xf32> -> vector<8x8xf32>
    %108 = arith.addf %106, %107 : vector<8x8xf32>
    %cst_57 = arith.constant -3.40282347E+38 : f32
    %109 = vector.broadcast %cst_57 : f32 to vector<8x8xf32>
    %110 = arith.select %5, %108, %109 : vector<8x8xi1>, vector<8x8xf32>
    %cst_58 = arith.constant dense<0xFF800000> : vector<8xf32>
    %111 = vector.multi_reduction <maximumf>, %110, %cst_58 [1] : vector<8x8xf32> to vector<8xf32>
    %112 = vector.shape_cast %111 : vector<8xf32> to vector<8x1xf32>
    %113 = vector.broadcast %112 : vector<8x1xf32> to vector<8x8xf32>
    %114 = arith.subf %110, %113 : vector<8x8xf32>
    %115 = math.exp %114 : vector<8x8xf32>
    %cst_59 = arith.constant dense<0.000000e+00> : vector<8xf32>
    %116 = vector.multi_reduction <add>, %115, %cst_59 [1] : vector<8x8xf32> to vector<8xf32>
    %117 = vector.shape_cast %116 : vector<8xf32> to vector<8x1xf32>
    %118 = tpu.reciprocal %117 {approx = true} : vector<8x1xf32> -> vector<8x1xf32>
    %119 = vector.broadcast %118 : vector<8x1xf32> to vector<8x8xf32>
    %120 = arith.mulf %115, %119 : vector<8x8xf32>
    %cst_60 = arith.constant 0.000000e+00 : f32
    %121 = vector.broadcast %cst_60 : f32 to vector<8x8xf32>
    %122 = arith.select %5, %120, %121 : vector<8x8xi1>, vector<8x8xf32>
    %cst_61 = arith.constant dense<0.000000e+00> : vector<8x8xf32>
    %123 = tpu.matmul %122, %94, %cst_61 {dimension_numbers = #tpu.dot_dimension_numbers<[1], [0], [0], [1], [0, 0, 1, 1], [], []>} : vector<8x8xf32>, vector<8x8xf32>, vector<8x8xf32> -> vector<8x8xf32>
    %124 = vector.extract_strided_slice %90 {offsets = [0, 0], sizes = [8, 32], strides = [1, 1]} : vector<32x32xf32> to vector<8x32xf32>
    %cst_62 = arith.constant dense<0.000000e+00> : vector<8x32xf32>
    %125 = tpu.matmul %123, %124, %cst_62 {dimension_numbers = #tpu.dot_dimension_numbers<[1], [0], [0], [1], [0, 0, 1, 1], [], []>} : vector<8x8xf32>, vector<8x32xf32>, vector<8x32xf32> -> vector<8x32xf32>
    %126 = arith.addf %91, %125 : vector<8x32xf32>
    %127 = vector.extract_strided_slice %84 {offsets = [0, 8], sizes = [8, 8], strides = [1, 1]} : vector<8x32xf32> to vector<8x8xf32>
    %128 = vector.extract_strided_slice %85 {offsets = [0, 8], sizes = [8, 8], strides = [1, 1]} : vector<8x32xf32> to vector<8x8xf32>
    %129 = vector.extract_strided_slice %86 {offsets = [0, 8], sizes = [8, 8], strides = [1, 1]} : vector<8x32xf32> to vector<8x8xf32>
    %130 = vector.extract_strided_slice %87 {offsets = [0, 8], sizes = [8, 8], strides = [1, 1]} : vector<8x32xf32> to vector<8x8xf32>
    %131 = vector.extract_strided_slice %88 {offsets = [1, 0], sizes = [1, 8], strides = [1, 1]} : vector<4x8xf32> to vector<1x8xf32>
    %132 = vector.broadcast %131 : vector<1x8xf32> to vector<8x8xf32>
    %133 = arith.addf %127, %132 : vector<8x8xf32>
    %cst_63 = arith.constant 0.353553385 : f32
    %134 = vector.broadcast %cst_63 : f32 to vector<8x8xf32>
    %135 = arith.mulf %133, %134 : vector<8x8xf32>
    %136 = vector.extract_strided_slice %89 {offsets = [1, 0], sizes = [1, 8], strides = [1, 1]} : vector<4x8xf32> to vector<1x8xf32>
    %137 = vector.broadcast %136 : vector<1x8xf32> to vector<8x8xf32>
    %138 = arith.addf %127, %137 : vector<8x8xf32>
    %cst_64 = arith.constant 0.353553385 : f32
    %139 = vector.broadcast %cst_64 : f32 to vector<8x8xf32>
    %140 = arith.mulf %138, %139 : vector<8x8xf32>
    %cst_65 = arith.constant dense<0.000000e+00> : vector<8x8xf32>
    %141 = tpu.matmul %135, %128, %cst_65 {dimension_numbers = #tpu.dot_dimension_numbers<[1], [1], [0], [0], [0, 0, 1, 0], [], []>} : vector<8x8xf32>, vector<8x8xf32>, vector<8x8xf32> -> vector<8x8xf32>
    %cst_66 = arith.constant dense<0.000000e+00> : vector<8x8xf32>
    %142 = tpu.matmul %140, %130, %cst_66 {dimension_numbers = #tpu.dot_dimension_numbers<[1], [1], [0], [0], [0, 0, 1, 0], [], []>} : vector<8x8xf32>, vector<8x8xf32>, vector<8x8xf32> -> vector<8x8xf32>
    %143 = arith.addf %141, %142 : vector<8x8xf32>
    %cst_67 = arith.constant -3.40282347E+38 : f32
    %144 = vector.broadcast %cst_67 : f32 to vector<8x8xf32>
    %145 = arith.select %5, %143, %144 : vector<8x8xi1>, vector<8x8xf32>
    %cst_68 = arith.constant dense<0xFF800000> : vector<8xf32>
    %146 = vector.multi_reduction <maximumf>, %145, %cst_68 [1] : vector<8x8xf32> to vector<8xf32>
    %147 = vector.shape_cast %146 : vector<8xf32> to vector<8x1xf32>
    %148 = vector.broadcast %147 : vector<8x1xf32> to vector<8x8xf32>
    %149 = arith.subf %145, %148 : vector<8x8xf32>
    %150 = math.exp %149 : vector<8x8xf32>
    %cst_69 = arith.constant dense<0.000000e+00> : vector<8xf32>
    %151 = vector.multi_reduction <add>, %150, %cst_69 [1] : vector<8x8xf32> to vector<8xf32>
    %152 = vector.shape_cast %151 : vector<8xf32> to vector<8x1xf32>
    %153 = tpu.reciprocal %152 {approx = true} : vector<8x1xf32> -> vector<8x1xf32>
    %154 = vector.broadcast %153 : vector<8x1xf32> to vector<8x8xf32>
    %155 = arith.mulf %150, %154 : vector<8x8xf32>
    %cst_70 = arith.constant 0.000000e+00 : f32
    %156 = vector.broadcast %cst_70 : f32 to vector<8x8xf32>
    %157 = arith.select %5, %155, %156 : vector<8x8xi1>, vector<8x8xf32>
    %cst_71 = arith.constant dense<0.000000e+00> : vector<8x8xf32>
    %158 = tpu.matmul %157, %129, %cst_71 {dimension_numbers = #tpu.dot_dimension_numbers<[1], [0], [0], [1], [0, 0, 1, 1], [], []>} : vector<8x8xf32>, vector<8x8xf32>, vector<8x8xf32> -> vector<8x8xf32>
    %159 = vector.extract_strided_slice %90 {offsets = [8, 0], sizes = [8, 32], strides = [1, 1]} : vector<32x32xf32> to vector<8x32xf32>
    %cst_72 = arith.constant dense<0.000000e+00> : vector<8x32xf32>
    %160 = tpu.matmul %158, %159, %cst_72 {dimension_numbers = #tpu.dot_dimension_numbers<[1], [0], [0], [1], [0, 0, 1, 1], [], []>} : vector<8x8xf32>, vector<8x32xf32>, vector<8x32xf32> -> vector<8x32xf32>
    %161 = arith.addf %126, %160 : vector<8x32xf32>
    %162 = vector.extract_strided_slice %84 {offsets = [0, 16], sizes = [8, 8], strides = [1, 1]} : vector<8x32xf32> to vector<8x8xf32>
    %163 = vector.extract_strided_slice %85 {offsets = [0, 16], sizes = [8, 8], strides = [1, 1]} : vector<8x32xf32> to vector<8x8xf32>
    %164 = vector.extract_strided_slice %86 {offsets = [0, 16], sizes = [8, 8], strides = [1, 1]} : vector<8x32xf32> to vector<8x8xf32>
    %165 = vector.extract_strided_slice %87 {offsets = [0, 16], sizes = [8, 8], strides = [1, 1]} : vector<8x32xf32> to vector<8x8xf32>
    %166 = vector.extract_strided_slice %88 {offsets = [2, 0], sizes = [1, 8], strides = [1, 1]} : vector<4x8xf32> to vector<1x8xf32>
    %167 = vector.broadcast %166 : vector<1x8xf32> to vector<8x8xf32>
    %168 = arith.addf %162, %167 : vector<8x8xf32>
    %cst_73 = arith.constant 0.353553385 : f32
    %169 = vector.broadcast %cst_73 : f32 to vector<8x8xf32>
    %170 = arith.mulf %168, %169 : vector<8x8xf32>
    %171 = vector.extract_strided_slice %89 {offsets = [2, 0], sizes = [1, 8], strides = [1, 1]} : vector<4x8xf32> to vector<1x8xf32>
    %172 = vector.broadcast %171 : vector<1x8xf32> to vector<8x8xf32>
    %173 = arith.addf %162, %172 : vector<8x8xf32>
    %cst_74 = arith.constant 0.353553385 : f32
    %174 = vector.broadcast %cst_74 : f32 to vector<8x8xf32>
    %175 = arith.mulf %173, %174 : vector<8x8xf32>
    %cst_75 = arith.constant dense<0.000000e+00> : vector<8x8xf32>
    %176 = tpu.matmul %170, %163, %cst_75 {dimension_numbers = #tpu.dot_dimension_numbers<[1], [1], [0], [0], [0, 0, 1, 0], [], []>} : vector<8x8xf32>, vector<8x8xf32>, vector<8x8xf32> -> vector<8x8xf32>
    %cst_76 = arith.constant dense<0.000000e+00> : vector<8x8xf32>
    %177 = tpu.matmul %175, %165, %cst_76 {dimension_numbers = #tpu.dot_dimension_numbers<[1], [1], [0], [0], [0, 0, 1, 0], [], []>} : vector<8x8xf32>, vector<8x8xf32>, vector<8x8xf32> -> vector<8x8xf32>
    %178 = arith.addf %176, %177 : vector<8x8xf32>
    %cst_77 = arith.constant -3.40282347E+38 : f32
    %179 = vector.broadcast %cst_77 : f32 to vector<8x8xf32>
    %180 = arith.select %5, %178, %179 : vector<8x8xi1>, vector<8x8xf32>
    %cst_78 = arith.constant dense<0xFF800000> : vector<8xf32>
    %181 = vector.multi_reduction <maximumf>, %180, %cst_78 [1] : vector<8x8xf32> to vector<8xf32>
    %182 = vector.shape_cast %181 : vector<8xf32> to vector<8x1xf32>
    %183 = vector.broadcast %182 : vector<8x1xf32> to vector<8x8xf32>
    %184 = arith.subf %180, %183 : vector<8x8xf32>
    %185 = math.exp %184 : vector<8x8xf32>
    %cst_79 = arith.constant dense<0.000000e+00> : vector<8xf32>
    %186 = vector.multi_reduction <add>, %185, %cst_79 [1] : vector<8x8xf32> to vector<8xf32>
    %187 = vector.shape_cast %186 : vector<8xf32> to vector<8x1xf32>
    %188 = tpu.reciprocal %187 {approx = true} : vector<8x1xf32> -> vector<8x1xf32>
    %189 = vector.broadcast %188 : vector<8x1xf32> to vector<8x8xf32>
    %190 = arith.mulf %185, %189 : vector<8x8xf32>
    %cst_80 = arith.constant 0.000000e+00 : f32
    %191 = vector.broadcast %cst_80 : f32 to vector<8x8xf32>
    %192 = arith.select %5, %190, %191 : vector<8x8xi1>, vector<8x8xf32>
    %cst_81 = arith.constant dense<0.000000e+00> : vector<8x8xf32>
    %193 = tpu.matmul %192, %164, %cst_81 {dimension_numbers = #tpu.dot_dimension_numbers<[1], [0], [0], [1], [0, 0, 1, 1], [], []>} : vector<8x8xf32>, vector<8x8xf32>, vector<8x8xf32> -> vector<8x8xf32>
    %194 = vector.extract_strided_slice %90 {offsets = [16, 0], sizes = [8, 32], strides = [1, 1]} : vector<32x32xf32> to vector<8x32xf32>
    %cst_82 = arith.constant dense<0.000000e+00> : vector<8x32xf32>
    %195 = tpu.matmul %193, %194, %cst_82 {dimension_numbers = #tpu.dot_dimension_numbers<[1], [0], [0], [1], [0, 0, 1, 1], [], []>} : vector<8x8xf32>, vector<8x32xf32>, vector<8x32xf32> -> vector<8x32xf32>
    %196 = arith.addf %161, %195 : vector<8x32xf32>
    %197 = vector.extract_strided_slice %84 {offsets = [0, 24], sizes = [8, 8], strides = [1, 1]} : vector<8x32xf32> to vector<8x8xf32>
    %198 = vector.extract_strided_slice %85 {offsets = [0, 24], sizes = [8, 8], strides = [1, 1]} : vector<8x32xf32> to vector<8x8xf32>
    %199 = vector.extract_strided_slice %86 {offsets = [0, 24], sizes = [8, 8], strides = [1, 1]} : vector<8x32xf32> to vector<8x8xf32>
    %200 = vector.extract_strided_slice %87 {offsets = [0, 24], sizes = [8, 8], strides = [1, 1]} : vector<8x32xf32> to vector<8x8xf32>
    %201 = vector.extract_strided_slice %88 {offsets = [3, 0], sizes = [1, 8], strides = [1, 1]} : vector<4x8xf32> to vector<1x8xf32>
    %202 = vector.broadcast %201 : vector<1x8xf32> to vector<8x8xf32>
    %203 = arith.addf %197, %202 : vector<8x8xf32>
    %cst_83 = arith.constant 0.353553385 : f32
    %204 = vector.broadcast %cst_83 : f32 to vector<8x8xf32>
    %205 = arith.mulf %203, %204 : vector<8x8xf32>
    %206 = vector.extract_strided_slice %89 {offsets = [3, 0], sizes = [1, 8], strides = [1, 1]} : vector<4x8xf32> to vector<1x8xf32>
    %207 = vector.broadcast %206 : vector<1x8xf32> to vector<8x8xf32>
    %208 = arith.addf %197, %207 : vector<8x8xf32>
    %cst_84 = arith.constant 0.353553385 : f32
    %209 = vector.broadcast %cst_84 : f32 to vector<8x8xf32>
    %210 = arith.mulf %208, %209 : vector<8x8xf32>
    %cst_85 = arith.constant dense<0.000000e+00> : vector<8x8xf32>
    %211 = tpu.matmul %205, %198, %cst_85 {dimension_numbers = #tpu.dot_dimension_numbers<[1], [1], [0], [0], [0, 0, 1, 0], [], []>} : vector<8x8xf32>, vector<8x8xf32>, vector<8x8xf32> -> vector<8x8xf32>
    %cst_86 = arith.constant dense<0.000000e+00> : vector<8x8xf32>
    %212 = tpu.matmul %210, %200, %cst_86 {dimension_numbers = #tpu.dot_dimension_numbers<[1], [1], [0], [0], [0, 0, 1, 0], [], []>} : vector<8x8xf32>, vector<8x8xf32>, vector<8x8xf32> -> vector<8x8xf32>
    %213 = arith.addf %211, %212 : vector<8x8xf32>
    %cst_87 = arith.constant -3.40282347E+38 : f32
    %214 = vector.broadcast %cst_87 : f32 to vector<8x8xf32>
    %215 = arith.select %5, %213, %214 : vector<8x8xi1>, vector<8x8xf32>
    %cst_88 = arith.constant dense<0xFF800000> : vector<8xf32>
    %216 = vector.multi_reduction <maximumf>, %215, %cst_88 [1] : vector<8x8xf32> to vector<8xf32>
    %217 = vector.shape_cast %216 : vector<8xf32> to vector<8x1xf32>
    %218 = vector.broadcast %217 : vector<8x1xf32> to vector<8x8xf32>
    %219 = arith.subf %215, %218 : vector<8x8xf32>
    %220 = math.exp %219 : vector<8x8xf32>
    %cst_89 = arith.constant dense<0.000000e+00> : vector<8xf32>
    %221 = vector.multi_reduction <add>, %220, %cst_89 [1] : vector<8x8xf32> to vector<8xf32>
    %222 = vector.shape_cast %221 : vector<8xf32> to vector<8x1xf32>
    %223 = tpu.reciprocal %222 {approx = true} : vector<8x1xf32> -> vector<8x1xf32>
    %224 = vector.broadcast %223 : vector<8x1xf32> to vector<8x8xf32>
    %225 = arith.mulf %220, %224 : vector<8x8xf32>
    %cst_90 = arith.constant 0.000000e+00 : f32
    %226 = vector.broadcast %cst_90 : f32 to vector<8x8xf32>
    %227 = arith.select %5, %225, %226 : vector<8x8xi1>, vector<8x8xf32>
    %cst_91 = arith.constant dense<0.000000e+00> : vector<8x8xf32>
    %228 = tpu.matmul %227, %199, %cst_91 {dimension_numbers = #tpu.dot_dimension_numbers<[1], [0], [0], [1], [0, 0, 1, 1], [], []>} : vector<8x8xf32>, vector<8x8xf32>, vector<8x8xf32> -> vector<8x8xf32>
    %229 = vector.extract_strided_slice %90 {offsets = [24, 0], sizes = [8, 32], strides = [1, 1]} : vector<32x32xf32> to vector<8x32xf32>
    %cst_92 = arith.constant dense<0.000000e+00> : vector<8x32xf32>
    %230 = tpu.matmul %228, %229, %cst_92 {dimension_numbers = #tpu.dot_dimension_numbers<[1], [0], [0], [1], [0, 0, 1, 1], [], []>} : vector<8x8xf32>, vector<8x32xf32>, vector<8x32xf32> -> vector<8x32xf32>
    %231 = arith.addf %196, %230 : vector<8x32xf32>
    %232 = arith.addf %53, %231 : vector<8x32xf32>
    %c0_93 = arith.constant 0 : index
    %c0_94 = arith.constant 0 : index
    %233 = vector.load %arg16[%c0_93, %c0_94] : memref<1x32xf32, #tpu.memory_space<vmem>>, vector<1x32xf32>
    %234 = vector.broadcast %233 : vector<1x32xf32> to vector<8x32xf32>
    %235 = arith.addf %232, %234 : vector<8x32xf32>
    %c2 = arith.constant 2 : index
    %c0_95 = arith.constant 0 : index
    %236 = vector.load %arg5[%c2, %c0_95] : memref<6x32xf32, #tpu.memory_space<vmem>>, vector<1x32xf32>
    %c2_96 = arith.constant 2 : index
    %c0_97 = arith.constant 0 : index
    %237 = vector.load %arg6[%c2_96, %c0_97] : memref<6x32xf32, #tpu.memory_space<vmem>>, vector<1x32xf32>
    %cst_98 = arith.constant dense<0.000000e+00> : vector<8xf32>
    %238 = vector.multi_reduction <add>, %235, %cst_98 [1] : vector<8x32xf32> to vector<8xf32>
    %239 = vector.shape_cast %238 : vector<8xf32> to vector<8x1xf32>
    %cst_99 = arith.constant 3.200000e+01 : f32
    %240 = vector.broadcast %cst_99 : f32 to vector<8x1xf32>
    %241 = arith.divf %239, %240 : vector<8x1xf32>
    %242 = vector.broadcast %241 : vector<8x1xf32> to vector<8x32xf32>
    %243 = arith.subf %235, %242 : vector<8x32xf32>
    %244 = arith.mulf %243, %243 : vector<8x32xf32>
    %cst_100 = arith.constant dense<0.000000e+00> : vector<8xf32>
    %245 = vector.multi_reduction <add>, %244, %cst_100 [1] : vector<8x32xf32> to vector<8xf32>
    %246 = vector.shape_cast %245 : vector<8xf32> to vector<8x1xf32>
    %cst_101 = arith.constant 3.200000e+01 : f32
    %247 = vector.broadcast %cst_101 : f32 to vector<8x1xf32>
    %248 = arith.divf %246, %247 : vector<8x1xf32>
    %249 = vector.broadcast %241 : vector<8x1xf32> to vector<8x32xf32>
    %250 = arith.subf %235, %249 : vector<8x32xf32>
    %cst_102 = arith.constant 9.99999974E-6 : f32
    %251 = vector.broadcast %cst_102 : f32 to vector<8x1xf32>
    %252 = arith.addf %248, %251 : vector<8x1xf32>
    %253 = math.rsqrt %252 : vector<8x1xf32>
    %254 = vector.broadcast %253 : vector<8x1xf32> to vector<8x32xf32>
    %255 = arith.mulf %250, %254 : vector<8x32xf32>
    %256 = vector.broadcast %236 : vector<1x32xf32> to vector<8x32xf32>
    %257 = arith.mulf %255, %256 : vector<8x32xf32>
    %258 = vector.broadcast %237 : vector<1x32xf32> to vector<8x32xf32>
    %259 = arith.addf %257, %258 : vector<8x32xf32>
    %260 = vector.broadcast %7 : vector<8x1xf32> to vector<8x32xf32>
    %261 = arith.mulf %259, %260 : vector<8x32xf32>
    %c0_103 = arith.constant 0 : index
    %c0_104 = arith.constant 0 : index
    %262 = vector.load %arg17[%c0_103, %c0_104] : memref<32x64xf32, #tpu.memory_space<vmem>>, vector<32x64xf32>
    %cst_105 = arith.constant dense<0.000000e+00> : vector<8x64xf32>
    %263 = tpu.matmul %261, %262, %cst_105 {dimension_numbers = #tpu.dot_dimension_numbers<[1], [0], [0], [1], [0, 0, 1, 1], [], []>} : vector<8x32xf32>, vector<32x64xf32>, vector<8x64xf32> -> vector<8x64xf32>
    %c0_106 = arith.constant 0 : index
    %c0_107 = arith.constant 0 : index
    %264 = vector.load %arg18[%c0_106, %c0_107] : memref<1x64xf32, #tpu.memory_space<vmem>>, vector<1x64xf32>
    %265 = vector.broadcast %264 : vector<1x64xf32> to vector<8x64xf32>
    %266 = arith.addf %263, %265 : vector<8x64xf32>
    %267 = vector.extract_strided_slice %266 {offsets = [0, 0], sizes = [8, 32], strides = [1, 1]} : vector<8x64xf32> to vector<8x32xf32>
    %268 = vector.extract_strided_slice %266 {offsets = [0, 32], sizes = [8, 32], strides = [1, 1]} : vector<8x64xf32> to vector<8x32xf32>
    %269 = arith.negf %268 : vector<8x32xf32>
    %270 = math.exp %269 : vector<8x32xf32>
    %cst_108 = arith.constant 1.000000e+00 : f32
    %271 = vector.broadcast %cst_108 : f32 to vector<8x32xf32>
    %272 = arith.addf %271, %270 : vector<8x32xf32>
    %273 = arith.divf %271, %272 : vector<8x32xf32>
    %274 = arith.mulf %267, %273 : vector<8x32xf32>
    %275 = tpu.iota {dimensions = array<i32: 0>} : vector<8x8xi32>
    %276 = tpu.iota {dimensions = array<i32: 1>} : vector<8x8xi32>
    %cst_109 = arith.constant 0.000000e+00 : f32
    %277 = vector.broadcast %cst_109 : f32 to vector<8x32xf32>
    %c0_110 = arith.constant 0 : index
    %c0_111 = arith.constant 0 : index
    %278 = vector.load %arg20[%c0_110, %c0_111] : memref<1x32xf32, #tpu.memory_space<vmem>>, vector<1x32xf32>
    %279 = vector.broadcast %278 : vector<1x32xf32> to vector<8x32xf32>
    %280 = arith.addf %277, %279 : vector<8x32xf32>
    %c-3_i32 = arith.constant -3 : i32
    %281 = vector.broadcast %c-3_i32 : i32 to vector<8x8xi32>
    %282 = arith.addi %275, %281 : vector<8x8xi32>
    %283 = arith.cmpi eq, %276, %282 : vector<8x8xi32>
    %284 = arith.extui %283 : vector<8x8xi1> to vector<8x8xi32>
    %285 = arith.sitofp %284 : vector<8x8xi32> to vector<8x8xf32>
    %cst_112 = arith.constant dense<0.000000e+00> : vector<8x32xf32>
    %286 = tpu.matmul %285, %274, %cst_112 {dimension_numbers = #tpu.dot_dimension_numbers<[1], [0], [0], [1], [0, 0, 1, 1], [], []>} : vector<8x8xf32>, vector<8x32xf32>, vector<8x32xf32> -> vector<8x32xf32>
    %c0_113 = arith.constant 0 : index
    %c0_114 = arith.constant 0 : index
    %287 = vector.load %arg19[%c0_113, %c0_114] : memref<7x32xf32, #tpu.memory_space<vmem>>, vector<1x32xf32>
    %288 = vector.broadcast %287 : vector<1x32xf32> to vector<8x32xf32>
    %289 = arith.mulf %286, %288 : vector<8x32xf32>
    %290 = arith.addf %280, %289 : vector<8x32xf32>
    %c-2_i32 = arith.constant -2 : i32
    %291 = vector.broadcast %c-2_i32 : i32 to vector<8x8xi32>
    %292 = arith.addi %275, %291 : vector<8x8xi32>
    %293 = arith.cmpi eq, %276, %292 : vector<8x8xi32>
    %294 = arith.extui %293 : vector<8x8xi1> to vector<8x8xi32>
    %295 = arith.sitofp %294 : vector<8x8xi32> to vector<8x8xf32>
    %cst_115 = arith.constant dense<0.000000e+00> : vector<8x32xf32>
    %296 = tpu.matmul %295, %274, %cst_115 {dimension_numbers = #tpu.dot_dimension_numbers<[1], [0], [0], [1], [0, 0, 1, 1], [], []>} : vector<8x8xf32>, vector<8x32xf32>, vector<8x32xf32> -> vector<8x32xf32>
    %c1_116 = arith.constant 1 : index
    %c0_117 = arith.constant 0 : index
    %297 = vector.load %arg19[%c1_116, %c0_117] : memref<7x32xf32, #tpu.memory_space<vmem>>, vector<1x32xf32>
    %298 = vector.broadcast %297 : vector<1x32xf32> to vector<8x32xf32>
    %299 = arith.mulf %296, %298 : vector<8x32xf32>
    %300 = arith.addf %290, %299 : vector<8x32xf32>
    %c-1_i32 = arith.constant -1 : i32
    %301 = vector.broadcast %c-1_i32 : i32 to vector<8x8xi32>
    %302 = arith.addi %275, %301 : vector<8x8xi32>
    %303 = arith.cmpi eq, %276, %302 : vector<8x8xi32>
    %304 = arith.extui %303 : vector<8x8xi1> to vector<8x8xi32>
    %305 = arith.sitofp %304 : vector<8x8xi32> to vector<8x8xf32>
    %cst_118 = arith.constant dense<0.000000e+00> : vector<8x32xf32>
    %306 = tpu.matmul %305, %274, %cst_118 {dimension_numbers = #tpu.dot_dimension_numbers<[1], [0], [0], [1], [0, 0, 1, 1], [], []>} : vector<8x8xf32>, vector<8x32xf32>, vector<8x32xf32> -> vector<8x32xf32>
    %c2_119 = arith.constant 2 : index
    %c0_120 = arith.constant 0 : index
    %307 = vector.load %arg19[%c2_119, %c0_120] : memref<7x32xf32, #tpu.memory_space<vmem>>, vector<1x32xf32>
    %308 = vector.broadcast %307 : vector<1x32xf32> to vector<8x32xf32>
    %309 = arith.mulf %306, %308 : vector<8x32xf32>
    %310 = arith.addf %300, %309 : vector<8x32xf32>
    %c0_i32 = arith.constant 0 : i32
    %311 = vector.broadcast %c0_i32 : i32 to vector<8x8xi32>
    %312 = arith.addi %275, %311 : vector<8x8xi32>
    %313 = arith.cmpi eq, %276, %312 : vector<8x8xi32>
    %314 = arith.extui %313 : vector<8x8xi1> to vector<8x8xi32>
    %315 = arith.sitofp %314 : vector<8x8xi32> to vector<8x8xf32>
    %cst_121 = arith.constant dense<0.000000e+00> : vector<8x32xf32>
    %316 = tpu.matmul %315, %274, %cst_121 {dimension_numbers = #tpu.dot_dimension_numbers<[1], [0], [0], [1], [0, 0, 1, 1], [], []>} : vector<8x8xf32>, vector<8x32xf32>, vector<8x32xf32> -> vector<8x32xf32>
    %c3 = arith.constant 3 : index
    %c0_122 = arith.constant 0 : index
    %317 = vector.load %arg19[%c3, %c0_122] : memref<7x32xf32, #tpu.memory_space<vmem>>, vector<1x32xf32>
    %318 = vector.broadcast %317 : vector<1x32xf32> to vector<8x32xf32>
    %319 = arith.mulf %316, %318 : vector<8x32xf32>
    %320 = arith.addf %310, %319 : vector<8x32xf32>
    %c1_i32 = arith.constant 1 : i32
    %321 = vector.broadcast %c1_i32 : i32 to vector<8x8xi32>
    %322 = arith.addi %275, %321 : vector<8x8xi32>
    %323 = arith.cmpi eq, %276, %322 : vector<8x8xi32>
    %324 = arith.extui %323 : vector<8x8xi1> to vector<8x8xi32>
    %325 = arith.sitofp %324 : vector<8x8xi32> to vector<8x8xf32>
    %cst_123 = arith.constant dense<0.000000e+00> : vector<8x32xf32>
    %326 = tpu.matmul %325, %274, %cst_123 {dimension_numbers = #tpu.dot_dimension_numbers<[1], [0], [0], [1], [0, 0, 1, 1], [], []>} : vector<8x8xf32>, vector<8x32xf32>, vector<8x32xf32> -> vector<8x32xf32>
    %c4 = arith.constant 4 : index
    %c0_124 = arith.constant 0 : index
    %327 = vector.load %arg19[%c4, %c0_124] : memref<7x32xf32, #tpu.memory_space<vmem>>, vector<1x32xf32>
    %328 = vector.broadcast %327 : vector<1x32xf32> to vector<8x32xf32>
    %329 = arith.mulf %326, %328 : vector<8x32xf32>
    %330 = arith.addf %320, %329 : vector<8x32xf32>
    %c2_i32 = arith.constant 2 : i32
    %331 = vector.broadcast %c2_i32 : i32 to vector<8x8xi32>
    %332 = arith.addi %275, %331 : vector<8x8xi32>
    %333 = arith.cmpi eq, %276, %332 : vector<8x8xi32>
    %334 = arith.extui %333 : vector<8x8xi1> to vector<8x8xi32>
    %335 = arith.sitofp %334 : vector<8x8xi32> to vector<8x8xf32>
    %cst_125 = arith.constant dense<0.000000e+00> : vector<8x32xf32>
    %336 = tpu.matmul %335, %274, %cst_125 {dimension_numbers = #tpu.dot_dimension_numbers<[1], [0], [0], [1], [0, 0, 1, 1], [], []>} : vector<8x8xf32>, vector<8x32xf32>, vector<8x32xf32> -> vector<8x32xf32>
    %c5 = arith.constant 5 : index
    %c0_126 = arith.constant 0 : index
    %337 = vector.load %arg19[%c5, %c0_126] : memref<7x32xf32, #tpu.memory_space<vmem>>, vector<1x32xf32>
    %338 = vector.broadcast %337 : vector<1x32xf32> to vector<8x32xf32>
    %339 = arith.mulf %336, %338 : vector<8x32xf32>
    %340 = arith.addf %330, %339 : vector<8x32xf32>
    %c3_i32 = arith.constant 3 : i32
    %341 = vector.broadcast %c3_i32 : i32 to vector<8x8xi32>
    %342 = arith.addi %275, %341 : vector<8x8xi32>
    %343 = arith.cmpi eq, %276, %342 : vector<8x8xi32>
    %344 = arith.extui %343 : vector<8x8xi1> to vector<8x8xi32>
    %345 = arith.sitofp %344 : vector<8x8xi32> to vector<8x8xf32>
    %cst_127 = arith.constant dense<0.000000e+00> : vector<8x32xf32>
    %346 = tpu.matmul %345, %274, %cst_127 {dimension_numbers = #tpu.dot_dimension_numbers<[1], [0], [0], [1], [0, 0, 1, 1], [], []>} : vector<8x8xf32>, vector<8x32xf32>, vector<8x32xf32> -> vector<8x32xf32>
    %c6 = arith.constant 6 : index
    %c0_128 = arith.constant 0 : index
    %347 = vector.load %arg19[%c6, %c0_128] : memref<7x32xf32, #tpu.memory_space<vmem>>, vector<1x32xf32>
    %348 = vector.broadcast %347 : vector<1x32xf32> to vector<8x32xf32>
    %349 = arith.mulf %346, %348 : vector<8x32xf32>
    %350 = arith.addf %340, %349 : vector<8x32xf32>
    %c3_129 = arith.constant 3 : index
    %c0_130 = arith.constant 0 : index
    %351 = vector.load %arg5[%c3_129, %c0_130] : memref<6x32xf32, #tpu.memory_space<vmem>>, vector<1x32xf32>
    %c3_131 = arith.constant 3 : index
    %c0_132 = arith.constant 0 : index
    %352 = vector.load %arg6[%c3_131, %c0_132] : memref<6x32xf32, #tpu.memory_space<vmem>>, vector<1x32xf32>
    %cst_133 = arith.constant dense<0.000000e+00> : vector<8xf32>
    %353 = vector.multi_reduction <add>, %350, %cst_133 [1] : vector<8x32xf32> to vector<8xf32>
    %354 = vector.shape_cast %353 : vector<8xf32> to vector<8x1xf32>
    %cst_134 = arith.constant 3.200000e+01 : f32
    %355 = vector.broadcast %cst_134 : f32 to vector<8x1xf32>
    %356 = arith.divf %354, %355 : vector<8x1xf32>
    %357 = vector.broadcast %356 : vector<8x1xf32> to vector<8x32xf32>
    %358 = arith.subf %350, %357 : vector<8x32xf32>
    %359 = arith.mulf %358, %358 : vector<8x32xf32>
    %cst_135 = arith.constant dense<0.000000e+00> : vector<8xf32>
    %360 = vector.multi_reduction <add>, %359, %cst_135 [1] : vector<8x32xf32> to vector<8xf32>
    %361 = vector.shape_cast %360 : vector<8xf32> to vector<8x1xf32>
    %cst_136 = arith.constant 3.200000e+01 : f32
    %362 = vector.broadcast %cst_136 : f32 to vector<8x1xf32>
    %363 = arith.divf %361, %362 : vector<8x1xf32>
    %364 = vector.broadcast %356 : vector<8x1xf32> to vector<8x32xf32>
    %365 = arith.subf %350, %364 : vector<8x32xf32>
    %cst_137 = arith.constant 9.99999974E-6 : f32
    %366 = vector.broadcast %cst_137 : f32 to vector<8x1xf32>
    %367 = arith.addf %363, %366 : vector<8x1xf32>
    %368 = math.rsqrt %367 : vector<8x1xf32>
    %369 = vector.broadcast %368 : vector<8x1xf32> to vector<8x32xf32>
    %370 = arith.mulf %365, %369 : vector<8x32xf32>
    %371 = vector.broadcast %351 : vector<1x32xf32> to vector<8x32xf32>
    %372 = arith.mulf %370, %371 : vector<8x32xf32>
    %373 = vector.broadcast %352 : vector<1x32xf32> to vector<8x32xf32>
    %374 = arith.addf %372, %373 : vector<8x32xf32>
    %375 = arith.negf %374 : vector<8x32xf32>
    %376 = math.exp %375 : vector<8x32xf32>
    %cst_138 = arith.constant 1.000000e+00 : f32
    %377 = vector.broadcast %cst_138 : f32 to vector<8x32xf32>
    %378 = arith.addf %377, %376 : vector<8x32xf32>
    %379 = arith.divf %377, %378 : vector<8x32xf32>
    %380 = arith.mulf %374, %379 : vector<8x32xf32>
    %c0_139 = arith.constant 0 : index
    %c0_140 = arith.constant 0 : index
    %381 = vector.load %arg21[%c0_139, %c0_140] : memref<32x32xf32, #tpu.memory_space<vmem>>, vector<32x32xf32>
    %cst_141 = arith.constant dense<0.000000e+00> : vector<8x32xf32>
    %382 = tpu.matmul %380, %381, %cst_141 {dimension_numbers = #tpu.dot_dimension_numbers<[1], [0], [0], [1], [0, 0, 1, 1], [], []>} : vector<8x32xf32>, vector<32x32xf32>, vector<8x32xf32> -> vector<8x32xf32>
    %c0_142 = arith.constant 0 : index
    %c0_143 = arith.constant 0 : index
    %383 = vector.load %arg22[%c0_142, %c0_143] : memref<1x32xf32, #tpu.memory_space<vmem>>, vector<1x32xf32>
    %384 = vector.broadcast %383 : vector<1x32xf32> to vector<8x32xf32>
    %385 = arith.addf %382, %384 : vector<8x32xf32>
    %386 = vector.broadcast %7 : vector<8x1xf32> to vector<8x32xf32>
    %387 = arith.mulf %385, %386 : vector<8x32xf32>
    %388 = arith.addf %235, %387 : vector<8x32xf32>
    %c4_144 = arith.constant 4 : index
    %c0_145 = arith.constant 0 : index
    %389 = vector.load %arg5[%c4_144, %c0_145] : memref<6x32xf32, #tpu.memory_space<vmem>>, vector<1x32xf32>
    %c4_146 = arith.constant 4 : index
    %c0_147 = arith.constant 0 : index
    %390 = vector.load %arg6[%c4_146, %c0_147] : memref<6x32xf32, #tpu.memory_space<vmem>>, vector<1x32xf32>
    %cst_148 = arith.constant dense<0.000000e+00> : vector<8xf32>
    %391 = vector.multi_reduction <add>, %388, %cst_148 [1] : vector<8x32xf32> to vector<8xf32>
    %392 = vector.shape_cast %391 : vector<8xf32> to vector<8x1xf32>
    %cst_149 = arith.constant 3.200000e+01 : f32
    %393 = vector.broadcast %cst_149 : f32 to vector<8x1xf32>
    %394 = arith.divf %392, %393 : vector<8x1xf32>
    %395 = vector.broadcast %394 : vector<8x1xf32> to vector<8x32xf32>
    %396 = arith.subf %388, %395 : vector<8x32xf32>
    %397 = arith.mulf %396, %396 : vector<8x32xf32>
    %cst_150 = arith.constant dense<0.000000e+00> : vector<8xf32>
    %398 = vector.multi_reduction <add>, %397, %cst_150 [1] : vector<8x32xf32> to vector<8xf32>
    %399 = vector.shape_cast %398 : vector<8xf32> to vector<8x1xf32>
    %cst_151 = arith.constant 3.200000e+01 : f32
    %400 = vector.broadcast %cst_151 : f32 to vector<8x1xf32>
    %401 = arith.divf %399, %400 : vector<8x1xf32>
    %402 = vector.broadcast %394 : vector<8x1xf32> to vector<8x32xf32>
    %403 = arith.subf %388, %402 : vector<8x32xf32>
    %cst_152 = arith.constant 9.99999974E-6 : f32
    %404 = vector.broadcast %cst_152 : f32 to vector<8x1xf32>
    %405 = arith.addf %401, %404 : vector<8x1xf32>
    %406 = math.rsqrt %405 : vector<8x1xf32>
    %407 = vector.broadcast %406 : vector<8x1xf32> to vector<8x32xf32>
    %408 = arith.mulf %403, %407 : vector<8x32xf32>
    %409 = vector.broadcast %389 : vector<1x32xf32> to vector<8x32xf32>
    %410 = arith.mulf %408, %409 : vector<8x32xf32>
    %411 = vector.broadcast %390 : vector<1x32xf32> to vector<8x32xf32>
    %412 = arith.addf %410, %411 : vector<8x32xf32>
    %c1_153 = arith.constant 1 : index
    %c0_154 = arith.constant 0 : index
    %c0_155 = arith.constant 0 : index
    %413 = vector.load %arg7[%c1_153, %c0_154, %c0_155] : memref<2x32x64xf32, #tpu.memory_space<vmem>>, vector<1x32x64xf32>
    %414 = vector.shape_cast %413 : vector<1x32x64xf32> to vector<32x64xf32>
    %cst_156 = arith.constant dense<0.000000e+00> : vector<8x64xf32>
    %415 = tpu.matmul %412, %414, %cst_156 {dimension_numbers = #tpu.dot_dimension_numbers<[1], [0], [0], [1], [0, 0, 1, 1], [], []>} : vector<8x32xf32>, vector<32x64xf32>, vector<8x64xf32> -> vector<8x64xf32>
    %c1_157 = arith.constant 1 : index
    %c0_158 = arith.constant 0 : index
    %416 = vector.load %arg8[%c1_157, %c0_158] : memref<2x64xf32, #tpu.memory_space<vmem>>, vector<1x64xf32>
    %417 = vector.broadcast %416 : vector<1x64xf32> to vector<8x64xf32>
    %418 = arith.addf %415, %417 : vector<8x64xf32>
    %419 = arith.negf %418 : vector<8x64xf32>
    %420 = math.exp %419 : vector<8x64xf32>
    %cst_159 = arith.constant 1.000000e+00 : f32
    %421 = vector.broadcast %cst_159 : f32 to vector<8x64xf32>
    %422 = arith.addf %421, %420 : vector<8x64xf32>
    %423 = arith.divf %421, %422 : vector<8x64xf32>
    %424 = arith.mulf %418, %423 : vector<8x64xf32>
    %c1_160 = arith.constant 1 : index
    %c0_161 = arith.constant 0 : index
    %c0_162 = arith.constant 0 : index
    %425 = vector.load %arg9[%c1_160, %c0_161, %c0_162] : memref<2x64x32xf32, #tpu.memory_space<vmem>>, vector<1x64x32xf32>
    %426 = vector.shape_cast %425 : vector<1x64x32xf32> to vector<64x32xf32>
    %cst_163 = arith.constant dense<0.000000e+00> : vector<8x32xf32>
    %427 = tpu.matmul %424, %426, %cst_163 {dimension_numbers = #tpu.dot_dimension_numbers<[1], [0], [0], [1], [0, 0, 1, 1], [], []>} : vector<8x64xf32>, vector<64x32xf32>, vector<8x32xf32> -> vector<8x32xf32>
    %c1_164 = arith.constant 1 : index
    %c0_165 = arith.constant 0 : index
    %428 = vector.load %arg10[%c1_164, %c0_165] : memref<2x32xf32, #tpu.memory_space<vmem>>, vector<1x32xf32>
    %429 = vector.broadcast %428 : vector<1x32xf32> to vector<8x32xf32>
    %430 = arith.addf %427, %429 : vector<8x32xf32>
    %cst_166 = arith.constant 5.000000e-01 : f32
    %431 = vector.broadcast %cst_166 : f32 to vector<8x32xf32>
    %432 = arith.mulf %431, %430 : vector<8x32xf32>
    %433 = arith.addf %388, %432 : vector<8x32xf32>
    %c5_167 = arith.constant 5 : index
    %c0_168 = arith.constant 0 : index
    %434 = vector.load %arg5[%c5_167, %c0_168] : memref<6x32xf32, #tpu.memory_space<vmem>>, vector<1x32xf32>
    %c5_169 = arith.constant 5 : index
    %c0_170 = arith.constant 0 : index
    %435 = vector.load %arg6[%c5_169, %c0_170] : memref<6x32xf32, #tpu.memory_space<vmem>>, vector<1x32xf32>
    %cst_171 = arith.constant dense<0.000000e+00> : vector<8xf32>
    %436 = vector.multi_reduction <add>, %433, %cst_171 [1] : vector<8x32xf32> to vector<8xf32>
    %437 = vector.shape_cast %436 : vector<8xf32> to vector<8x1xf32>
    %cst_172 = arith.constant 3.200000e+01 : f32
    %438 = vector.broadcast %cst_172 : f32 to vector<8x1xf32>
    %439 = arith.divf %437, %438 : vector<8x1xf32>
    %440 = vector.broadcast %439 : vector<8x1xf32> to vector<8x32xf32>
    %441 = arith.subf %433, %440 : vector<8x32xf32>
    %442 = arith.mulf %441, %441 : vector<8x32xf32>
    %cst_173 = arith.constant dense<0.000000e+00> : vector<8xf32>
    %443 = vector.multi_reduction <add>, %442, %cst_173 [1] : vector<8x32xf32> to vector<8xf32>
    %444 = vector.shape_cast %443 : vector<8xf32> to vector<8x1xf32>
    %cst_174 = arith.constant 3.200000e+01 : f32
    %445 = vector.broadcast %cst_174 : f32 to vector<8x1xf32>
    %446 = arith.divf %444, %445 : vector<8x1xf32>
    %447 = vector.broadcast %439 : vector<8x1xf32> to vector<8x32xf32>
    %448 = arith.subf %433, %447 : vector<8x32xf32>
    %cst_175 = arith.constant 9.99999974E-6 : f32
    %449 = vector.broadcast %cst_175 : f32 to vector<8x1xf32>
    %450 = arith.addf %446, %449 : vector<8x1xf32>
    %451 = math.rsqrt %450 : vector<8x1xf32>
    %452 = vector.broadcast %451 : vector<8x1xf32> to vector<8x32xf32>
    %453 = arith.mulf %448, %452 : vector<8x32xf32>
    %454 = vector.broadcast %434 : vector<1x32xf32> to vector<8x32xf32>
    %455 = arith.mulf %453, %454 : vector<8x32xf32>
    %456 = vector.broadcast %435 : vector<1x32xf32> to vector<8x32xf32>
    %457 = arith.addf %455, %456 : vector<8x32xf32>
    %c0_176 = arith.constant 0 : index
    %c0_177 = arith.constant 0 : index
    %c0_178 = arith.constant 0 : index
    %458 = vector.load %arg23[%c0_176, %c0_177, %c0_178] : memref<1x8x32xf32, #tpu.memory_space<vmem>>, vector<1x8x32xf32>
    %459 = vector.shape_cast %458 : vector<1x8x32xf32> to vector<8x32xf32>
    %460 = vector.shape_cast %457 : vector<8x32xf32> to vector<1x8x32xf32>
    tpu.vector_store %arg23[%c0_176, %c0_177, %c0_178], %460 {strides = array<i32>} : memref<1x8x32xf32, #tpu.memory_space<vmem>>, vector<1x8x32xf32>,
    return
  }
  func.func @transform_0(%arg0: i32) -> (i32, i32, i32) {
    %c0_i32 = arith.constant 0 : i32
    %c0_i32_0 = arith.constant 0 : i32
    %c0_i32_1 = arith.constant 0 : i32
    return %arg0, %c0_i32, %c0_i32_0 : i32, i32, i32
  }
  func.func @transform_1(%arg0: i32) -> (i32, i32, i32) {
    %c0_i32 = arith.constant 0 : i32
    %c0_i32_0 = arith.constant 0 : i32
    %c0_i32_1 = arith.constant 0 : i32
    return %arg0, %c0_i32, %c0_i32_0 : i32, i32, i32
  }
  func.func @transform_2(%arg0: i32) -> (i32, i32, i32) {
    %c0_i32 = arith.constant 0 : i32
    %c0_i32_0 = arith.constant 0 : i32
    %c0_i32_1 = arith.constant 0 : i32
    return %arg0, %c0_i32, %c0_i32_0 : i32, i32, i32
  }
  func.func @transform_3(%arg0: i32) -> (i32, i32) {
    %c0_i32 = arith.constant 0 : i32
    %c0_i32_0 = arith.constant 0 : i32
    %c0_i32_1 = arith.constant 0 : i32
    return %c0_i32, %c0_i32_0 : i32, i32
  }
  func.func @transform_4(%arg0: i32) -> (i32, i32) {
    %c0_i32 = arith.constant 0 : i32
    %c0_i32_0 = arith.constant 0 : i32
    %c0_i32_1 = arith.constant 0 : i32
    return %c0_i32, %c0_i32_0 : i32, i32
  }
  func.func @transform_5(%arg0: i32) -> (i32, i32) {
    %c0_i32 = arith.constant 0 : i32
    %c0_i32_0 = arith.constant 0 : i32
    %c0_i32_1 = arith.constant 0 : i32
    return %c0_i32, %c0_i32_0 : i32, i32
  }
  func.func @transform_6(%arg0: i32) -> (i32, i32, i32) {
    %c0_i32 = arith.constant 0 : i32
    %c0_i32_0 = arith.constant 0 : i32
    %c0_i32_1 = arith.constant 0 : i32
    %c0_i32_2 = arith.constant 0 : i32
    return %c0_i32, %c0_i32_0, %c0_i32_1 : i32, i32, i32
  }
  func.func @transform_7(%arg0: i32) -> (i32, i32) {
    %c0_i32 = arith.constant 0 : i32
    %c0_i32_0 = arith.constant 0 : i32
    %c0_i32_1 = arith.constant 0 : i32
    return %c0_i32, %c0_i32_0 : i32, i32
  }
  func.func @transform_8(%arg0: i32) -> (i32, i32, i32) {
    %c0_i32 = arith.constant 0 : i32
    %c0_i32_0 = arith.constant 0 : i32
    %c0_i32_1 = arith.constant 0 : i32
    %c0_i32_2 = arith.constant 0 : i32
    return %c0_i32, %c0_i32_0, %c0_i32_1 : i32, i32, i32
  }
  func.func @transform_9(%arg0: i32) -> (i32, i32) {
    %c0_i32 = arith.constant 0 : i32
    %c0_i32_0 = arith.constant 0 : i32
    %c0_i32_1 = arith.constant 0 : i32
    return %c0_i32, %c0_i32_0 : i32, i32
  }
  func.func @transform_10(%arg0: i32) -> (i32, i32) {
    %c0_i32 = arith.constant 0 : i32
    %c0_i32_0 = arith.constant 0 : i32
    %c0_i32_1 = arith.constant 0 : i32
    return %c0_i32, %c0_i32_0 : i32, i32
  }
  func.func @transform_11(%arg0: i32) -> (i32, i32) {
    %c0_i32 = arith.constant 0 : i32
    %c0_i32_0 = arith.constant 0 : i32
    %c0_i32_1 = arith.constant 0 : i32
    return %c0_i32, %c0_i32_0 : i32, i32
  }
  func.func @transform_12(%arg0: i32) -> (i32, i32) {
    %c0_i32 = arith.constant 0 : i32
    %c0_i32_0 = arith.constant 0 : i32
    %c0_i32_1 = arith.constant 0 : i32
    return %c0_i32, %c0_i32_0 : i32, i32
  }
  func.func @transform_13(%arg0: i32) -> (i32, i32) {
    %c0_i32 = arith.constant 0 : i32
    %c0_i32_0 = arith.constant 0 : i32
    %c0_i32_1 = arith.constant 0 : i32
    return %c0_i32, %c0_i32_0 : i32, i32
  }
  func.func @transform_14(%arg0: i32) -> (i32, i32) {
    %c0_i32 = arith.constant 0 : i32
    %c0_i32_0 = arith.constant 0 : i32
    %c0_i32_1 = arith.constant 0 : i32
    return %c0_i32, %c0_i32_0 : i32, i32
  }
  func.func @transform_15(%arg0: i32) -> (i32, i32) {
    %c0_i32 = arith.constant 0 : i32
    %c0_i32_0 = arith.constant 0 : i32
    %c0_i32_1 = arith.constant 0 : i32
    return %c0_i32, %c0_i32_0 : i32, i32
  }
  func.func @transform_16(%arg0: i32) -> (i32, i32) {
    %c0_i32 = arith.constant 0 : i32
    %c0_i32_0 = arith.constant 0 : i32
    %c0_i32_1 = arith.constant 0 : i32
    return %c0_i32, %c0_i32_0 : i32, i32
  }
  func.func @transform_17(%arg0: i32) -> (i32, i32) {
    %c0_i32 = arith.constant 0 : i32
    %c0_i32_0 = arith.constant 0 : i32
    %c0_i32_1 = arith.constant 0 : i32
    return %c0_i32, %c0_i32_0 : i32, i32
  }
  func.func @transform_18(%arg0: i32) -> (i32, i32) {
    %c0_i32 = arith.constant 0 : i32
    %c0_i32_0 = arith.constant 0 : i32
    %c0_i32_1 = arith.constant 0 : i32
    return %c0_i32, %c0_i32_0 : i32, i32
  }
  func.func @transform_19(%arg0: i32) -> (i32, i32) {
    %c0_i32 = arith.constant 0 : i32
    %c0_i32_0 = arith.constant 0 : i32
    %c0_i32_1 = arith.constant 0 : i32
    return %c0_i32, %c0_i32_0 : i32, i32
  }
  func.func @transform_20(%arg0: i32) -> (i32, i32) {
    %c0_i32 = arith.constant 0 : i32
    %c0_i32_0 = arith.constant 0 : i32
    %c0_i32_1 = arith.constant 0 : i32
    return %c0_i32, %c0_i32_0 : i32, i32
  }
  func.func @transform_21(%arg0: i32) -> (i32, i32) {
    %c0_i32 = arith.constant 0 : i32
    %c0_i32_0 = arith.constant 0 : i32
    %c0_i32_1 = arith.constant 0 : i32
    return %c0_i32, %c0_i32_0 : i32, i32
  }
  func.func @transform_22(%arg0: i32) -> (i32, i32, i32) {
    %c0_i32 = arith.constant 0 : i32
    %c0_i32_0 = arith.constant 0 : i32
    %c0_i32_1 = arith.constant 0 : i32
    return %arg0, %c0_i32, %c0_i32_0 : i32, i32, i32
  }
}

</mosaic_0001>

<llo_original>
// kernel: conformer_layer_forward.1
$region0: #{conformer_layer_forward.1}
  #allocation0 [shape = 'u32[]', space=smem, size = 0x4, offset = 0x4, fixed_abs, tag = 'smem constant byte address 0x4 - core index']
  #allocation1 [shape = 'u32[72,128]{1,0:T(1,128)}', space=vmem, size = 0x9000, scoped, tag = 'internal scratch']
  %s0 = inlined_call_operand.vmem [shape: f32[2,8,32], index: 0, kind: input, shape index: {}]
  %s1 = inlined_call_operand.vmem [shape: f32[2,8,8], index: 1, kind: input, shape index: {}]
  %s2 = inlined_call_operand.vmem [shape: f32[2,8,1], index: 2, kind: input, shape index: {}]
  %s3 = inlined_call_operand.vmem [shape: f32[8,32], index: 3, kind: input, shape index: {}]
  %s4 = inlined_call_operand.vmem [shape: f32[6,32], index: 4, kind: input, shape index: {}]
  %s5 = inlined_call_operand.vmem [shape: f32[6,32], index: 5, kind: input, shape index: {}]
  %s6 = inlined_call_operand.vmem [shape: f32[2,32,64], index: 6, kind: input, shape index: {}]
  %s7 = inlined_call_operand.vmem [shape: f32[2,64], index: 7, kind: input, shape index: {}]
  %s8 = inlined_call_operand.vmem [shape: f32[2,64,32], index: 8, kind: input, shape index: {}]
  %s9 = inlined_call_operand.vmem [shape: f32[2,32], index: 9, kind: input, shape index: {}]
  %s10 = inlined_call_operand.vmem [shape: f32[32,128], index: 10, kind: input, shape index: {}]
  %s11 = inlined_call_operand.vmem [shape: f32[1,128], index: 11, kind: input, shape index: {}]
  %s12 = inlined_call_operand.vmem [shape: f32[4,8], index: 12, kind: input, shape index: {}]
  %s13 = inlined_call_operand.vmem [shape: f32[4,8], index: 13, kind: input, shape index: {}]
  %s14 = inlined_call_operand.vmem [shape: f32[32,32], index: 14, kind: input, shape index: {}]
  %s15 = inlined_call_operand.vmem [shape: f32[1,32], index: 15, kind: input, shape index: {}]
  %s16 = inlined_call_operand.vmem [shape: f32[32,64], index: 16, kind: input, shape index: {}]
  %s17 = inlined_call_operand.vmem [shape: f32[1,64], index: 17, kind: input, shape index: {}]
  %s18 = inlined_call_operand.vmem [shape: f32[7,32], index: 18, kind: input, shape index: {}]
  %s19 = inlined_call_operand.vmem [shape: f32[1,32], index: 19, kind: input, shape index: {}]
  %s20 = inlined_call_operand.vmem [shape: f32[32,32], index: 20, kind: input, shape index: {}]
  %s21 = inlined_call_operand.vmem [shape: f32[1,32], index: 21, kind: input, shape index: {}]
  %s22 = inlined_call_operand.hbm [shape: f32[2,8,32], index: 22, kind: output, shape index: {}]
  %s23 = sld [smem:[#allocation0]]
  $region121: #{conformer_layer_forward.1} parent=0
    _
  %s25 = ssub.s32 1, %s23
  %s26 = scalar_select 0, %s25, %s23
  $region1: #{conformer_layer_forward.1} parent=0
    #allocation2 [shape = 'u8[8192]{0}', space=vmem, size = 0x2000, scoped, tag = 'output window, operand 0']
    #allocation3 [shape = 's32[2]{0}', space=sflag, size = 0x8, scoped, tag = 'scoped memory for conformer_layer_forward.1']
    %27 = vsyncpa [#allocation3], 0
    %s28 = scalar_lea.sflag [#allocation3], 1
    %29 = vsyncpa %s28, 0
    loop: start=0, step=1, limit=4
    $region2: #{conformer_layer_forward.1} parent=1 // loop_pre_header
      _
    $region3: #{conformer_layer_forward.1} parent=1 // loop_header
      %s31 = sphi 0, %s35
      %p32 = scmp.ge.s32.totalorder %s31, 4
      %s41 = sphi 0, %s43
      %s44 = sphi 0, %s41
      %s45 = sphi 0, %s44
      %s61 = sphi 0, %s45
      %s67 = sphi 0, %s69
      %s70 = sphi 0, %s67
      %s71 = sphi 0, %s70
      %s87 = sphi 0, %s71
      %s93 = sphi 0, %s95
      %s96 = sphi 0, %s93
      %s97 = sphi 0, %s96
      %s113 = sphi 0, %s97
      %s117 = sphi 0, %s117
      %s119 = sphi 0, %s117
      %s120 = sphi 0, %s119
      %s134 = sphi 0, %s120
      %s138 = sphi 0, %s138
      %s140 = sphi 0, %s138
      %s141 = sphi 0, %s140
      %s155 = sphi 0, %s141
      %s159 = sphi 0, %s159
      %s161 = sphi 0, %s159
      %s162 = sphi 0, %s161
      %s176 = sphi 0, %s162
      %s180 = sphi 0, %s180
      %s182 = sphi 0, %s180
      %s183 = sphi 0, %s182
      %s197 = sphi 0, %s183
      %s201 = sphi 0, %s201
      %s203 = sphi 0, %s201
      %s204 = sphi 0, %s203
      %s218 = sphi 0, %s204
      %s222 = sphi 0, %s222
      %s224 = sphi 0, %s222
      %s225 = sphi 0, %s224
      %s239 = sphi 0, %s225
      %s243 = sphi 0, %s243
      %s245 = sphi 0, %s243
      %s246 = sphi 0, %s245
      %s260 = sphi 0, %s246
      %s264 = sphi 0, %s264
      %s266 = sphi 0, %s264
      %s267 = sphi 0, %s266
      %s281 = sphi 0, %s267
      %s285 = sphi 0, %s285
      %s287 = sphi 0, %s285
      %s288 = sphi 0, %s287
      %s302 = sphi 0, %s288
      %s306 = sphi 0, %s306
      %s308 = sphi 0, %s306
      %s309 = sphi 0, %s308
      %s323 = sphi 0, %s309
      %s327 = sphi 0, %s327
      %s329 = sphi 0, %s327
      %s330 = sphi 0, %s329
      %s344 = sphi 0, %s330
      %s348 = sphi 0, %s348
      %s350 = sphi 0, %s348
      %s351 = sphi 0, %s350
      %s365 = sphi 0, %s351
      %s369 = sphi 0, %s369
      %s371 = sphi 0, %s369
      %s372 = sphi 0, %s371
      %s386 = sphi 0, %s372
      %s390 = sphi 0, %s390
      %s392 = sphi 0, %s390
      %s393 = sphi 0, %s392
      %s407 = sphi 0, %s393
      %s411 = sphi 0, %s411
      %s413 = sphi 0, %s411
      %s414 = sphi 0, %s413
      %s428 = sphi 0, %s414
      %s432 = sphi 0, %s432
      %s434 = sphi 0, %s432
      %s435 = sphi 0, %s434
      %s449 = sphi 0, %s435
      %s453 = sphi 0, %s453
      %s455 = sphi 0, %s453
      %s456 = sphi 0, %s455
      %s470 = sphi 0, %s456
      %s474 = sphi 0, %s474
      %s476 = sphi 0, %s474
      %s477 = sphi 0, %s476
      %s491 = sphi 0, %s477
      %s495 = sphi 0, %s495
      %s497 = sphi 0, %s495
      %s498 = sphi 0, %s497
      %s512 = sphi 0, %s498
      %s518 = sphi 0, %s520
      %s521 = sphi 0, %s518
      %s522 = sphi 0, %s521
      %s538 = sphi 0, %s522
    $region4: #{conformer_layer_forward.1} parent=1 // loop_header_branch
      %34 = sbr.rel (%p32) target = $region8
    $region5: #{conformer_layer_forward.1} parent=1 // loop_body
      %s36 = ssub.s32 %s31, 1
      %s37 = ssub.s32 %s31, 2
      %s38 = sadd.s32 %s31, 1
      %s39 = ssub.s32 %s31, %s38
      %p40 = scmp.eq.s32.totalorder %s39, 0
      %s42 = sadd.s32 %s41, 1
      %s43 = scalar_select %p40, %s41, %s42
      %p46 = pneg %p40
      %p47 = scmp.eq.s32.totalorder %s31, 1
      %p48 = por %p46, %p47
      %p49 = scmp.ne.s32.totalorder %s41, %s44
      %p50 = scmp.eq.s32.totalorder %s31, 0
      %p51 = por %p49, %p50
      %p52 = scmp.ne.s32.totalorder %s41, %s44
      %p53 = scmp.eq.s32.totalorder %s36, 1
      %p54 = por %p52, %p53
      %p55 = scmp.ne.s32.totalorder %s44, %s45
      %p56 = scmp.eq.s32.totalorder %s36, 0
      %p57 = por %p55, %p56
      %p58 = scmp.ne.s32.totalorder %s44, %s45
      %p59 = scmp.eq.s32.totalorder %s37, 1
      %p60 = por %p58, %p59
      %p62 = scmp.ne.s32.totalorder %s45, %s61
      %p63 = scmp.eq.s32.totalorder %s37, 0
      %p64 = por %p62, %p63
      %s65 = ssub.s32 %s31, %s38
      %p66 = scmp.eq.s32.totalorder %s65, 0
      %s68 = sadd.s32 %s67, 1
      %s69 = scalar_select %p66, %s67, %s68
      %p72 = pneg %p66
      %p73 = scmp.eq.s32.totalorder %s31, 1
      %p74 = por %p72, %p73
      %p75 = scmp.ne.s32.totalorder %s67, %s70
      %p76 = scmp.eq.s32.totalorder %s31, 0
      %p77 = por %p75, %p76
      %p78 = scmp.ne.s32.totalorder %s67, %s70
      %p79 = scmp.eq.s32.totalorder %s36, 1
      %p80 = por %p78, %p79
      %p81 = scmp.ne.s32.totalorder %s70, %s71
      %p82 = scmp.eq.s32.totalorder %s36, 0
      %p83 = por %p81, %p82
      %p84 = scmp.ne.s32.totalorder %s70, %s71
      %p85 = scmp.eq.s32.totalorder %s37, 1
      %p86 = por %p84, %p85
      %p88 = scmp.ne.s32.totalorder %s71, %s87
      %p89 = scmp.eq.s32.totalorder %s37, 0
      %p90 = por %p88, %p89
      %s91 = ssub.s32 %s31, %s38
      %p92 = scmp.eq.s32.totalorder %s91, 0
      %s94 = sadd.s32 %s93, 1
      %s95 = scalar_select %p92, %s93, %s94
      %p98 = pneg %p92
      %p99 = scmp.eq.s32.totalorder %s31, 1
      %p100 = por %p98, %p99
      %p101 = scmp.ne.s32.totalorder %s93, %s96
      %p102 = scmp.eq.s32.totalorder %s31, 0
      %p103 = por %p101, %p102
      %p104 = scmp.ne.s32.totalorder %s93, %s96
      %p105 = scmp.eq.s32.totalorder %s36, 1
      %p106 = por %p104, %p105
      %p107 = scmp.ne.s32.totalorder %s96, %s97
      %p108 = scmp.eq.s32.totalorder %s36, 0
      %p109 = por %p107, %p108
      %p110 = scmp.ne.s32.totalorder %s96, %s97
      %p111 = scmp.eq.s32.totalorder %s37, 1
      %p112 = por %p110, %p111
      %p114 = scmp.ne.s32.totalorder %s97, %s113
      %p115 = scmp.eq.s32.totalorder %s37, 0
      %p116 = por %p114, %p115
      %s118 = sadd.s32 %s117, 1
      %p121 = scmp.eq.s32.totalorder %s31, 1
      %p122 = scmp.ne.s32.totalorder %s117, %s119
      %p123 = scmp.eq.s32.totalorder %s31, 0
      %p124 = por %p122, %p123
      %p125 = scmp.ne.s32.totalorder %s117, %s119
      %p126 = scmp.eq.s32.totalorder %s36, 1
      %p127 = por %p125, %p126
      %p128 = scmp.ne.s32.totalorder %s119, %s120
      %p129 = scmp.eq.s32.totalorder %s36, 0
      %p130 = por %p128, %p129
      %p131 = scmp.ne.s32.totalorder %s119, %s120
      %p132 = scmp.eq.s32.totalorder %s37, 1
      %p133 = por %p131, %p132
      %p135 = scmp.ne.s32.totalorder %s120, %s134
      %p136 = scmp.eq.s32.totalorder %s37, 0
      %p137 = por %p135, %p136
      %s139 = sadd.s32 %s138, 1
      %p142 = scmp.eq.s32.totalorder %s31, 1
      %p143 = scmp.ne.s32.totalorder %s138, %s140
      %p144 = scmp.eq.s32.totalorder %s31, 0
      %p145 = por %p143, %p144
      %p146 = scmp.ne.s32.totalorder %s138, %s140
      %p147 = scmp.eq.s32.totalorder %s36, 1
      %p148 = por %p146, %p147
      %p149 = scmp.ne.s32.totalorder %s140, %s141
      %p150 = scmp.eq.s32.totalorder %s36, 0
      %p151 = por %p149, %p150
      %p152 = scmp.ne.s32.totalorder %s140, %s141
      %p153 = scmp.eq.s32.totalorder %s37, 1
      %p154 = por %p152, %p153
      %p156 = scmp.ne.s32.totalorder %s141, %s155
      %p157 = scmp.eq.s32.totalorder %s37, 0
      %p158 = por %p156, %p157
      %s160 = sadd.s32 %s159, 1
      %p163 = scmp.eq.s32.totalorder %s31, 1
      %p164 = scmp.ne.s32.totalorder %s159, %s161
      %p165 = scmp.eq.s32.totalorder %s31, 0
      %p166 = por %p164, %p165
      %p167 = scmp.ne.s32.totalorder %s159, %s161
      %p168 = scmp.eq.s32.totalorder %s36, 1
      %p169 = por %p167, %p168
      %p170 = scmp.ne.s32.totalorder %s161, %s162
      %p171 = scmp.eq.s32.totalorder %s36, 0
      %p172 = por %p170, %p171
      %p173 = scmp.ne.s32.totalorder %s161, %s162
      %p174 = scmp.eq.s32.totalorder %s37, 1
      %p175 = por %p173, %p174
      %p177 = scmp.ne.s32.totalorder %s162, %s176
      %p178 = scmp.eq.s32.totalorder %s37, 0
      %p179 = por %p177, %p178
      %s181 = sadd.s32 %s180, 1
      %p184 = scmp.eq.s32.totalorder %s31, 1
      %p185 = scmp.ne.s32.totalorder %s180, %s182
      %p186 = scmp.eq.s32.totalorder %s31, 0
      %p187 = por %p185, %p186
      %p188 = scmp.ne.s32.totalorder %s180, %s182
      %p189 = scmp.eq.s32.totalorder %s36, 1
      %p190 = por %p188, %p189
      %p191 = scmp.ne.s32.totalorder %s182, %s183
      %p192 = scmp.eq.s32.totalorder %s36, 0
      %p193 = por %p191, %p192
      %p194 = scmp.ne.s32.totalorder %s182, %s183
      %p195 = scmp.eq.s32.totalorder %s37, 1
      %p196 = por %p194, %p195
      %p198 = scmp.ne.s32.totalorder %s183, %s197
      %p199 = scmp.eq.s32.totalorder %s37, 0
      %p200 = por %p198, %p199
      %s202 = sadd.s32 %s201, 1
      %p205 = scmp.eq.s32.totalorder %s31, 1
      %p206 = scmp.ne.s32.totalorder %s201, %s203
      %p207 = scmp.eq.s32.totalorder %s31, 0
      %p208 = por %p206, %p207
      %p209 = scmp.ne.s32.totalorder %s201, %s203
      %p210 = scmp.eq.s32.totalorder %s36, 1
      %p211 = por %p209, %p210
      %p212 = scmp.ne.s32.totalorder %s203, %s204
      %p213 = scmp.eq.s32.totalorder %s36, 0
      %p214 = por %p212, %p213
      %p215 = scmp.ne.s32.totalorder %s203, %s204
      %p216 = scmp.eq.s32.totalorder %s37, 1
      %p217 = por %p215, %p216
      %p219 = scmp.ne.s32.totalorder %s204, %s218
      %p220 = scmp.eq.s32.totalorder %s37, 0
      %p221 = por %p219, %p220
      %s223 = sadd.s32 %s222, 1
      %p226 = scmp.eq.s32.totalorder %s31, 1
      %p227 = scmp.ne.s32.totalorder %s222, %s224
      %p228 = scmp.eq.s32.totalorder %s31, 0
      %p229 = por %p227, %p228
      %p230 = scmp.ne.s32.totalorder %s222, %s224
      %p231 = scmp.eq.s32.totalorder %s36, 1
      %p232 = por %p230, %p231
      %p233 = scmp.ne.s32.totalorder %s224, %s225
      %p234 = scmp.eq.s32.totalorder %s36, 0
      %p235 = por %p233, %p234
      %p236 = scmp.ne.s32.totalorder %s224, %s225
      %p237 = scmp.eq.s32.totalorder %s37, 1
      %p238 = por %p236, %p237
      %p240 = scmp.ne.s32.totalorder %s225, %s239
      %p241 = scmp.eq.s32.totalorder %s37, 0
      %p242 = por %p240, %p241
      %s244 = sadd.s32 %s243, 1
      %p247 = scmp.eq.s32.totalorder %s31, 1
      %p248 = scmp.ne.s32.totalorder %s243, %s245
      %p249 = scmp.eq.s32.totalorder %s31, 0
      %p250 = por %p248, %p249
      %p251 = scmp.ne.s32.totalorder %s243, %s245
      %p252 = scmp.eq.s32.totalorder %s36, 1
      %p253 = por %p251, %p252
      %p254 = scmp.ne.s32.totalorder %s245, %s246
      %p255 = scmp.eq.s32.totalorder %s36, 0
      %p256 = por %p254, %p255
      %p257 = scmp.ne.s32.totalorder %s245, %s246
      %p258 = scmp.eq.s32.totalorder %s37, 1
      %p259 = por %p257, %p258
      %p261 = scmp.ne.s32.totalorder %s246, %s260
      %p262 = scmp.eq.s32.totalorder %s37, 0
      %p263 = por %p261, %p262
      %s265 = sadd.s32 %s264, 1
      %p268 = scmp.eq.s32.totalorder %s31, 1
      %p269 = scmp.ne.s32.totalorder %s264, %s266
      %p270 = scmp.eq.s32.totalorder %s31, 0
      %p271 = por %p269, %p270
      %p272 = scmp.ne.s32.totalorder %s264, %s266
      %p273 = scmp.eq.s32.totalorder %s36, 1
      %p274 = por %p272, %p273
      %p275 = scmp.ne.s32.totalorder %s266, %s267
      %p276 = scmp.eq.s32.totalorder %s36, 0
      %p277 = por %p275, %p276
      %p278 = scmp.ne.s32.totalorder %s266, %s267
      %p279 = scmp.eq.s32.totalorder %s37, 1
      %p280 = por %p278, %p279
      %p282 = scmp.ne.s32.totalorder %s267, %s281
      %p283 = scmp.eq.s32.totalorder %s37, 0
      %p284 = por %p282, %p283
      %s286 = sadd.s32 %s285, 1
      %p289 = scmp.eq.s32.totalorder %s31, 1
      %p290 = scmp.ne.s32.totalorder %s285, %s287
      %p291 = scmp.eq.s32.totalorder %s31, 0
      %p292 = por %p290, %p291
      %p293 = scmp.ne.s32.totalorder %s285, %s287
      %p294 = scmp.eq.s32.totalorder %s36, 1
      %p295 = por %p293, %p294
      %p296 = scmp.ne.s32.totalorder %s287, %s288
      %p297 = scmp.eq.s32.totalorder %s36, 0
      %p298 = por %p296, %p297
      %p299 = scmp.ne.s32.totalorder %s287, %s288
      %p300 = scmp.eq.s32.totalorder %s37, 1
      %p301 = por %p299, %p300
      %p303 = scmp.ne.s32.totalorder %s288, %s302
      %p304 = scmp.eq.s32.totalorder %s37, 0
      %p305 = por %p303, %p304
      %s307 = sadd.s32 %s306, 1
      %p310 = scmp.eq.s32.totalorder %s31, 1
      %p311 = scmp.ne.s32.totalorder %s306, %s308
      %p312 = scmp.eq.s32.totalorder %s31, 0
      %p313 = por %p311, %p312
      %p314 = scmp.ne.s32.totalorder %s306, %s308
      %p315 = scmp.eq.s32.totalorder %s36, 1
      %p316 = por %p314, %p315
      %p317 = scmp.ne.s32.totalorder %s308, %s309
      %p318 = scmp.eq.s32.totalorder %s36, 0
      %p319 = por %p317, %p318
      %p320 = scmp.ne.s32.totalorder %s308, %s309
      %p321 = scmp.eq.s32.totalorder %s37, 1
      %p322 = por %p320, %p321
      %p324 = scmp.ne.s32.totalorder %s309, %s323
      %p325 = scmp.eq.s32.totalorder %s37, 0
      %p326 = por %p324, %p325
      %s328 = sadd.s32 %s327, 1
      %p331 = scmp.eq.s32.totalorder %s31, 1
      %p332 = scmp.ne.s32.totalorder %s327, %s329
      %p333 = scmp.eq.s32.totalorder %s31, 0
      %p334 = por %p332, %p333
      %p335 = scmp.ne.s32.totalorder %s327, %s329
      %p336 = scmp.eq.s32.totalorder %s36, 1
      %p337 = por %p335, %p336
      %p338 = scmp.ne.s32.totalorder %s329, %s330
      %p339 = scmp.eq.s32.totalorder %s36, 0
      %p340 = por %p338, %p339
      %p341 = scmp.ne.s32.totalorder %s329, %s330
      %p342 = scmp.eq.s32.totalorder %s37, 1
      %p343 = por %p341, %p342
      %p345 = scmp.ne.s32.totalorder %s330, %s344
      %p346 = scmp.eq.s32.totalorder %s37, 0
      %p347 = por %p345, %p346
      %s349 = sadd.s32 %s348, 1
      %p352 = scmp.eq.s32.totalorder %s31, 1
      %p353 = scmp.ne.s32.totalorder %s348, %s350
      %p354 = scmp.eq.s32.totalorder %s31, 0
      %p355 = por %p353, %p354
      %p356 = scmp.ne.s32.totalorder %s348, %s350
      %p357 = scmp.eq.s32.totalorder %s36, 1
      %p358 = por %p356, %p357
      %p359 = scmp.ne.s32.totalorder %s350, %s351
      %p360 = scmp.eq.s32.totalorder %s36, 0
      %p361 = por %p359, %p360
      %p362 = scmp.ne.s32.totalorder %s350, %s351
      %p363 = scmp.eq.s32.totalorder %s37, 1
      %p364 = por %p362, %p363
      %p366 = scmp.ne.s32.totalorder %s351, %s365
      %p367 = scmp.eq.s32.totalorder %s37, 0
      %p368 = por %p366, %p367
      %s370 = sadd.s32 %s369, 1
      %p373 = scmp.eq.s32.totalorder %s31, 1
      %p374 = scmp.ne.s32.totalorder %s369, %s371
      %p375 = scmp.eq.s32.totalorder %s31, 0
      %p376 = por %p374, %p375
      %p377 = scmp.ne.s32.totalorder %s369, %s371
      %p378 = scmp.eq.s32.totalorder %s36, 1
      %p379 = por %p377, %p378
      %p380 = scmp.ne.s32.totalorder %s371, %s372
      %p381 = scmp.eq.s32.totalorder %s36, 0
      %p382 = por %p380, %p381
      %p383 = scmp.ne.s32.totalorder %s371, %s372
      %p384 = scmp.eq.s32.totalorder %s37, 1
      %p385 = por %p383, %p384
      %p387 = scmp.ne.s32.totalorder %s372, %s386
      %p388 = scmp.eq.s32.totalorder %s37, 0
      %p389 = por %p387, %p388
      %s391 = sadd.s32 %s390, 1
      %p394 = scmp.eq.s32.totalorder %s31, 1
      %p395 = scmp.ne.s32.totalorder %s390, %s392
      %p396 = scmp.eq.s32.totalorder %s31, 0
      %p397 = por %p395, %p396
      %p398 = scmp.ne.s32.totalorder %s390, %s392
      %p399 = scmp.eq.s32.totalorder %s36, 1
      %p400 = por %p398, %p399
      %p401 = scmp.ne.s32.totalorder %s392, %s393
      %p402 = scmp.eq.s32.totalorder %s36, 0
      %p403 = por %p401, %p402
      %p404 = scmp.ne.s32.totalorder %s392, %s393
      %p405 = scmp.eq.s32.totalorder %s37, 1
      %p406 = por %p404, %p405
      %p408 = scmp.ne.s32.totalorder %s393, %s407
      %p409 = scmp.eq.s32.totalorder %s37, 0
      %p410 = por %p408, %p409
      %s412 = sadd.s32 %s411, 1
      %p415 = scmp.eq.s32.totalorder %s31, 1
      %p416 = scmp.ne.s32.totalorder %s411, %s413
      %p417 = scmp.eq.s32.totalorder %s31, 0
      %p418 = por %p416, %p417
      %p419 = scmp.ne.s32.totalorder %s411, %s413
      %p420 = scmp.eq.s32.totalorder %s36, 1
      %p421 = por %p419, %p420
      %p422 = scmp.ne.s32.totalorder %s413, %s414
      %p423 = scmp.eq.s32.totalorder %s36, 0
      %p424 = por %p422, %p423
      %p425 = scmp.ne.s32.totalorder %s413, %s414
      %p426 = scmp.eq.s32.totalorder %s37, 1
      %p427 = por %p425, %p426
      %p429 = scmp.ne.s32.totalorder %s414, %s428
      %p430 = scmp.eq.s32.totalorder %s37, 0
      %p431 = por %p429, %p430
      %s433 = sadd.s32 %s432, 1
      %p436 = scmp.eq.s32.totalorder %s31, 1
      %p437 = scmp.ne.s32.totalorder %s432, %s434
      %p438 = scmp.eq.s32.totalorder %s31, 0
      %p439 = por %p437, %p438
      %p440 = scmp.ne.s32.totalorder %s432, %s434
      %p441 = scmp.eq.s32.totalorder %s36, 1
      %p442 = por %p440, %p441
      %p443 = scmp.ne.s32.totalorder %s434, %s435
      %p444 = scmp.eq.s32.totalorder %s36, 0
      %p445 = por %p443, %p444
      %p446 = scmp.ne.s32.totalorder %s434, %s435
      %p447 = scmp.eq.s32.totalorder %s37, 1
      %p448 = por %p446, %p447
      %p450 = scmp.ne.s32.totalorder %s435, %s449
      %p451 = scmp.eq.s32.totalorder %s37, 0
      %p452 = por %p450, %p451
      %s454 = sadd.s32 %s453, 1
      %p457 = scmp.eq.s32.totalorder %s31, 1
      %p458 = scmp.ne.s32.totalorder %s453, %s455
      %p459 = scmp.eq.s32.totalorder %s31, 0
      %p460 = por %p458, %p459
      %p461 = scmp.ne.s32.totalorder %s453, %s455
      %p462 = scmp.eq.s32.totalorder %s36, 1
      %p463 = por %p461, %p462
      %p464 = scmp.ne.s32.totalorder %s455, %s456
      %p465 = scmp.eq.s32.totalorder %s36, 0
      %p466 = por %p464, %p465
      %p467 = scmp.ne.s32.totalorder %s455, %s456
      %p468 = scmp.eq.s32.totalorder %s37, 1
      %p469 = por %p467, %p468
      %p471 = scmp.ne.s32.totalorder %s456, %s470
      %p472 = scmp.eq.s32.totalorder %s37, 0
      %p473 = por %p471, %p472
      %s475 = sadd.s32 %s474, 1
      %p478 = scmp.eq.s32.totalorder %s31, 1
      %p479 = scmp.ne.s32.totalorder %s474, %s476
      %p480 = scmp.eq.s32.totalorder %s31, 0
      %p481 = por %p479, %p480
      %p482 = scmp.ne.s32.totalorder %s474, %s476
      %p483 = scmp.eq.s32.totalorder %s36, 1
      %p484 = por %p482, %p483
      %p485 = scmp.ne.s32.totalorder %s476, %s477
      %p486 = scmp.eq.s32.totalorder %s36, 0
      %p487 = por %p485, %p486
      %p488 = scmp.ne.s32.totalorder %s476, %s477
      %p489 = scmp.eq.s32.totalorder %s37, 1
      %p490 = por %p488, %p489
      %p492 = scmp.ne.s32.totalorder %s477, %s491
      %p493 = scmp.eq.s32.totalorder %s37, 0
      %p494 = por %p492, %p493
      %s496 = sadd.s32 %s495, 1
      %p499 = scmp.eq.s32.totalorder %s31, 1
      %p500 = scmp.ne.s32.totalorder %s495, %s497
      %p501 = scmp.eq.s32.totalorder %s31, 0
      %p502 = por %p500, %p501
      %p503 = scmp.ne.s32.totalorder %s495, %s497
      %p504 = scmp.eq.s32.totalorder %s36, 1
      %p505 = por %p503, %p504
      %p506 = scmp.ne.s32.totalorder %s497, %s498
      %p507 = scmp.eq.s32.totalorder %s36, 0
      %p508 = por %p506, %p507
      %p509 = scmp.ne.s32.totalorder %s497, %s498
      %p510 = scmp.eq.s32.totalorder %s37, 1
      %p511 = por %p509, %p510
      %p513 = scmp.ne.s32.totalorder %s498, %s512
      %p514 = scmp.eq.s32.totalorder %s37, 0
      %p515 = por %p513, %p514
      %s516 = ssub.s32 %s31, %s38
      %p517 = scmp.eq.s32.totalorder %s516, 0
      %s519 = sadd.s32 %s518, 1
      %s520 = scalar_select %p517, %s518, %s519
      %p523 = pneg %p517
      %p524 = scmp.eq.s32.totalorder %s31, 1
      %p525 = por %p523, %p524
      %p526 = scmp.ne.s32.totalorder %s518, %s521
      %p527 = scmp.eq.s32.totalorder %s31, 0
      %p528 = por %p526, %p527
      %p529 = scmp.ne.s32.totalorder %s518, %s521
      %p530 = scmp.eq.s32.totalorder %s36, 1
      %p531 = por %p529, %p530
      %p532 = scmp.ne.s32.totalorder %s521, %s522
      %p533 = scmp.eq.s32.totalorder %s36, 0
      %p534 = por %p532, %p533
      %p535 = scmp.ne.s32.totalorder %s521, %s522
      %p536 = scmp.eq.s32.totalorder %s37, 1
      %p537 = por %p535, %p536
      %p539 = scmp.ne.s32.totalorder %s522, %s538
      %p540 = scmp.eq.s32.totalorder %s37, 0
      %p541 = por %p539, %p540
      %p542 = scmp.le.s32.totalorder 1, %s31
      %p543 = scmp.lt.s32.totalorder %s31, 3
      %p544 = pnand %p542, %p543
      %p545 = pneg %p544
      // Predicated region
      $region9: #{conformer_layer_forward.1} parent=5 // pred_check
        _
      $region10: #{conformer_layer_forward.1} parent=5 // pred_check_branch
        %547 = sbr.rel (%p544) target = $region12
      $region11: #{conformer_layer_forward.1} parent=5 // pred_region
        %s548 = ssub.s32 %s31, 1
        // Predicated region
        $region13: #{conformer_layer_forward.1} parent=11 // pred_check
          %p549 = pneg %p130
        $region14: #{conformer_layer_forward.1} parent=11 // pred_check_branch
          %551 = sbr.rel (%p549) target = $region16
        $region15: #{conformer_layer_forward.1} parent=11 // pred_region
          _
        $region16: #{conformer_layer_forward.1} parent=11 // pred_fallthru
          _
        // Predicated region
        $region17: #{conformer_layer_forward.1} parent=11 // pred_check
          %p552 = pneg %p151
        $region18: #{conformer_layer_forward.1} parent=11 // pred_check_branch
          %554 = sbr.rel (%p552) target = $region20
        $region19: #{conformer_layer_forward.1} parent=11 // pred_region
          _
        $region20: #{conformer_layer_forward.1} parent=11 // pred_fallthru
          _
        // Predicated region
        $region21: #{conformer_layer_forward.1} parent=11 // pred_check
          %p555 = pneg %p172
        $region22: #{conformer_layer_forward.1} parent=11 // pred_check_branch
          %557 = sbr.rel (%p555) target = $region24
        $region23: #{conformer_layer_forward.1} parent=11 // pred_region
          _
        $region24: #{conformer_layer_forward.1} parent=11 // pred_fallthru
          _
        // Predicated region
        $region25: #{conformer_layer_forward.1} parent=11 // pred_check
          %p558 = pneg %p193
        $region26: #{conformer_layer_forward.1} parent=11 // pred_check_branch
          %560 = sbr.rel (%p558) target = $region28
        $region27: #{conformer_layer_forward.1} parent=11 // pred_region
          _
        $region28: #{conformer_layer_forward.1} parent=11 // pred_fallthru
          _
        // Predicated region
        $region29: #{conformer_layer_forward.1} parent=11 // pred_check
          %p561 = pneg %p214
        $region30: #{conformer_layer_forward.1} parent=11 // pred_check_branch
          %563 = sbr.rel (%p561) target = $region32
        $region31: #{conformer_layer_forward.1} parent=11 // pred_region
          _
        $region32: #{conformer_layer_forward.1} parent=11 // pred_fallthru
          _
        // Predicated region
        $region33: #{conformer_layer_forward.1} parent=11 // pred_check
          %p564 = pneg %p235
        $region34: #{conformer_layer_forward.1} parent=11 // pred_check_branch
          %566 = sbr.rel (%p564) target = $region36
        $region35: #{conformer_layer_forward.1} parent=11 // pred_region
          _
        $region36: #{conformer_layer_forward.1} parent=11 // pred_fallthru
          _
        // Predicated region
        $region37: #{conformer_layer_forward.1} parent=11 // pred_check
          %p567 = pneg %p256
        $region38: #{conformer_layer_forward.1} parent=11 // pred_check_branch
          %569 = sbr.rel (%p567) target = $region40
        $region39: #{conformer_layer_forward.1} parent=11 // pred_region
          _
        $region40: #{conformer_layer_forward.1} parent=11 // pred_fallthru
          _
        // Predicated region
        $region41: #{conformer_layer_forward.1} parent=11 // pred_check
          %p570 = pneg %p277
        $region42: #{conformer_layer_forward.1} parent=11 // pred_check_branch
          %572 = sbr.rel (%p570) target = $region44
        $region43: #{conformer_layer_forward.1} parent=11 // pred_region
          _
        $region44: #{conformer_layer_forward.1} parent=11 // pred_fallthru
          _
        // Predicated region
        $region45: #{conformer_layer_forward.1} parent=11 // pred_check
          %p573 = pneg %p298
        $region46: #{conformer_layer_forward.1} parent=11 // pred_check_branch
          %575 = sbr.rel (%p573) target = $region48
        $region47: #{conformer_layer_forward.1} parent=11 // pred_region
          _
        $region48: #{conformer_layer_forward.1} parent=11 // pred_fallthru
          _
        // Predicated region
        $region49: #{conformer_layer_forward.1} parent=11 // pred_check
          %p576 = pneg %p319
        $region50: #{conformer_layer_forward.1} parent=11 // pred_check_branch
          %578 = sbr.rel (%p576) target = $region52
        $region51: #{conformer_layer_forward.1} parent=11 // pred_region
          _
        $region52: #{conformer_layer_forward.1} parent=11 // pred_fallthru
          _
        // Predicated region
        $region53: #{conformer_layer_forward.1} parent=11 // pred_check
          %p579 = pneg %p340
        $region54: #{conformer_layer_forward.1} parent=11 // pred_check_branch
          %581 = sbr.rel (%p579) target = $region56
        $region55: #{conformer_layer_forward.1} parent=11 // pred_region
          _
        $region56: #{conformer_layer_forward.1} parent=11 // pred_fallthru
          _
        // Predicated region
        $region57: #{conformer_layer_forward.1} parent=11 // pred_check
          %p582 = pneg %p361
        $region58: #{conformer_layer_forward.1} parent=11 // pred_check_branch
          %584 = sbr.rel (%p582) target = $region60
        $region59: #{conformer_layer_forward.1} parent=11 // pred_region
          _
        $region60: #{conformer_layer_forward.1} parent=11 // pred_fallthru
          _
        // Predicated region
        $region61: #{conformer_layer_forward.1} parent=11 // pred_check
          %p585 = pneg %p382
        $region62: #{conformer_layer_forward.1} parent=11 // pred_check_branch
          %587 = sbr.rel (%p585) target = $region64
        $region63: #{conformer_layer_forward.1} parent=11 // pred_region
          _
        $region64: #{conformer_layer_forward.1} parent=11 // pred_fallthru
          _
        // Predicated region
        $region65: #{conformer_layer_forward.1} parent=11 // pred_check
          %p588 = pneg %p403
        $region66: #{conformer_layer_forward.1} parent=11 // pred_check_branch
          %590 = sbr.rel (%p588) target = $region68
        $region67: #{conformer_layer_forward.1} parent=11 // pred_region
          _
        $region68: #{conformer_layer_forward.1} parent=11 // pred_fallthru
          _
        // Predicated region
        $region69: #{conformer_layer_forward.1} parent=11 // pred_check
          %p591 = pneg %p424
        $region70: #{conformer_layer_forward.1} parent=11 // pred_check_branch
          %593 = sbr.rel (%p591) target = $region72
        $region71: #{conformer_layer_forward.1} parent=11 // pred_region
          _
        $region72: #{conformer_layer_forward.1} parent=11 // pred_fallthru
          _
        // Predicated region
        $region73: #{conformer_layer_forward.1} parent=11 // pred_check
          %p594 = pneg %p445
        $region74: #{conformer_layer_forward.1} parent=11 // pred_check_branch
          %596 = sbr.rel (%p594) target = $region76
        $region75: #{conformer_layer_forward.1} parent=11 // pred_region
          _
        $region76: #{conformer_layer_forward.1} parent=11 // pred_fallthru
          _
        // Predicated region
        $region77: #{conformer_layer_forward.1} parent=11 // pred_check
          %p597 = pneg %p466
        $region78: #{conformer_layer_forward.1} parent=11 // pred_check_branch
          %599 = sbr.rel (%p597) target = $region80
        $region79: #{conformer_layer_forward.1} parent=11 // pred_region
          _
        $region80: #{conformer_layer_forward.1} parent=11 // pred_fallthru
          _
        // Predicated region
        $region81: #{conformer_layer_forward.1} parent=11 // pred_check
          %p600 = pneg %p487
        $region82: #{conformer_layer_forward.1} parent=11 // pred_check_branch
          %602 = sbr.rel (%p600) target = $region84
        $region83: #{conformer_layer_forward.1} parent=11 // pred_region
          _
        $region84: #{conformer_layer_forward.1} parent=11 // pred_fallthru
          _
        // Predicated region
        $region85: #{conformer_layer_forward.1} parent=11 // pred_check
          %p603 = pneg %p508
        $region86: #{conformer_layer_forward.1} parent=11 // pred_check_branch
          %605 = sbr.rel (%p603) target = $region88
        $region87: #{conformer_layer_forward.1} parent=11 // pred_region
          _
        $region88: #{conformer_layer_forward.1} parent=11 // pred_fallthru
          _
      $region12: #{conformer_layer_forward.1} parent=5 // pred_fallthru
        _
      %p606 = scmp.lt.s32.totalorder %s31, 2
      // Predicated region
      $region89: #{conformer_layer_forward.1} parent=5 // pred_check
        %p607 = pneg %p606
      $region90: #{conformer_layer_forward.1} parent=5 // pred_check_branch
        %609 = sbr.rel (%p607) target = $region92
      $region91: #{conformer_layer_forward.1} parent=5 // pred_region
        // Predicated region
        $region93: #{conformer_layer_forward.1} parent=91 // pred_check
          %p610 = pneg %p51
        $region94: #{conformer_layer_forward.1} parent=91 // pred_check_branch
          %612 = sbr.rel (%p610) target = $region96
        $region95: #{conformer_layer_forward.1} parent=91 // pred_region
          %p613 = scmp.lt.s32.totalorder %s31, 1
          %s614 = scalar_select %p613, %s31, 1
          %s615 = smul.addr %s614, 8
          %s616 = scalar_lea.vmem %s0, %s615
        $region96: #{conformer_layer_forward.1} parent=91 // pred_fallthru
          _
        // Predicated region
        $region97: #{conformer_layer_forward.1} parent=91 // pred_check
          %p617 = pneg %p77
        $region98: #{conformer_layer_forward.1} parent=91 // pred_check_branch
          %619 = sbr.rel (%p617) target = $region100
        $region99: #{conformer_layer_forward.1} parent=91 // pred_region
          %p620 = scmp.lt.s32.totalorder %s31, 1
          %s621 = scalar_select %p620, %s31, 1
          %s622 = smul.addr %s621, 8
          %s623 = scalar_lea.vmem %s1, %s622
        $region100: #{conformer_layer_forward.1} parent=91 // pred_fallthru
          _
        // Predicated region
        $region101: #{conformer_layer_forward.1} parent=91 // pred_check
          %p624 = pneg %p103
        $region102: #{conformer_layer_forward.1} parent=91 // pred_check_branch
          %626 = sbr.rel (%p624) target = $region104
        $region103: #{conformer_layer_forward.1} parent=91 // pred_region
          %p627 = scmp.lt.s32.totalorder %s31, 1
          %s628 = scalar_select %p627, %s31, 1
          %s629 = smul.addr %s628, 8
          %s630 = scalar_lea.vmem %s2, %s629
        $region104: #{conformer_layer_forward.1} parent=91 // pred_fallthru
          _
      $region92: #{conformer_layer_forward.1} parent=5 // pred_fallthru
        _
      %p631 = scmp.le.s32.totalorder 1, %s31
      %p632 = scmp.lt.s32.totalorder %s31, 3
      %p633 = pnand %p631, %p632
      %p634 = pneg %p633
      // Predicated region
      $region105: #{conformer_layer_forward.1} parent=5 // pred_check
        _
      $region106: #{conformer_layer_forward.1} parent=5 // pred_check_branch
        %636 = sbr.rel (%p633) target = $region108
      $region107: #{conformer_layer_forward.1} parent=5 // pred_region
        %s637 = ssub.s32 %s31, 1
        %p638 = scmp.lt.s32.totalorder %s36, 1
        %s639 = scalar_select %p638, %s36, 1
        %s640 = smul.addr %s639, 8
        %s641 = scalar_lea.vmem %s0, %s640
        %p642 = pneg %p57
        %p643 = pneg %p54
        %p644 = scmp.lt.s32.totalorder %s36, 1
        %s645 = scalar_select %p644, %s36, 1
        %s646 = smul.addr %s645, 8
        %s647 = scalar_lea.vmem %s1, %s646
        %p648 = pneg %p83
        %p649 = pneg %p80
        %p650 = scmp.lt.s32.totalorder %s36, 1
        %s651 = scalar_select %p650, %s36, 1
        %s652 = smul.addr %s651, 8
        %s653 = scalar_lea.vmem %s2, %s652
        %p654 = pneg %p109
        %p655 = pneg %p106
        %p656 = pneg %p130
        %p657 = pneg %p127
        %p658 = pneg %p151
        %p659 = pneg %p148
        %p660 = pneg %p172
        %p661 = pneg %p169
        %p662 = pneg %p193
        %p663 = pneg %p190
        %p664 = pneg %p214
        %p665 = pneg %p211
        %p666 = pneg %p235
        %p667 = pneg %p232
        %p668 = pneg %p256
        %p669 = pneg %p253
        %p670 = pneg %p277
        %p671 = pneg %p274
        %p672 = pneg %p298
        %p673 = pneg %p295
        %p674 = pneg %p319
        %p675 = pneg %p316
        %p676 = pneg %p340
        %p677 = pneg %p337
        %p678 = pneg %p361
        %p679 = pneg %p358
        %p680 = pneg %p382
        %p681 = pneg %p379
        %p682 = pneg %p403
        %p683 = pneg %p400
        %p684 = pneg %p424
        %p685 = pneg %p421
        %p686 = pneg %p445
        %p687 = pneg %p442
        %p688 = pneg %p466
        %p689 = pneg %p463
        %p690 = pneg %p487
        %p691 = pneg %p484
        %p692 = pneg %p508
        %p693 = pneg %p505
        %p694 = pneg %p534
        %p695 = pneg %p531
        %s696 = sand.u32 %s521, 1
        %s697 = scalar_lea.sflag [#allocation3], %s696
        %s698 = sand.u32 %s521, 1
        %s699 = smul.addr %s698, 8
        %s700 = scalar_lea.vmem [#allocation2], %s699
        %p701 = scmp.lt.s32.totalorder %s36, 1
        %s702 = scalar_select %p701, %s36, 1
        %s703 = smul.addr %s702, 8
        %s704 = scalar_lea.vmem %s0, %s703
        %p705 = scmp.lt.s32.totalorder %s36, 1
        %s706 = scalar_select %p705, %s36, 1
        %s707 = smul.addr %s706, 8
        %s708 = scalar_lea.vmem %s1, %s707
        %p709 = scmp.lt.s32.totalorder %s36, 1
        %s710 = scalar_select %p709, %s36, 1
        %s711 = smul.addr %s710, 8
        %s712 = scalar_lea.vmem %s2, %s711
        %v713 = vld [vmem:[%s704] sm:$0xff]
        %v714 = vld [vmem:[%s708] sm:$0xff]
        %vm715 = vcmp.gt.f32.partialorder %v714, 0.0
        %v716 = vld [vmem:[%s712] sm:$0xff]
        %v717 = vld [vmem:[%s3] sm:$0xff]
        %v718 = vld [vmem:[%s4] sm:$0x1]
        %v719 = vld [vmem:[%s5] sm:$0x1]
        %vm720 = vcmask 261120
        %v721 = vsel %vm720, %v713, 0.0
        %722 = vadd.xlane.f32.xlu0 %v721
        %v723 = vpop.xlane.xlu0 %722
        %v724 = vrcp.pop 32.0
        %v725 = vmul.f32 32.0, %v724
        %v726 = vsub.f32 1.0, %v725
        %v727 = vmul.f32 %v724, %v726
        %v728 = vadd.f32 %v724, %v727
        %vm729 = vweird.f32 %v724
        %v730 = vsel %vm729, %v724, %v728
        %v731 = vmul.f32 %v723, %v730
        %v732 = vsub.f32 %v713, %v731
        %v733 = vmul.f32 %v732, %v732
        %v734 = vsel %vm720, %v733, 0.0
        %735 = vadd.xlane.f32.xlu0 %v734
        %v736 = vpop.xlane.xlu0 %735
        %v737 = vmul.f32 %v736, %v730
        %v738 = vadd.f32 %v737, 1e-05
        %v739 = vrsqrt.pop %v738
        %v740 = vmul.f32 %v739, %v738
        %v741 = vmul.f32 %v740, %v739
        %v742 = vmul.f32 0.5, %v741
        %v743 = vsub.f32 1.5, %v742
        %v744 = vmul.f32 %v739, %v743
        %vm745 = vweird.f32 %v738
        %vm746 = vweird.f32 %v739
        %vm747 = vmor %vm745, %vm746
        %v748 = vsel %vm747, %v739, %v744
        %v749 = vmul.f32 %v732, %v748
        %v750 = vperm.slane %v718, 0
        %v751 = vmul.f32 %v749, %v750
        %v752 = vperm.slane %v719, 0
        %v753 = vadd.f32 %v751, %v752
        %v754 = vld [vmem:[%s6] sm:$0xff]
        %v755 = vld [vmem:[%s6 + $0x8] sm:$0xff]
        %v756 = vld [vmem:[%s6 + $0x10] sm:$0xff]
        %v757 = vld [vmem:[%s6 + $0x18] sm:$0xff]
        %v758 = vld [vmem:[%s7] sm:$0x1]
        %v759 = vperm.slane %v758, 0
        %v761 = vsel %vm720, %v753, 0
        %763 = vmatpush.msra.mxu0 0.0
        %764 = vmatpush.msra.mxu0 0.0
        %765 = vmatpush.msra.mxu0 0.0
        %766 = vmatpush.msra.mxu0 0.0
        %767 = vmatpush.msra.mxu0 0.0
        %768 = vmatpush.msra.mxu0 0.0
        %769 = vmatpush.msra.mxu0 0.0
        %770 = vmatpush.msra.mxu0 0.0
        %771 = vmatpush.msra.mxu0 0.0
        %772 = vmatpush.msra.mxu0 0.0
        %773 = vmatpush.msra.mxu0 0.0
        %774 = vmatpush.msra.mxu0 0.0
        %775 = vmatpush.msra.mxu0 %v757
        %776 = vmatpush.msra.mxu0 %v756
        %777 = vmatpush.msra.mxu0 %v755
        %778 = vmatpush.msra.mxu0 %v754
        %779 = vmatmul.f32.gmra.mxu0 %v761
        %v780 = vpop.f32.mrf.mxu0
        %v781 = vadd.f32 %v759, %v780
        %782 = vdwg.mxu0
        %v783 = vxor.u32 %v781, 2147483648
        %v784 = vmul.f32 %v783, 1.442695
        %v785 = vpow.pop %v784
        %v786 = vadd.f32 %v785, 1.0
        %v787 = vrcp.pop %v786
        %v788 = vmul.f32 %v786, %v787
        %v789 = vsub.f32 1.0, %v788
        %v790 = vmul.f32 %v787, %v789
        %v791 = vadd.f32 %v787, %v790
        %vm792 = vweird.f32 %v786
        %vm793 = vweird.f32 %v787
        %vm794 = vmor %vm792, %vm793
        %v795 = vsel %vm794, %v787, %v791
        %v796 = vand.u32 2147483647, %v786
        %vm797 = vcmp.eq.f32.partialorder %v796, 8.507059e+37
        %v798 = vand.u32 %v786, 2147483648
        %v799 = vor.u32 1.1754944e-38, %v798
        %v800 = vsel %vm797, %v799, %v795
        %v801 = vmul.f32 1.0, %v800
        %v802 = vmul.f32 %v781, %v801
        %v803 = vld [vmem:[%s8] sm:$0xff]
        %v804 = vld [vmem:[%s8 + $0x8] sm:$0xff]
        %v805 = vld [vmem:[%s8 + $0x10] sm:$0xff]
        %v806 = vld [vmem:[%s8 + $0x18] sm:$0xff]
        %v807 = vld [vmem:[%s8 + $0x20] sm:$0xff]
        %v808 = vld [vmem:[%s8 + $0x28] sm:$0xff]
        %v809 = vld [vmem:[%s8 + $0x30] sm:$0xff]
        %v810 = vld [vmem:[%s8 + $0x38] sm:$0xff]
        %v811 = vld [vmem:[%s9] sm:$0x1]
        %v812 = vperm.slane %v811, 0
        %vm813 = vcmask 523264
        %v815 = vsel %vm813, %v802, 0
        %817 = vmatpush.msra.mxu0 0.0
        %818 = vmatpush.msra.mxu0 0.0
        %819 = vmatpush.msra.mxu0 0.0
        %820 = vmatpush.msra.mxu0 0.0
        %821 = vmatpush.msra.mxu0 0.0
        %822 = vmatpush.msra.mxu0 0.0
        %823 = vmatpush.msra.mxu0 0.0
        %824 = vmatpush.msra.mxu0 0.0
        %825 = vmatpush.msra.mxu0 %v810
        %826 = vmatpush.msra.mxu0 %v809
        %827 = vmatpush.msra.mxu0 %v808
        %828 = vmatpush.msra.mxu0 %v807
        %829 = vmatpush.msra.mxu0 %v806
        %830 = vmatpush.msra.mxu0 %v805
        %831 = vmatpush.msra.mxu0 %v804
        %832 = vmatpush.msra.mxu0 %v803
        %833 = vmatmul.f32.gmra.mxu0 %v815
        %v834 = vpop.f32.mrf.mxu0
        %v835 = vadd.f32 %v812, %v834
        %836 = vdwg.mxu0
        %v837 = vmul.f32 %v835, 0.5
        %v838 = vadd.f32 %v713, %v837
        %v839 = vld [vmem:[%s4 + $0x1] sm:$0x1]
        %v840 = vld [vmem:[%s5 + $0x1] sm:$0x1]
        %v841 = vsel %vm720, %v838, 0.0
        %842 = vadd.xlane.f32.xlu0 %v841
        %v843 = vpop.xlane.xlu0 %842
        %v844 = vmul.f32 %v843, %v730
        %v845 = vsub.f32 %v838, %v844
        %v846 = vmul.f32 %v845, %v845
        %v847 = vsel %vm720, %v846, 0.0
        %848 = vadd.xlane.f32.xlu0 %v847
        %v849 = vpop.xlane.xlu0 %848
        %v850 = vmul.f32 %v849, %v730
        %v851 = vadd.f32 %v850, 1e-05
        %v852 = vrsqrt.pop %v851
        %v853 = vmul.f32 %v852, %v851
        %v854 = vmul.f32 %v853, %v852
        %v855 = vmul.f32 0.5, %v854
        %v856 = vsub.f32 1.5, %v855
        %v857 = vmul.f32 %v852, %v856
        %vm858 = vweird.f32 %v851
        %vm859 = vweird.f32 %v852
        %vm860 = vmor %vm858, %vm859
        %v861 = vsel %vm860, %v852, %v857
        %v862 = vmul.f32 %v845, %v861
        %v863 = vperm.slane %v839, 0
        %v864 = vmul.f32 %v862, %v863
        %v865 = vperm.slane %v840, 0
        %v866 = vadd.f32 %v864, %v865
        %v867 = vld [vmem:[%s10] sm:$0xff]
        %v868 = vld [vmem:[%s10 + $0x8] sm:$0xff]
        %v869 = vld [vmem:[%s10 + $0x10] sm:$0xff]
        %v870 = vld [vmem:[%s10 + $0x18] sm:$0xff]
        %v871 = vld [vmem:[%s11] sm:$0x1]
        %v873 = vperm.slane %v871, 0
        %v876 = vsel %vm720, %v866, 0
        %v879 = vsel %vm720, %v717, 0
        %881 = vmatpush.msra.mxu0 0.0
        %882 = vmatpush.msra.mxu0 0.0
        %883 = vmatpush.msra.mxu0 0.0
        %884 = vmatpush.msra.mxu0 0.0
        %885 = vmatpush.msra.mxu0 0.0
        %886 = vmatpush.msra.mxu0 0.0
        %887 = vmatpush.msra.mxu0 0.0
        %888 = vmatpush.msra.mxu0 0.0
        %889 = vmatpush.msra.mxu0 0.0
        %890 = vmatpush.msra.mxu0 0.0
        %891 = vmatpush.msra.mxu0 0.0
        %892 = vmatpush.msra.mxu0 0.0
        %893 = vmatpush.msra.mxu0 %v870
        %894 = vmatpush.msra.mxu0 %v869
        %895 = vmatpush.msra.mxu0 %v868
        %896 = vmatpush.msra.mxu0 %v867
        %897 = vmatmul.f32.gmra.mxu0 %v876
        %v898 = vpop.f32.mrf.mxu0
        %v899 = vadd.f32 %v873, %v898
        %900 = vmatmul.f32.gmra.mxu0 %v879
        %v901 = vpop.f32.mrf.mxu0
        %v902 = vadd.f32 %v873, %v901
        %903 = vdwg.mxu0
        %v904 = vld [vmem:[%s12] sm:$0xf]
        %v905 = vld [vmem:[%s13] sm:$0xf]
        %v906 = vld [vmem:[%s14] sm:$0xff]
        %v907 = vld [vmem:[%s14 + $0x8] sm:$0xff]
        %v908 = vld [vmem:[%s14 + $0x10] sm:$0xff]
        %v909 = vld [vmem:[%s14 + $0x18] sm:$0xff]
        %v910 = vperm.slane %v904, 0
        %v911 = vadd.f32 %v899, %v910
        %v912 = vmul.f32 %v911, 0.35355338
        %v913 = vperm.slane %v905, 0
        %v914 = vadd.f32 %v899, %v913
        %v915 = vmul.f32 %v914, 0.35355338
        %917 = vrot.lane.b32.xlu0 %v902, 32
        %v918 = vpop.permute.xlu0 %917
        %vm919 = vcmask 64512
        %v921 = vsel %vm919, %v915, 0
        %v923 = vsel %vm919, %v918, 0
        %925 = vmatpush.xpose.msra.mxu0 0.0
        %926 = vmatpush.xpose.msra.mxu0 0.0
        %927 = vmatpush.xpose.msra.mxu0 0.0
        %928 = vmatpush.xpose.msra.mxu0 0.0
        %929 = vmatpush.xpose.msra.mxu0 0.0
        %930 = vmatpush.xpose.msra.mxu0 0.0
        %931 = vmatpush.xpose.msra.mxu0 0.0
        %932 = vmatpush.xpose.msra.mxu0 0.0
        %933 = vmatpush.xpose.msra.mxu0 0.0
        %934 = vmatpush.xpose.msra.mxu0 0.0
        %935 = vmatpush.xpose.msra.mxu0 0.0
        %936 = vmatpush.xpose.msra.mxu0 0.0
        %937 = vmatpush.xpose.msra.mxu0 0.0
        %938 = vmatpush.xpose.msra.mxu0 0.0
        %939 = vmatpush.xpose.msra.mxu0 0.0
        %940 = vmatpush.xpose.msra.mxu0 %v923
        %941 = vmatmul.f32.gmra.mxu0 %v921
        %v942 = vpop.f32.mrf.mxu0
        %v943 = vadd.f32 0.0, %v942
        %944 = vdwg.mxu0
        %946 = vrot.lane.b32.xlu0 %v899, 96
        %v947 = vpop.permute.xlu0 %946
        %v949 = vsel %vm919, %v912, 0
        %v951 = vsel %vm919, %v947, 0
        %953 = vmatpush.xpose.msra.mxu0 0.0
        %954 = vmatpush.xpose.msra.mxu0 0.0
        %955 = vmatpush.xpose.msra.mxu0 0.0
        %956 = vmatpush.xpose.msra.mxu0 0.0
        %957 = vmatpush.xpose.msra.mxu0 0.0
        %958 = vmatpush.xpose.msra.mxu0 0.0
        %959 = vmatpush.xpose.msra.mxu0 0.0
        %960 = vmatpush.xpose.msra.mxu0 0.0
        %961 = vmatpush.xpose.msra.mxu0 0.0
        %962 = vmatpush.xpose.msra.mxu0 0.0
        %963 = vmatpush.xpose.msra.mxu0 0.0
        %964 = vmatpush.xpose.msra.mxu0 0.0
        %965 = vmatpush.xpose.msra.mxu0 0.0
        %966 = vmatpush.xpose.msra.mxu0 0.0
        %967 = vmatpush.xpose.msra.mxu0 0.0
        %968 = vmatpush.xpose.msra.mxu0 %v951
        %969 = vmatmul.f32.gmra.mxu0 %v949
        %v970 = vpop.f32.mrf.mxu0
        %v971 = vadd.f32 %v943, %v970
        %972 = vdwg.mxu0
        %v973 = vsel %vm715, %v971, -3.4028235e+38
        %v974 = vsel %vm919, %v973, -inf
        %975 = vmax.xlane.f32.xlu0 %v974
        %v976 = vpop.xlane.xlu0 %975
        %v977 = vsub.f32 %v973, %v976
        %v978 = vmul.f32 %v977, 1.442695
        %v979 = vpow.pop %v978
        %v980 = vsel %vm919, %v979, 0.0
        %981 = vadd.xlane.f32.xlu0 %v980
        %v982 = vpop.xlane.xlu0 %981
        %v983 = vrcp.pop %v982
        %v984 = vmul.f32 %v979, %v983
        %v985 = vsel %vm715, %v984, 0.0
        %986 = vrot.lane.b32.xlu0 %v899, 64
        %v987 = vpop.permute.xlu0 %986
        %v990 = vsel %vm919, %v985, 0
        %992 = vmatpush.msra.mxu0 0.0
        %993 = vmatpush.msra.mxu0 0.0
        %994 = vmatpush.msra.mxu0 0.0
        %995 = vmatpush.msra.mxu0 0.0
        %996 = vmatpush.msra.mxu0 0.0
        %997 = vmatpush.msra.mxu0 0.0
        %998 = vmatpush.msra.mxu0 0.0
        %999 = vmatpush.msra.mxu0 0.0
        %1000 = vmatpush.msra.mxu0 0.0
        %1001 = vmatpush.msra.mxu0 0.0
        %1002 = vmatpush.msra.mxu0 0.0
        %1003 = vmatpush.msra.mxu0 0.0
        %1004 = vmatpush.msra.mxu0 0.0
        %1005 = vmatpush.msra.mxu0 0.0
        %1006 = vmatpush.msra.mxu0 0.0
        %1007 = vmatpush.msra.mxu0 %v987
        %1008 = vmatmul.f32.gmra.mxu0 %v990
        %v1009 = vpop.f32.mrf.mxu0
        %v1010 = vadd.f32 0.0, %v1009
        %1011 = vdwg.mxu0
        %v1012 = vperm.slane %v904, 1
        %1014 = vrot.lane.b32.xlu0 %v1012, 8
        %v1015 = vpop.permute.xlu0 %1014
        %v1017 = vadd.f32 %v899, %v1015
        %v1018 = vmul.f32 %v1017, 0.35355338
        %v1019 = vperm.slane %v905, 1
        %1021 = vrot.lane.b32.xlu0 %v1019, 8
        %v1022 = vpop.permute.xlu0 %1021
        %v1024 = vadd.f32 %v899, %v1022
        %v1025 = vmul.f32 %v1024, 0.35355338
        %1027 = vrot.lane.b32.xlu0 %v1025, 120
        %v1028 = vpop.permute.xlu0 %1027
        %1029 = vrot.lane.b32.xlu0 %v902, 24
        %v1030 = vpop.permute.xlu0 %1029
        %v1031 = vsel %vm919, %v1028, 0
        %v1033 = vsel %vm919, %v1030, 0
        %1035 = vmatpush.xpose.msra.mxu0 0.0
        %1036 = vmatpush.xpose.msra.mxu0 0.0
        %1037 = vmatpush.xpose.msra.mxu0 0.0
        %1038 = vmatpush.xpose.msra.mxu0 0.0
        %1039 = vmatpush.xpose.msra.mxu0 0.0
        %1040 = vmatpush.xpose.msra.mxu0 0.0
        %1041 = vmatpush.xpose.msra.mxu0 0.0
        %1042 = vmatpush.xpose.msra.mxu0 0.0
        %1043 = vmatpush.xpose.msra.mxu0 0.0
        %1044 = vmatpush.xpose.msra.mxu0 0.0
        %1045 = vmatpush.xpose.msra.mxu0 0.0
        %1046 = vmatpush.xpose.msra.mxu0 0.0
        %1047 = vmatpush.xpose.msra.mxu0 0.0
        %1048 = vmatpush.xpose.msra.mxu0 0.0
        %1049 = vmatpush.xpose.msra.mxu0 0.0
        %1050 = vmatpush.xpose.msra.mxu0 %v1033
        %1051 = vmatmul.f32.gmra.mxu0 %v1031
        %v1052 = vpop.f32.mrf.mxu0
        %v1053 = vadd.f32 0.0, %v1052
        %1054 = vdwg.mxu0
        %1056 = vrot.lane.b32.xlu0 %v1018, 120
        %v1057 = vpop.permute.xlu0 %1056
        %1058 = vrot.lane.b32.xlu0 %v899, 88
        %v1059 = vpop.permute.xlu0 %1058
        %v1060 = vsel %vm919, %v1057, 0
        %v1062 = vsel %vm919, %v1059, 0
        %1064 = vmatpush.xpose.msra.mxu0 0.0
        %1065 = vmatpush.xpose.msra.mxu0 0.0
        %1066 = vmatpush.xpose.msra.mxu0 0.0
        %1067 = vmatpush.xpose.msra.mxu0 0.0
        %1068 = vmatpush.xpose.msra.mxu0 0.0
        %1069 = vmatpush.xpose.msra.mxu0 0.0
        %1070 = vmatpush.xpose.msra.mxu0 0.0
        %1071 = vmatpush.xpose.msra.mxu0 0.0
        %1072 = vmatpush.xpose.msra.mxu0 0.0
        %1073 = vmatpush.xpose.msra.mxu0 0.0
        %1074 = vmatpush.xpose.msra.mxu0 0.0
        %1075 = vmatpush.xpose.msra.mxu0 0.0
        %1076 = vmatpush.xpose.msra.mxu0 0.0
        %1077 = vmatpush.xpose.msra.mxu0 0.0
        %1078 = vmatpush.xpose.msra.mxu0 0.0
        %1079 = vmatpush.xpose.msra.mxu0 %v1062
        %1080 = vmatmul.f32.gmra.mxu0 %v1060
        %v1081 = vpop.f32.mrf.mxu0
        %v1082 = vadd.f32 %v1053, %v1081
        %1083 = vdwg.mxu0
        %v1084 = vsel %vm715, %v1082, -3.4028235e+38
        %v1085 = vsel %vm919, %v1084, -inf
        %1086 = vmax.xlane.f32.xlu0 %v1085
        %v1087 = vpop.xlane.xlu0 %1086
        %v1088 = vsub.f32 %v1084, %v1087
        %v1089 = vmul.f32 %v1088, 1.442695
        %v1090 = vpow.pop %v1089
        %v1091 = vsel %vm919, %v1090, 0.0
        %1092 = vadd.xlane.f32.xlu0 %v1091
        %v1093 = vpop.xlane.xlu0 %1092
        %v1094 = vrcp.pop %v1093
        %v1095 = vmul.f32 %v1090, %v1094
        %v1096 = vsel %vm715, %v1095, 0.0
        %1097 = vrot.lane.b32.xlu0 %v899, 56
        %v1098 = vpop.permute.xlu0 %1097
        %v1101 = vsel %vm919, %v1096, 0
        %1103 = vmatpush.msra.mxu0 0.0
        %1104 = vmatpush.msra.mxu0 0.0
        %1105 = vmatpush.msra.mxu0 0.0
        %1106 = vmatpush.msra.mxu0 0.0
        %1107 = vmatpush.msra.mxu0 0.0
        %1108 = vmatpush.msra.mxu0 0.0
        %1109 = vmatpush.msra.mxu0 0.0
        %1110 = vmatpush.msra.mxu0 0.0
        %1111 = vmatpush.msra.mxu0 0.0
        %1112 = vmatpush.msra.mxu0 0.0
        %1113 = vmatpush.msra.mxu0 0.0
        %1114 = vmatpush.msra.mxu0 0.0
        %1115 = vmatpush.msra.mxu0 0.0
        %1116 = vmatpush.msra.mxu0 0.0
        %1117 = vmatpush.msra.mxu0 0.0
        %1118 = vmatpush.msra.mxu0 %v1098
        %1119 = vmatmul.f32.gmra.mxu0 %v1101
        %v1120 = vpop.f32.mrf.mxu0
        %v1121 = vadd.f32 0.0, %v1120
        %1122 = vdwg.mxu0
        %v1124 = vsel %vm919, %v1121, 0
        %1126 = vmatpush.msra.mxu0 0.0
        %1127 = vmatpush.msra.mxu0 0.0
        %1128 = vmatpush.msra.mxu0 0.0
        %1129 = vmatpush.msra.mxu0 0.0
        %1130 = vmatpush.msra.mxu0 0.0
        %1131 = vmatpush.msra.mxu0 0.0
        %1132 = vmatpush.msra.mxu0 0.0
        %1133 = vmatpush.msra.mxu0 0.0
        %1134 = vmatpush.msra.mxu0 0.0
        %1135 = vmatpush.msra.mxu0 0.0
        %1136 = vmatpush.msra.mxu0 0.0
        %1137 = vmatpush.msra.mxu0 0.0
        %1138 = vmatpush.msra.mxu0 0.0
        %1139 = vmatpush.msra.mxu0 0.0
        %1140 = vmatpush.msra.mxu0 0.0
        %1141 = vmatpush.msra.mxu0 %v907
        %1142 = vmatmul.f32.gmra.mxu0 %v1124
        %v1143 = vpop.f32.mrf.mxu0
        %v1144 = vadd.f32 0.0, %v1143
        %1145 = vdwg.mxu0
        %v1147 = vsel %vm919, %v1010, 0
        %1149 = vmatpush.msra.mxu0 0.0
        %1150 = vmatpush.msra.mxu0 0.0
        %1151 = vmatpush.msra.mxu0 0.0
        %1152 = vmatpush.msra.mxu0 0.0
        %1153 = vmatpush.msra.mxu0 0.0
        %1154 = vmatpush.msra.mxu0 0.0
        %1155 = vmatpush.msra.mxu0 0.0
        %1156 = vmatpush.msra.mxu0 0.0
        %1157 = vmatpush.msra.mxu0 0.0
        %1158 = vmatpush.msra.mxu0 0.0
        %1159 = vmatpush.msra.mxu0 0.0
        %1160 = vmatpush.msra.mxu0 0.0
        %1161 = vmatpush.msra.mxu0 0.0
        %1162 = vmatpush.msra.mxu0 0.0
        %1163 = vmatpush.msra.mxu0 0.0
        %1164 = vmatpush.msra.mxu0 %v906
        %1165 = vmatmul.f32.gmra.mxu0 %v1147
        %v1166 = vpop.f32.mrf.mxu0
        %v1167 = vadd.f32 %v1144, %v1166
        %1168 = vdwg.mxu0
        %v1169 = vperm.slane %v904, 2
        %1171 = vrot.lane.b32.xlu0 %v1169, 16
        %v1172 = vpop.permute.xlu0 %1171
        %v1174 = vadd.f32 %v899, %v1172
        %v1175 = vmul.f32 %v1174, 0.35355338
        %v1176 = vperm.slane %v905, 2
        %1178 = vrot.lane.b32.xlu0 %v1176, 16
        %v1179 = vpop.permute.xlu0 %1178
        %v1181 = vadd.f32 %v899, %v1179
        %v1182 = vmul.f32 %v1181, 0.35355338
        %1184 = vrot.lane.b32.xlu0 %v1182, 112
        %v1185 = vpop.permute.xlu0 %1184
        %1186 = vrot.lane.b32.xlu0 %v902, 16
        %v1187 = vpop.permute.xlu0 %1186
        %v1188 = vsel %vm919, %v1185, 0
        %v1190 = vsel %vm919, %v1187, 0
        %1192 = vmatpush.xpose.msra.mxu0 0.0
        %1193 = vmatpush.xpose.msra.mxu0 0.0
        %1194 = vmatpush.xpose.msra.mxu0 0.0
        %1195 = vmatpush.xpose.msra.mxu0 0.0
        %1196 = vmatpush.xpose.msra.mxu0 0.0
        %1197 = vmatpush.xpose.msra.mxu0 0.0
        %1198 = vmatpush.xpose.msra.mxu0 0.0
        %1199 = vmatpush.xpose.msra.mxu0 0.0
        %1200 = vmatpush.xpose.msra.mxu0 0.0
        %1201 = vmatpush.xpose.msra.mxu0 0.0
        %1202 = vmatpush.xpose.msra.mxu0 0.0
        %1203 = vmatpush.xpose.msra.mxu0 0.0
        %1204 = vmatpush.xpose.msra.mxu0 0.0
        %1205 = vmatpush.xpose.msra.mxu0 0.0
        %1206 = vmatpush.xpose.msra.mxu0 0.0
        %1207 = vmatpush.xpose.msra.mxu0 %v1190
        %1208 = vmatmul.f32.gmra.mxu0 %v1188
        %v1209 = vpop.f32.mrf.mxu0
        %v1210 = vadd.f32 0.0, %v1209
        %1211 = vdwg.mxu0
        %1213 = vrot.lane.b32.xlu0 %v1175, 112
        %v1214 = vpop.permute.xlu0 %1213
        %1215 = vrot.lane.b32.xlu0 %v899, 80
        %v1216 = vpop.permute.xlu0 %1215
        %v1217 = vsel %vm919, %v1214, 0
        %v1219 = vsel %vm919, %v1216, 0
        %1221 = vmatpush.xpose.msra.mxu0 0.0
        %1222 = vmatpush.xpose.msra.mxu0 0.0
        %1223 = vmatpush.xpose.msra.mxu0 0.0
        %1224 = vmatpush.xpose.msra.mxu0 0.0
        %1225 = vmatpush.xpose.msra.mxu0 0.0
        %1226 = vmatpush.xpose.msra.mxu0 0.0
        %1227 = vmatpush.xpose.msra.mxu0 0.0
        %1228 = vmatpush.xpose.msra.mxu0 0.0
        %1229 = vmatpush.xpose.msra.mxu0 0.0
        %1230 = vmatpush.xpose.msra.mxu0 0.0
        %1231 = vmatpush.xpose.msra.mxu0 0.0
        %1232 = vmatpush.xpose.msra.mxu0 0.0
        %1233 = vmatpush.xpose.msra.mxu0 0.0
        %1234 = vmatpush.xpose.msra.mxu0 0.0
        %1235 = vmatpush.xpose.msra.mxu0 0.0
        %1236 = vmatpush.xpose.msra.mxu0 %v1219
        %1237 = vmatmul.f32.gmra.mxu0 %v1217
        %v1238 = vpop.f32.mrf.mxu0
        %v1239 = vadd.f32 %v1210, %v1238
        %1240 = vdwg.mxu0
        %v1241 = vsel %vm715, %v1239, -3.4028235e+38
        %v1242 = vsel %vm919, %v1241, -inf
        %1243 = vmax.xlane.f32.xlu0 %v1242
        %v1244 = vpop.xlane.xlu0 %1243
        %v1245 = vsub.f32 %v1241, %v1244
        %v1246 = vmul.f32 %v1245, 1.442695
        %v1247 = vpow.pop %v1246
        %v1248 = vsel %vm919, %v1247, 0.0
        %1249 = vadd.xlane.f32.xlu0 %v1248
        %v1250 = vpop.xlane.xlu0 %1249
        %v1251 = vrcp.pop %v1250
        %v1252 = vmul.f32 %v1247, %v1251
        %v1253 = vsel %vm715, %v1252, 0.0
        %1254 = vrot.lane.b32.xlu0 %v899, 48
        %v1255 = vpop.permute.xlu0 %1254
        %v1258 = vsel %vm919, %v1253, 0
        %1260 = vmatpush.msra.mxu0 0.0
        %1261 = vmatpush.msra.mxu0 0.0
        %1262 = vmatpush.msra.mxu0 0.0
        %1263 = vmatpush.msra.mxu0 0.0
        %1264 = vmatpush.msra.mxu0 0.0
        %1265 = vmatpush.msra.mxu0 0.0
        %1266 = vmatpush.msra.mxu0 0.0
        %1267 = vmatpush.msra.mxu0 0.0
        %1268 = vmatpush.msra.mxu0 0.0
        %1269 = vmatpush.msra.mxu0 0.0
        %1270 = vmatpush.msra.mxu0 0.0
        %1271 = vmatpush.msra.mxu0 0.0
        %1272 = vmatpush.msra.mxu0 0.0
        %1273 = vmatpush.msra.mxu0 0.0
        %1274 = vmatpush.msra.mxu0 0.0
        %1275 = vmatpush.msra.mxu0 %v1255
        %1276 = vmatmul.f32.gmra.mxu0 %v1258
        %v1277 = vpop.f32.mrf.mxu0
        %v1278 = vadd.f32 0.0, %v1277
        %1279 = vdwg.mxu0
        %v1281 = vsel %vm919, %v1278, 0
        %1283 = vmatpush.msra.mxu0 0.0
        %1284 = vmatpush.msra.mxu0 0.0
        %1285 = vmatpush.msra.mxu0 0.0
        %1286 = vmatpush.msra.mxu0 0.0
        %1287 = vmatpush.msra.mxu0 0.0
        %1288 = vmatpush.msra.mxu0 0.0
        %1289 = vmatpush.msra.mxu0 0.0
        %1290 = vmatpush.msra.mxu0 0.0
        %1291 = vmatpush.msra.mxu0 0.0
        %1292 = vmatpush.msra.mxu0 0.0
        %1293 = vmatpush.msra.mxu0 0.0
        %1294 = vmatpush.msra.mxu0 0.0
        %1295 = vmatpush.msra.mxu0 0.0
        %1296 = vmatpush.msra.mxu0 0.0
        %1297 = vmatpush.msra.mxu0 0.0
        %1298 = vmatpush.msra.mxu0 %v908
        %1299 = vmatmul.f32.gmra.mxu0 %v1281
        %v1300 = vpop.f32.mrf.mxu0
        %v1301 = vadd.f32 0.0, %v1300
        %1302 = vdwg.mxu0
        %v1303 = vadd.f32 %v1167, %v1301
        %v1304 = vperm.slane %v904, 3
        %1306 = vrot.lane.b32.xlu0 %v1304, 24
        %v1307 = vpop.permute.xlu0 %1306
        %v1309 = vadd.f32 %v899, %v1307
        %v1310 = vmul.f32 %v1309, 0.35355338
        %v1311 = vperm.slane %v905, 3
        %1313 = vrot.lane.b32.xlu0 %v1311, 24
        %v1314 = vpop.permute.xlu0 %1313
        %v1316 = vadd.f32 %v899, %v1314
        %v1317 = vmul.f32 %v1316, 0.35355338
        %1319 = vrot.lane.b32.xlu0 %v1317, 104
        %v1320 = vpop.permute.xlu0 %1319
        %1321 = vrot.lane.b32.xlu0 %v902, 8
        %v1322 = vpop.permute.xlu0 %1321
        %v1323 = vsel %vm919, %v1320, 0
        %v1325 = vsel %vm919, %v1322, 0
        %1327 = vmatpush.xpose.msra.mxu0 0.0
        %1328 = vmatpush.xpose.msra.mxu0 0.0
        %1329 = vmatpush.xpose.msra.mxu0 0.0
        %1330 = vmatpush.xpose.msra.mxu0 0.0
        %1331 = vmatpush.xpose.msra.mxu0 0.0
        %1332 = vmatpush.xpose.msra.mxu0 0.0
        %1333 = vmatpush.xpose.msra.mxu0 0.0
        %1334 = vmatpush.xpose.msra.mxu0 0.0
        %1335 = vmatpush.xpose.msra.mxu0 0.0
        %1336 = vmatpush.xpose.msra.mxu0 0.0
        %1337 = vmatpush.xpose.msra.mxu0 0.0
        %1338 = vmatpush.xpose.msra.mxu0 0.0
        %1339 = vmatpush.xpose.msra.mxu0 0.0
        %1340 = vmatpush.xpose.msra.mxu0 0.0
        %1341 = vmatpush.xpose.msra.mxu0 0.0
        %1342 = vmatpush.xpose.msra.mxu0 %v1325
        %1343 = vmatmul.f32.gmra.mxu0 %v1323
        %v1344 = vpop.f32.mrf.mxu0
        %v1345 = vadd.f32 0.0, %v1344
        %1346 = vdwg.mxu0
        %1348 = vrot.lane.b32.xlu0 %v1310, 104
        %v1349 = vpop.permute.xlu0 %1348
        %1350 = vrot.lane.b32.xlu0 %v899, 72
        %v1351 = vpop.permute.xlu0 %1350
        %v1352 = vsel %vm919, %v1349, 0
        %v1354 = vsel %vm919, %v1351, 0
        %1356 = vmatpush.xpose.msra.mxu0 0.0
        %1357 = vmatpush.xpose.msra.mxu0 0.0
        %1358 = vmatpush.xpose.msra.mxu0 0.0
        %1359 = vmatpush.xpose.msra.mxu0 0.0
        %1360 = vmatpush.xpose.msra.mxu0 0.0
        %1361 = vmatpush.xpose.msra.mxu0 0.0
        %1362 = vmatpush.xpose.msra.mxu0 0.0
        %1363 = vmatpush.xpose.msra.mxu0 0.0
        %1364 = vmatpush.xpose.msra.mxu0 0.0
        %1365 = vmatpush.xpose.msra.mxu0 0.0
        %1366 = vmatpush.xpose.msra.mxu0 0.0
        %1367 = vmatpush.xpose.msra.mxu0 0.0
        %1368 = vmatpush.xpose.msra.mxu0 0.0
        %1369 = vmatpush.xpose.msra.mxu0 0.0
        %1370 = vmatpush.xpose.msra.mxu0 0.0
        %1371 = vmatpush.xpose.msra.mxu0 %v1354
        %1372 = vmatmul.f32.gmra.mxu0 %v1352
        %v1373 = vpop.f32.mrf.mxu0
        %v1374 = vadd.f32 %v1345, %v1373
        %1375 = vdwg.mxu0
        %v1376 = vsel %vm715, %v1374, -3.4028235e+38
        %v1377 = vsel %vm919, %v1376, -inf
        %1378 = vmax.xlane.f32.xlu0 %v1377
        %v1379 = vpop.xlane.xlu0 %1378
        %v1380 = vsub.f32 %v1376, %v1379
        %v1381 = vmul.f32 %v1380, 1.442695
        %v1382 = vpow.pop %v1381
        %v1383 = vsel %vm919, %v1382, 0.0
        %1384 = vadd.xlane.f32.xlu0 %v1383
        %v1385 = vpop.xlane.xlu0 %1384
        %v1386 = vrcp.pop %v1385
        %v1387 = vmul.f32 %v1382, %v1386
        %v1388 = vsel %vm715, %v1387, 0.0
        %1389 = vrot.lane.b32.xlu0 %v899, 40
        %v1390 = vpop.permute.xlu0 %1389
        %v1393 = vsel %vm919, %v1388, 0
        %1395 = vmatpush.msra.mxu0 0.0
        %1396 = vmatpush.msra.mxu0 0.0
        %1397 = vmatpush.msra.mxu0 0.0
        %1398 = vmatpush.msra.mxu0 0.0
        %1399 = vmatpush.msra.mxu0 0.0
        %1400 = vmatpush.msra.mxu0 0.0
        %1401 = vmatpush.msra.mxu0 0.0
        %1402 = vmatpush.msra.mxu0 0.0
        %1403 = vmatpush.msra.mxu0 0.0
        %1404 = vmatpush.msra.mxu0 0.0
        %1405 = vmatpush.msra.mxu0 0.0
        %1406 = vmatpush.msra.mxu0 0.0
        %1407 = vmatpush.msra.mxu0 0.0
        %1408 = vmatpush.msra.mxu0 0.0
        %1409 = vmatpush.msra.mxu0 0.0
        %1410 = vmatpush.msra.mxu0 %v1390
        %1411 = vmatmul.f32.gmra.mxu0 %v1393
        %v1412 = vpop.f32.mrf.mxu0
        %v1413 = vadd.f32 0.0, %v1412
        %1414 = vdwg.mxu0
        %v1416 = vsel %vm919, %v1413, 0
        %1418 = vmatpush.msra.mxu0 0.0
        %1419 = vmatpush.msra.mxu0 0.0
        %1420 = vmatpush.msra.mxu0 0.0
        %1421 = vmatpush.msra.mxu0 0.0
        %1422 = vmatpush.msra.mxu0 0.0
        %1423 = vmatpush.msra.mxu0 0.0
        %1424 = vmatpush.msra.mxu0 0.0
        %1425 = vmatpush.msra.mxu0 0.0
        %1426 = vmatpush.msra.mxu0 0.0
        %1427 = vmatpush.msra.mxu0 0.0
        %1428 = vmatpush.msra.mxu0 0.0
        %1429 = vmatpush.msra.mxu0 0.0
        %1430 = vmatpush.msra.mxu0 0.0
        %1431 = vmatpush.msra.mxu0 0.0
        %1432 = vmatpush.msra.mxu0 0.0
        %1433 = vmatpush.msra.mxu0 %v909
        %1434 = vmatmul.f32.gmra.mxu0 %v1416
        %v1435 = vpop.f32.mrf.mxu0
        %v1436 = vadd.f32 0.0, %v1435
        %1437 = vdwg.mxu0
        %v1438 = vadd.f32 %v1303, %v1436
        %v1439 = vadd.f32 %v838, %v1438
        %v1440 = vld [vmem:[%s15] sm:$0x1]
        %v1442 = vperm.slane %v1440, 0
        %v1444 = vadd.f32 %v1439, %v1442
        %v1445 = vld [vmem:[%s4 + $0x2] sm:$0x1]
        %v1446 = vld [vmem:[%s5 + $0x2] sm:$0x1]
        %v1447 = vsel %vm720, %v1444, 0.0
        %1448 = vadd.xlane.f32.xlu0 %v1447
        %v1449 = vpop.xlane.xlu0 %1448
        %v1450 = vmul.f32 %v1449, %v730
        %v1451 = vsub.f32 %v1444, %v1450
        %v1452 = vmul.f32 %v1451, %v1451
        %v1453 = vsel %vm720, %v1452, 0.0
        %1454 = vadd.xlane.f32.xlu0 %v1453
        %v1455 = vpop.xlane.xlu0 %1454
        %v1456 = vmul.f32 %v1455, %v730
        %v1457 = vadd.f32 %v1456, 1e-05
        %v1458 = vrsqrt.pop %v1457
        %v1459 = vmul.f32 %v1458, %v1457
        %v1460 = vmul.f32 %v1459, %v1458
        %v1461 = vmul.f32 0.5, %v1460
        %v1462 = vsub.f32 1.5, %v1461
        %v1463 = vmul.f32 %v1458, %v1462
        %vm1464 = vweird.f32 %v1457
        %vm1465 = vweird.f32 %v1458
        %vm1466 = vmor %vm1464, %vm1465
        %v1467 = vsel %vm1466, %v1458, %v1463
        %v1468 = vmul.f32 %v1451, %v1467
        %v1469 = vperm.slane %v1445, 0
        %v1470 = vmul.f32 %v1468, %v1469
        %v1471 = vperm.slane %v1446, 0
        %v1472 = vadd.f32 %v1470, %v1471
        %1474 = vset.pattern.permute.xlu0 0
        %1475 = vperm.xlu0 %1474, %v716
        %v1476 = vpop.permute.xlu0 %1475
        %v1478 = vmul.f32 %v1472, %v1476
        %v1479 = vld [vmem:[%s16] sm:$0xff]
        %v1480 = vld [vmem:[%s16 + $0x8] sm:$0xff]
        %v1481 = vld [vmem:[%s16 + $0x10] sm:$0xff]
        %v1482 = vld [vmem:[%s16 + $0x18] sm:$0xff]
        %v1483 = vld [vmem:[%s17] sm:$0x1]
        %v1485 = vperm.slane %v1483, 0
        %v1488 = vsel %vm720, %v1478, 0
        %1490 = vmatpush.msra.mxu0 0.0
        %1491 = vmatpush.msra.mxu0 0.0
        %1492 = vmatpush.msra.mxu0 0.0
        %1493 = vmatpush.msra.mxu0 0.0
        %1494 = vmatpush.msra.mxu0 0.0
        %1495 = vmatpush.msra.mxu0 0.0
        %1496 = vmatpush.msra.mxu0 0.0
        %1497 = vmatpush.msra.mxu0 0.0
        %1498 = vmatpush.msra.mxu0 0.0
        %1499 = vmatpush.msra.mxu0 0.0
        %1500 = vmatpush.msra.mxu0 0.0
        %1501 = vmatpush.msra.mxu0 0.0
        %1502 = vmatpush.msra.mxu0 %v1482
        %1503 = vmatpush.msra.mxu0 %v1481
        %1504 = vmatpush.msra.mxu0 %v1480
        %1505 = vmatpush.msra.mxu0 %v1479
        %1506 = vmatmul.f32.gmra.mxu0 %v1488
        %v1507 = vpop.f32.mrf.mxu0
        %v1508 = vadd.f32 %v1485, %v1507
        %1509 = vdwg.mxu0
        %v1510 = vxor.u32 %v1508, 2147483648
        %v1511 = vmul.f32 %v1510, 1.442695
        %v1512 = vpow.pop %v1511
        %v1513 = vadd.f32 %v1512, 1.0
        %v1514 = vrcp.pop %v1513
        %v1515 = vmul.f32 %v1513, %v1514
        %v1516 = vsub.f32 1.0, %v1515
        %v1517 = vmul.f32 %v1514, %v1516
        %v1518 = vadd.f32 %v1514, %v1517
        %vm1519 = vweird.f32 %v1513
        %vm1520 = vweird.f32 %v1514
        %vm1521 = vmor %vm1519, %vm1520
        %v1522 = vsel %vm1521, %v1514, %v1518
        %v1523 = vand.u32 2147483647, %v1513
        %vm1524 = vcmp.eq.f32.partialorder %v1523, 8.507059e+37
        %v1525 = vand.u32 %v1513, 2147483648
        %v1526 = vor.u32 1.1754944e-38, %v1525
        %v1527 = vsel %vm1524, %v1526, %v1522
        %v1528 = vmul.f32 1.0, %v1527
        %1530 = vrot.lane.b32.xlu0 %v1528, 96
        %v1531 = vpop.permute.xlu0 %1530
        %v1533 = vmul.f32 %v1508, %v1531
        %v1534 = vlaneseq
        %v1535 = vshrl.u32 %v1534, 7
        %v1536 = vlaneseq
        %v1537 = vand.u32 %v1536, 127
        %v1538 = vld [vmem:[%s19] sm:$0x1]
        %v1540 = vperm.slane %v1538, 0
        %v1542 = vadd.f32 %v1540, 0.0
        %v1543 = vadd.s32 %v1535, 4294967293
        %vm1544 = vcmp.eq.s32.totalorder %v1537, %v1543
        %v1545 = vsel %vm1544, 1, 0
        %v1546 = vcvt.s32.f32 %v1545
        %v1548 = vsel %vm919, %v1546, 0
        %1550 = vmatpush.msra.mxu0 0.0
        %1551 = vmatpush.msra.mxu0 0.0
        %1552 = vmatpush.msra.mxu0 0.0
        %1553 = vmatpush.msra.mxu0 0.0
        %1554 = vmatpush.msra.mxu0 0.0
        %1555 = vmatpush.msra.mxu0 0.0
        %1556 = vmatpush.msra.mxu0 0.0
        %1557 = vmatpush.msra.mxu0 0.0
        %1558 = vmatpush.msra.mxu0 0.0
        %1559 = vmatpush.msra.mxu0 0.0
        %1560 = vmatpush.msra.mxu0 0.0
        %1561 = vmatpush.msra.mxu0 0.0
        %1562 = vmatpush.msra.mxu0 0.0
        %1563 = vmatpush.msra.mxu0 0.0
        %1564 = vmatpush.msra.mxu0 0.0
        %1565 = vmatpush.msra.mxu0 %v1533
        %1566 = vmatmul.f32.gmra.mxu0 %v1548
        %v1567 = vpop.f32.mrf.mxu0
        %v1568 = vadd.f32 0.0, %v1567
        %1569 = vdwg.mxu0
        %v1570 = vld [vmem:[%s18] sm:$0x1]
        %v1571 = vperm.slane %v1570, 0
        %v1572 = vmul.f32 %v1568, %v1571
        %v1573 = vadd.f32 %v1542, %v1572
        %v1574 = vadd.s32 %v1535, 4294967294
        %vm1575 = vcmp.eq.s32.totalorder %v1537, %v1574
        %v1576 = vsel %vm1575, 1, 0
        %v1577 = vcvt.s32.f32 %v1576
        %v1579 = vsel %vm919, %v1577, 0
        %1581 = vmatpush.msra.mxu0 0.0
        %1582 = vmatpush.msra.mxu0 0.0
        %1583 = vmatpush.msra.mxu0 0.0
        %1584 = vmatpush.msra.mxu0 0.0
        %1585 = vmatpush.msra.mxu0 0.0
        %1586 = vmatpush.msra.mxu0 0.0
        %1587 = vmatpush.msra.mxu0 0.0
        %1588 = vmatpush.msra.mxu0 0.0
        %1589 = vmatpush.msra.mxu0 0.0
        %1590 = vmatpush.msra.mxu0 0.0
        %1591 = vmatpush.msra.mxu0 0.0
        %1592 = vmatpush.msra.mxu0 0.0
        %1593 = vmatpush.msra.mxu0 0.0
        %1594 = vmatpush.msra.mxu0 0.0
        %1595 = vmatpush.msra.mxu0 0.0
        %1596 = vmatpush.msra.mxu0 %v1533
        %1597 = vmatmul.f32.gmra.mxu0 %v1579
        %v1598 = vpop.f32.mrf.mxu0
        %v1599 = vadd.f32 0.0, %v1598
        %1600 = vdwg.mxu0
        %v1601 = vld [vmem:[%s18 + $0x1] sm:$0x1]
        %v1602 = vperm.slane %v1601, 0
        %v1603 = vmul.f32 %v1599, %v1602
        %v1604 = vadd.f32 %v1573, %v1603
        %v1605 = vadd.s32 %v1535, 4294967295
        %vm1606 = vcmp.eq.s32.totalorder %v1537, %v1605
        %v1607 = vsel %vm1606, 1, 0
        %v1608 = vcvt.s32.f32 %v1607
        %v1610 = vsel %vm919, %v1608, 0
        %1612 = vmatpush.msra.mxu0 0.0
        %1613 = vmatpush.msra.mxu0 0.0
        %1614 = vmatpush.msra.mxu0 0.0
        %1615 = vmatpush.msra.mxu0 0.0
        %1616 = vmatpush.msra.mxu0 0.0
        %1617 = vmatpush.msra.mxu0 0.0
        %1618 = vmatpush.msra.mxu0 0.0
        %1619 = vmatpush.msra.mxu0 0.0
        %1620 = vmatpush.msra.mxu0 0.0
        %1621 = vmatpush.msra.mxu0 0.0
        %1622 = vmatpush.msra.mxu0 0.0
        %1623 = vmatpush.msra.mxu0 0.0
        %1624 = vmatpush.msra.mxu0 0.0
        %1625 = vmatpush.msra.mxu0 0.0
        %1626 = vmatpush.msra.mxu0 0.0
        %1627 = vmatpush.msra.mxu0 %v1533
        %1628 = vmatmul.f32.gmra.mxu0 %v1610
        %v1629 = vpop.f32.mrf.mxu0
        %v1630 = vadd.f32 0.0, %v1629
        %1631 = vdwg.mxu0
        %v1632 = vld [vmem:[%s18 + $0x2] sm:$0x1]
        %v1633 = vperm.slane %v1632, 0
        %v1634 = vmul.f32 %v1630, %v1633
        %v1635 = vadd.f32 %v1604, %v1634
        %vm1636 = vcmp.eq.s32.totalorder %v1537, %v1535
        %v1637 = vsel %vm1636, 1, 0
        %v1638 = vcvt.s32.f32 %v1637
        %v1640 = vsel %vm919, %v1638, 0
        %1642 = vmatpush.msra.mxu0 0.0
        %1643 = vmatpush.msra.mxu0 0.0
        %1644 = vmatpush.msra.mxu0 0.0
        %1645 = vmatpush.msra.mxu0 0.0
        %1646 = vmatpush.msra.mxu0 0.0
        %1647 = vmatpush.msra.mxu0 0.0
        %1648 = vmatpush.msra.mxu0 0.0
        %1649 = vmatpush.msra.mxu0 0.0
        %1650 = vmatpush.msra.mxu0 0.0
        %1651 = vmatpush.msra.mxu0 0.0
        %1652 = vmatpush.msra.mxu0 0.0
        %1653 = vmatpush.msra.mxu0 0.0
        %1654 = vmatpush.msra.mxu0 0.0
        %1655 = vmatpush.msra.mxu0 0.0
        %1656 = vmatpush.msra.mxu0 0.0
        %1657 = vmatpush.msra.mxu0 %v1533
        %1658 = vmatmul.f32.gmra.mxu0 %v1640
        %v1659 = vpop.f32.mrf.mxu0
        %v1660 = vadd.f32 0.0, %v1659
        %1661 = vdwg.mxu0
        %v1662 = vld [vmem:[%s18 + $0x3] sm:$0x1]
        %v1663 = vperm.slane %v1662, 0
        %v1664 = vmul.f32 %v1660, %v1663
        %v1665 = vadd.f32 %v1635, %v1664
        %v1666 = vadd.s32 %v1535, 1
        %vm1667 = vcmp.eq.s32.totalorder %v1537, %v1666
        %v1668 = vsel %vm1667, 1, 0
        %v1669 = vcvt.s32.f32 %v1668
        %v1671 = vsel %vm919, %v1669, 0
        %1673 = vmatpush.msra.mxu0 0.0
        %1674 = vmatpush.msra.mxu0 0.0
        %1675 = vmatpush.msra.mxu0 0.0
        %1676 = vmatpush.msra.mxu0 0.0
        %1677 = vmatpush.msra.mxu0 0.0
        %1678 = vmatpush.msra.mxu0 0.0
        %1679 = vmatpush.msra.mxu0 0.0
        %1680 = vmatpush.msra.mxu0 0.0
        %1681 = vmatpush.msra.mxu0 0.0
        %1682 = vmatpush.msra.mxu0 0.0
        %1683 = vmatpush.msra.mxu0 0.0
        %1684 = vmatpush.msra.mxu0 0.0
        %1685 = vmatpush.msra.mxu0 0.0
        %1686 = vmatpush.msra.mxu0 0.0
        %1687 = vmatpush.msra.mxu0 0.0
        %1688 = vmatpush.msra.mxu0 %v1533
        %1689 = vmatmul.f32.gmra.mxu0 %v1671
        %v1690 = vpop.f32.mrf.mxu0
        %v1691 = vadd.f32 0.0, %v1690
        %1692 = vdwg.mxu0
        %v1693 = vld [vmem:[%s18 + $0x4] sm:$0x1]
        %v1694 = vperm.slane %v1693, 0
        %v1695 = vmul.f32 %v1691, %v1694
        %v1696 = vadd.f32 %v1665, %v1695
        %v1697 = vadd.s32 %v1535, 2
        %vm1698 = vcmp.eq.s32.totalorder %v1537, %v1697
        %v1699 = vsel %vm1698, 1, 0
        %v1700 = vcvt.s32.f32 %v1699
        %v1702 = vsel %vm919, %v1700, 0
        %1704 = vmatpush.msra.mxu0 0.0
        %1705 = vmatpush.msra.mxu0 0.0
        %1706 = vmatpush.msra.mxu0 0.0
        %1707 = vmatpush.msra.mxu0 0.0
        %1708 = vmatpush.msra.mxu0 0.0
        %1709 = vmatpush.msra.mxu0 0.0
        %1710 = vmatpush.msra.mxu0 0.0
        %1711 = vmatpush.msra.mxu0 0.0
        %1712 = vmatpush.msra.mxu0 0.0
        %1713 = vmatpush.msra.mxu0 0.0
        %1714 = vmatpush.msra.mxu0 0.0
        %1715 = vmatpush.msra.mxu0 0.0
        %1716 = vmatpush.msra.mxu0 0.0
        %1717 = vmatpush.msra.mxu0 0.0
        %1718 = vmatpush.msra.mxu0 0.0
        %1719 = vmatpush.msra.mxu0 %v1533
        %1720 = vmatmul.f32.gmra.mxu0 %v1702
        %v1721 = vpop.f32.mrf.mxu0
        %v1722 = vadd.f32 0.0, %v1721
        %1723 = vdwg.mxu0
        %v1724 = vld [vmem:[%s18 + $0x5] sm:$0x1]
        %v1725 = vperm.slane %v1724, 0
        %v1726 = vmul.f32 %v1722, %v1725
        %v1727 = vadd.f32 %v1696, %v1726
        %v1728 = vadd.s32 %v1535, 3
        %vm1729 = vcmp.eq.s32.totalorder %v1537, %v1728
        %v1730 = vsel %vm1729, 1, 0
        %v1731 = vcvt.s32.f32 %v1730
        %v1733 = vsel %vm919, %v1731, 0
        %1735 = vmatpush.msra.mxu0 0.0
        %1736 = vmatpush.msra.mxu0 0.0
        %1737 = vmatpush.msra.mxu0 0.0
        %1738 = vmatpush.msra.mxu0 0.0
        %1739 = vmatpush.msra.mxu0 0.0
        %1740 = vmatpush.msra.mxu0 0.0
        %1741 = vmatpush.msra.mxu0 0.0
        %1742 = vmatpush.msra.mxu0 0.0
        %1743 = vmatpush.msra.mxu0 0.0
        %1744 = vmatpush.msra.mxu0 0.0
        %1745 = vmatpush.msra.mxu0 0.0
        %1746 = vmatpush.msra.mxu0 0.0
        %1747 = vmatpush.msra.mxu0 0.0
        %1748 = vmatpush.msra.mxu0 0.0
        %1749 = vmatpush.msra.mxu0 0.0
        %1750 = vmatpush.msra.mxu0 %v1533
        %1751 = vmatmul.f32.gmra.mxu0 %v1733
        %v1752 = vpop.f32.mrf.mxu0
        %v1753 = vadd.f32 0.0, %v1752
        %1754 = vdwg.mxu0
        %v1755 = vld [vmem:[%s18 + $0x6] sm:$0x1]
        %v1756 = vperm.slane %v1755, 0
        %v1757 = vmul.f32 %v1753, %v1756
        %v1758 = vadd.f32 %v1727, %v1757
        %v1759 = vld [vmem:[%s4 + $0x3] sm:$0x1]
        %v1760 = vld [vmem:[%s5 + $0x3] sm:$0x1]
        %v1761 = vsel %vm720, %v1758, 0.0
        %1762 = vadd.xlane.f32.xlu0 %v1761
        %v1763 = vpop.xlane.xlu0 %1762
        %v1764 = vmul.f32 %v1763, %v730
        %v1765 = vsub.f32 %v1758, %v1764
        %v1766 = vmul.f32 %v1765, %v1765
        %v1767 = vsel %vm720, %v1766, 0.0
        %1768 = vadd.xlane.f32.xlu0 %v1767
        %v1769 = vpop.xlane.xlu0 %1768
        %v1770 = vmul.f32 %v1769, %v730
        %v1771 = vadd.f32 %v1770, 1e-05
        %v1772 = vrsqrt.pop %v1771
        %v1773 = vmul.f32 %v1772, %v1771
        %v1774 = vmul.f32 %v1773, %v1772
        %v1775 = vmul.f32 0.5, %v1774
        %v1776 = vsub.f32 1.5, %v1775
        %v1777 = vmul.f32 %v1772, %v1776
        %vm1778 = vweird.f32 %v1771
        %vm1779 = vweird.f32 %v1772
        %vm1780 = vmor %vm1778, %vm1779
        %v1781 = vsel %vm1780, %v1772, %v1777
        %v1782 = vmul.f32 %v1765, %v1781
        %v1783 = vperm.slane %v1759, 0
        %v1784 = vmul.f32 %v1782, %v1783
        %v1785 = vperm.slane %v1760, 0
        %v1786 = vadd.f32 %v1784, %v1785
        %v1787 = vxor.u32 %v1786, 2147483648
        %v1788 = vmul.f32 %v1787, 1.442695
        %v1789 = vpow.pop %v1788
        %v1790 = vadd.f32 %v1789, 1.0
        %v1791 = vrcp.pop %v1790
        %v1792 = vmul.f32 %v1790, %v1791
        %v1793 = vsub.f32 1.0, %v1792
        %v1794 = vmul.f32 %v1791, %v1793
        %v1795 = vadd.f32 %v1791, %v1794
        %vm1796 = vweird.f32 %v1790
        %vm1797 = vweird.f32 %v1791
        %vm1798 = vmor %vm1796, %vm1797
        %v1799 = vsel %vm1798, %v1791, %v1795
        %v1800 = vand.u32 2147483647, %v1790
        %vm1801 = vcmp.eq.f32.partialorder %v1800, 8.507059e+37
        %v1802 = vand.u32 %v1790, 2147483648
        %v1803 = vor.u32 1.1754944e-38, %v1802
        %v1804 = vsel %vm1801, %v1803, %v1799
        %v1805 = vmul.f32 1.0, %v1804
        %v1806 = vmul.f32 %v1786, %v1805
        %v1807 = vld [vmem:[%s20] sm:$0xff]
        %v1808 = vld [vmem:[%s20 + $0x8] sm:$0xff]
        %v1809 = vld [vmem:[%s20 + $0x10] sm:$0xff]
        %v1810 = vld [vmem:[%s20 + $0x18] sm:$0xff]
        %v1811 = vld [vmem:[%s21] sm:$0x1]
        %v1813 = vperm.slane %v1811, 0
        %v1816 = vsel %vm720, %v1806, 0
        %1818 = vmatpush.msra.mxu0 0.0
        %1819 = vmatpush.msra.mxu0 0.0
        %1820 = vmatpush.msra.mxu0 0.0
        %1821 = vmatpush.msra.mxu0 0.0
        %1822 = vmatpush.msra.mxu0 0.0
        %1823 = vmatpush.msra.mxu0 0.0
        %1824 = vmatpush.msra.mxu0 0.0
        %1825 = vmatpush.msra.mxu0 0.0
        %1826 = vmatpush.msra.mxu0 0.0
        %1827 = vmatpush.msra.mxu0 0.0
        %1828 = vmatpush.msra.mxu0 0.0
        %1829 = vmatpush.msra.mxu0 0.0
        %1830 = vmatpush.msra.mxu0 %v1810
        %1831 = vmatpush.msra.mxu0 %v1809
        %1832 = vmatpush.msra.mxu0 %v1808
        %1833 = vmatpush.msra.mxu0 %v1807
        %1834 = vmatmul.f32.gmra.mxu0 %v1816
        %v1835 = vpop.f32.mrf.mxu0
        %v1836 = vadd.f32 %v1813, %v1835
        %1837 = vdwg.mxu0
        %v1838 = vmul.f32 %v1836, %v1476
        %v1839 = vadd.f32 %v1444, %v1838
        %v1840 = vld [vmem:[%s4 + $0x4] sm:$0x1]
        %v1841 = vld [vmem:[%s5 + $0x4] sm:$0x1]
        %v1842 = vsel %vm720, %v1839, 0.0
        %1843 = vadd.xlane.f32.xlu0 %v1842
        %v1844 = vpop.xlane.xlu0 %1843
        %v1845 = vmul.f32 %v1844, %v730
        %v1846 = vsub.f32 %v1839, %v1845
        %v1847 = vmul.f32 %v1846, %v1846
        %v1848 = vsel %vm720, %v1847, 0.0
        %1849 = vadd.xlane.f32.xlu0 %v1848
        %v1850 = vpop.xlane.xlu0 %1849
        %v1851 = vmul.f32 %v1850, %v730
        %v1852 = vadd.f32 %v1851, 1e-05
        %v1853 = vrsqrt.pop %v1852
        %v1854 = vmul.f32 %v1853, %v1852
        %v1855 = vmul.f32 %v1854, %v1853
        %v1856 = vmul.f32 0.5, %v1855
        %v1857 = vsub.f32 1.5, %v1856
        %v1858 = vmul.f32 %v1853, %v1857
        %vm1859 = vweird.f32 %v1852
        %vm1860 = vweird.f32 %v1853
        %vm1861 = vmor %vm1859, %vm1860
        %v1862 = vsel %vm1861, %v1853, %v1858
        %v1863 = vmul.f32 %v1846, %v1862
        %v1864 = vperm.slane %v1840, 0
        %v1865 = vmul.f32 %v1863, %v1864
        %v1866 = vperm.slane %v1841, 0
        %v1867 = vadd.f32 %v1865, %v1866
        %s1868 = scalar_lea.vmem %s6, 32
        %v1869 = vld [vmem:[%s1868] sm:$0xff]
        %v1870 = vld [vmem:[%s1868 + $0x8] sm:$0xff]
        %v1871 = vld [vmem:[%s1868 + $0x10] sm:$0xff]
        %v1872 = vld [vmem:[%s1868 + $0x18] sm:$0xff]
        %v1873 = vld [vmem:[%s7 + $0x1] sm:$0x1]
        %v1874 = vperm.slane %v1873, 0
        %v1876 = vsel %vm720, %v1867, 0
        %1878 = vmatpush.msra.mxu0 0.0
        %1879 = vmatpush.msra.mxu0 0.0
        %1880 = vmatpush.msra.mxu0 0.0
        %1881 = vmatpush.msra.mxu0 0.0
        %1882 = vmatpush.msra.mxu0 0.0
        %1883 = vmatpush.msra.mxu0 0.0
        %1884 = vmatpush.msra.mxu0 0.0
        %1885 = vmatpush.msra.mxu0 0.0
        %1886 = vmatpush.msra.mxu0 0.0
        %1887 = vmatpush.msra.mxu0 0.0
        %1888 = vmatpush.msra.mxu0 0.0
        %1889 = vmatpush.msra.mxu0 0.0
        %1890 = vmatpush.msra.mxu0 %v1872
        %1891 = vmatpush.msra.mxu0 %v1871
        %1892 = vmatpush.msra.mxu0 %v1870
        %1893 = vmatpush.msra.mxu0 %v1869
        %1894 = vmatmul.f32.gmra.mxu0 %v1876
        %v1895 = vpop.f32.mrf.mxu0
        %v1896 = vadd.f32 %v1874, %v1895
        %1897 = vdwg.mxu0
        %v1898 = vxor.u32 %v1896, 2147483648
        %v1899 = vmul.f32 %v1898, 1.442695
        %v1900 = vpow.pop %v1899
        %v1901 = vadd.f32 %v1900, 1.0
        %v1902 = vrcp.pop %v1901
        %v1903 = vmul.f32 %v1901, %v1902
        %v1904 = vsub.f32 1.0, %v1903
        %v1905 = vmul.f32 %v1902, %v1904
        %v1906 = vadd.f32 %v1902, %v1905
        %vm1907 = vweird.f32 %v1901
        %vm1908 = vweird.f32 %v1902
        %vm1909 = vmor %vm1907, %vm1908
        %v1910 = vsel %vm1909, %v1902, %v1906
        %v1911 = vand.u32 2147483647, %v1901
        %vm1912 = vcmp.eq.f32.partialorder %v1911, 8.507059e+37
        %v1913 = vand.u32 %v1901, 2147483648
        %v1914 = vor.u32 1.1754944e-38, %v1913
        %v1915 = vsel %vm1912, %v1914, %v1910
        %v1916 = vmul.f32 1.0, %v1915
        %v1917 = vmul.f32 %v1896, %v1916
        %s1918 = scalar_lea.vmem %s8, 64
        %v1919 = vld [vmem:[%s1918] sm:$0xff]
        %v1920 = vld [vmem:[%s1918 + $0x8] sm:$0xff]
        %v1921 = vld [vmem:[%s1918 + $0x10] sm:$0xff]
        %v1922 = vld [vmem:[%s1918 + $0x18] sm:$0xff]
        %v1923 = vld [vmem:[%s1918 + $0x20] sm:$0xff]
        %v1924 = vld [vmem:[%s1918 + $0x28] sm:$0xff]
        %v1925 = vld [vmem:[%s1918 + $0x30] sm:$0xff]
        %v1926 = vld [vmem:[%s1918 + $0x38] sm:$0xff]
        %v1927 = vld [vmem:[%s9 + $0x1] sm:$0x1]
        %v1928 = vperm.slane %v1927, 0
        %v1930 = vsel %vm813, %v1917, 0
        %1932 = vmatpush.msra.mxu0 0.0
        %1933 = vmatpush.msra.mxu0 0.0
        %1934 = vmatpush.msra.mxu0 0.0
        %1935 = vmatpush.msra.mxu0 0.0
        %1936 = vmatpush.msra.mxu0 0.0
        %1937 = vmatpush.msra.mxu0 0.0
        %1938 = vmatpush.msra.mxu0 0.0
        %1939 = vmatpush.msra.mxu0 0.0
        %1940 = vmatpush.msra.mxu0 %v1926
        %1941 = vmatpush.msra.mxu0 %v1925
        %1942 = vmatpush.msra.mxu0 %v1924
        %1943 = vmatpush.msra.mxu0 %v1923
        %1944 = vmatpush.msra.mxu0 %v1922
        %1945 = vmatpush.msra.mxu0 %v1921
        %1946 = vmatpush.msra.mxu0 %v1920
        %1947 = vmatpush.msra.mxu0 %v1919
        %1948 = vmatmul.f32.gmra.mxu0 %v1930
        %v1949 = vpop.f32.mrf.mxu0
        %v1950 = vadd.f32 %v1928, %v1949
        %1951 = vdwg.mxu0
        %v1952 = vmul.f32 %v1950, 0.5
        %v1953 = vadd.f32 %v1839, %v1952
        %v1954 = vld [vmem:[%s4 + $0x5] sm:$0x1]
        %v1955 = vld [vmem:[%s5 + $0x5] sm:$0x1]
        %v1956 = vsel %vm720, %v1953, 0.0
        %1957 = vadd.xlane.f32.xlu0 %v1956
        %v1958 = vpop.xlane.xlu0 %1957
        %v1959 = vmul.f32 %v1958, %v730
        %v1960 = vsub.f32 %v1953, %v1959
        %v1961 = vmul.f32 %v1960, %v1960
        %v1962 = vsel %vm720, %v1961, 0.0
        %1963 = vadd.xlane.f32.xlu0 %v1962
        %v1964 = vpop.xlane.xlu0 %1963
        %v1965 = vmul.f32 %v1964, %v730
        %v1966 = vadd.f32 %v1965, 1e-05
        %v1967 = vrsqrt.pop %v1966
        %v1968 = vmul.f32 %v1967, %v1966
        %v1969 = vmul.f32 %v1968, %v1967
        %v1970 = vmul.f32 0.5, %v1969
        %v1971 = vsub.f32 1.5, %v1970
        %v1972 = vmul.f32 %v1967, %v1971
        %vm1973 = vweird.f32 %v1966
        %vm1974 = vweird.f32 %v1967
        %vm1975 = vmor %vm1973, %vm1974
        %v1976 = vsel %vm1975, %v1967, %v1972
        %v1977 = vmul.f32 %v1960, %v1976
        %v1978 = vperm.slane %v1954, 0
        %v1979 = vmul.f32 %v1977, %v1978
        %v1980 = vperm.slane %v1955, 0
        %v1981 = vadd.f32 %v1979, %v1980
        %1982 = vst.msk [vmem:[%s700] sm:$0xff] %vm720, %v1981
        %s1983 = sand.u32 %s521, 1
        %s1984 = scalar_lea.sflag [#allocation3], %s1983
        %s1985 = sand.u32 %s521, 1
        %s1986 = smul.addr %s1985, 8
        %s1987 = scalar_lea.vmem [#allocation2], %s1986
        // Predicated region
        $region109: #{conformer_layer_forward.1} parent=107 // pred_check
          %p1988 = pneg %p531
        $region110: #{conformer_layer_forward.1} parent=107 // pred_check_branch
          %1990 = sbr.rel (%p1988) target = $region112
        $region111: #{conformer_layer_forward.1} parent=107 // pred_region
          %1992 = vsyncadd %s1984, 0
          %s1993 = smul.addr %s36, 8
          %s1994 = scalar_lea.hbm %s22, %s1993
          %s1996 = sshll.u32 %s1987, 4
          %s1997 = int_to_ptr.vmem [resolvable:$true] %s1996
          %s1998 = sshll.u32 %s1994, 4
          %s1999 = int_to_ptr.hbm [resolvable:$true] %s1998
          %2001 = dma.vmem_to_hbm [thread:$0]  %s1997, 128, %s1999, %s1984
        $region112: #{conformer_layer_forward.1} parent=107 // pred_fallthru
          _
      $region108: #{conformer_layer_forward.1} parent=5 // pred_fallthru
        _
      %p2002 = scmp.le.s32.totalorder 2, %s31
      // Predicated region
      $region113: #{conformer_layer_forward.1} parent=5 // pred_check
        %p2003 = pneg %p2002
      $region114: #{conformer_layer_forward.1} parent=5 // pred_check_branch
        %2005 = sbr.rel (%p2003) target = $region116
      $region115: #{conformer_layer_forward.1} parent=5 // pred_region
        %s2006 = ssub.s32 %s31, 2
        // Predicated region
        $region117: #{conformer_layer_forward.1} parent=115 // pred_check
          %p2007 = pneg %p537
        $region118: #{conformer_layer_forward.1} parent=115 // pred_check_branch
          %2009 = sbr.rel (%p2007) target = $region120
        $region119: #{conformer_layer_forward.1} parent=115 // pred_region
          %s2010 = sand.u32 %s522, 1
          %s2011 = scalar_lea.sflag [#allocation3], %s2010
          %s2012 = sand.u32 %s522, 1
          %s2013 = smul.addr %s2012, 8
          %s2014 = scalar_lea.vmem [#allocation2], %s2013
          %2016 = dma.done %s2011, 128
        $region120: #{conformer_layer_forward.1} parent=115 // pred_fallthru
          _
      $region116: #{conformer_layer_forward.1} parent=5 // pred_fallthru
        _
    $region6: #{conformer_layer_forward.1} parent=1 // loop_footer
      %s35 = sadd.s32 1, %s31
    $region7: #{conformer_layer_forward.1} parent=1 // loop_footer_branch
      %30 = sbr.rel target = $region3
    $region8: #{conformer_layer_forward.1} parent=1 // loop_exit
      _
    %2017 = vsyncpa [#allocation3], 1
    %s2018 = scalar_lea.sflag [#allocation3], 1
    %2019 = vsyncpa %s2018, 1

</llo_original>
